<compile_context>
chip_gen: v7x
topology: tpu7x:2x2x1
jax: 0.10.0
libtpu: 0.0.40
codegen_flags: <defaults>
</compile_context>

<pallas_src>
import functools
import math

import jax
import jax.numpy as jnp
from jax import lax
from jax.experimental import pallas as pl
from jax.experimental.pallas import tpu as pltpu


# ----------------------------- model config (small) -------------------------
B = 2            # batch
C = 3            # in channels (module uses in_chans=3)
IMG = 32         # image size (real model: 224)
P = 8            # patch size (real model: 16)
D = 128          # embed dim (real model: 768)
HEADS = 4        # attention heads (real model: 12)
HD = D // HEADS  # head dim
DEPTH = 2        # transformer blocks (real model: 12)
MLP = 4 * D      # mlp hidden dim
NP = (IMG // P) * (IMG // P)       # num patches
N = NP + 1                         # tokens incl. cls
NPAD = ((N + 15) // 16) * 16       # sequence padded to a bf16 sublane multiple
EPS = 1e-6

# Tile caps.  K is kept untiled (K <= 3072 for vit_base) so no K-accumulator
# scratch is needed.  With bf16 activations + bf16 weights the double-buffered
# footprint at (256, 1024) tiles is well under the 48 MiB budget on v7x.
TM_CAP = 256
TN_CAP = 1024
VMEM_LIMIT = 48 * 1024 * 1024


def _pick_tile(dim, cap, align):
    """Largest multiple of `align` <= cap that divides dim; None if none."""
    t = (min(cap, dim) // align) * align
    while t >= align:
        if dim % t == 0:
            return t
        t -= align
    return None


def _pick_tm(m, cap=TM_CAP):
    if m <= cap:
        return m
    t = _pick_tile(m, cap, 16)        # bf16 sublane tile is 16 rows
    return t if t is not None else m


def _pick_tn(nf, cap=TN_CAP):
    if nf <= cap:
        return nf
    t = _pick_tile(nf, cap, 256)      # prefer full 256-wide MXU N passes
    if t is None:
        t = _pick_tile(nf, cap, 128)
    return t if t is not None else nf


# ----------------------------- fused linear kernel --------------------------
def _fused_linear_kernel(*refs, has_ln, has_res, activation):
    i = 0
    x_ref = refs[i]; i += 1
    if has_ln:
        g_ref, beta_ref = refs[i], refs[i + 1]; i += 2
    w_ref, b_ref = refs[i], refs[i + 1]; i += 2
    if has_res:
        res_ref = refs[i]; i += 1
    o_ref = refs[i]; i += 1
    if has_ln:
        xn_ref = refs[i]                      # (tm, K) bf16 VMEM scratch

    if has_ln:
        # LayerNorm computed once per m-tile (n axis is innermost/arbitrary);
        # reused for the remaining n steps via the VMEM scratch.
        @pl.when(pl.program_id(1) == 0)
        def _():
            x = x_ref[...].astype(jnp.float32)
            mu = jnp.mean(x, axis=-1, keepdims=True)
            xc = x - mu
            var = jnp.mean(xc * xc, axis=-1, keepdims=True)
            xn = xc * lax.rsqrt(var + EPS)
            xn = (xn * g_ref[...].astype(jnp.float32)
                  + beta_ref[...].astype(jnp.float32))
            xn_ref[...] = xn.astype(jnp.bfloat16)
        x_mx = xn_ref[...]
    else:
        x_mx = x_ref[...].astype(jnp.bfloat16)

    # bf16 operands, f32 accumulation on the MXU.
    acc = jnp.dot(x_mx, w_ref[...], preferred_element_type=jnp.float32)
    acc = acc + b_ref[...].astype(jnp.float32)
    if activation == "gelu":
        # exact (erf) GELU, matching torch.nn.GELU default used by timm ViT
        acc = 0.5 * acc * (1.0 + lax.erf(acc * (1.0 / math.sqrt(2.0))))
    if has_res:
        acc = acc + res_ref[...].astype(jnp.float32)   # residual in f32 acc
    o_ref[...] = acc.astype(o_ref.dtype)


def fused_linear(x, w, b, *, gamma=None, beta=None, residual=None,
                 activation=None, out_dtype=jnp.bfloat16):
    """y = [res +] act( LN?(x) @ w + b ).  x: (M, K), w: (K, Nf) bf16."""
    M, K = x.shape
    Kw, Nf = w.shape
    assert K == Kw
    has_ln = gamma is not None
    has_res = residual is not None

    tm = _pick_tm(M)
    tn = _pick_tn(Nf)
    grid = (M // tm, Nf // tn)          # m outer (parallel), n innermost

    in_specs = [pl.BlockSpec((tm, K), lambda m, n: (m, 0))]
    args = [x]
    if has_ln:
        in_specs += [pl.BlockSpec((1, K), lambda m, n: (0, 0)),
                     pl.BlockSpec((1, K), lambda m, n: (0, 0))]
        args += [gamma.reshape(1, K), beta.reshape(1, K)]
    in_specs += [pl.BlockSpec((K, tn), lambda m, n: (0, n)),
                 pl.BlockSpec((1, tn), lambda m, n: (0, n))]
    args += [w, b.reshape(1, Nf)]
    if has_res:
        in_specs.append(pl.BlockSpec((tm, tn), lambda m, n: (m, n)))
        args.append(residual)

    scratch = [pltpu.VMEM((tm, K), jnp.bfloat16)] if has_ln else []
    dims = ("parallel", "arbitrary") if has_ln else ("parallel", "parallel")

    kernel = functools.partial(_fused_linear_kernel, has_ln=has_ln,
                               has_res=has_res, activation=activation)
    return pl.pallas_call(
        kernel,
        out_shape=jax.ShapeDtypeStruct((M, Nf), out_dtype),
        grid=grid,
        in_specs=in_specs,
        out_specs=pl.BlockSpec((tm, tn), lambda m, n: (m, n)),
        scratch_shapes=scratch,
        compiler_params=pltpu.CompilerParams(
            dimension_semantics=dims,
            vmem_limit_bytes=VMEM_LIMIT),
    )(*args)


# ------------------- attention (+ out-proj + residual) kernel ---------------
def _attn_proj_kernel(qkv_ref, pw_ref, pb_ref, res_ref, o_ref, attn_ref,
                      *, heads, hd, n_valid):
    qkv = qkv_ref[0]                       # (NPAD, 3D) bf16, one batch element
    d = heads * hd
    npad = qkv.shape[0]

    # Additive key-mask bias, hoisted outside the head loop (one broadcast add
    # per head instead of iota-compare+select over the full (NPAD, NPAD) tile).
    col = lax.broadcasted_iota(jnp.int32, (1, npad), 1)
    bias = jnp.where(col < n_valid, 0.0, -1e30).astype(jnp.float32)

    for h in range(heads):                 # static unroll over heads
        # scale 1/sqrt(HD) is pre-folded into the q columns of qkv_w / qkv_b
        q = qkv[:, h * hd:(h + 1) * hd]
        k = qkv[:, d + h * hd: d + (h + 1) * hd]
        v = qkv[:, 2 * d + h * hd: 2 * d + (h + 1) * hd]
        # q @ k^T (contract head dim), bf16 operands, f32 accumulation.
        s = lax.dot_general(q, k, (((1,), (1,)), ((), ())),
                            preferred_element_type=jnp.float32)
        s = s + bias                       # mask padded key tokens (f32)
        s = s - jnp.max(s, axis=-1, keepdims=True)
        p = jnp.exp(s)
        denom = jnp.sum(p, axis=-1, keepdims=True)
        p = p * pl.reciprocal(denom, approx=True)
        o = jnp.dot(p.astype(jnp.bfloat16), v, preferred_element_type=jnp.float32)
        # stream this head's output straight into the (NPAD, D) scratch
        attn_ref[:, h * hd:(h + 1) * hd] = o.astype(jnp.bfloat16)

    # fused output projection + residual add (attn out already lives in VMEM)
    proj = jnp.dot(attn_ref[...], pw_ref[...], preferred_element_type=jnp.float32)
    proj = proj + pb_ref[...].astype(jnp.float32) + res_ref[0].astype(jnp.float32)
    o_ref[0] = proj.astype(o_ref.dtype)


def attention_proj(qkv, proj_w, proj_b, residual, *, n_valid):
    """qkv: (B, NPAD, 3D) -> residual + attn(qkv) @ proj_w + proj_b, (B, NPAD, D)."""
    Bsz, Npad, three_d = qkv.shape
    d = three_d // 3
    kernel = functools.partial(_attn_proj_kernel, heads=HEADS, hd=HD,
                               n_valid=n_valid)
    return pl.pallas_call(
        kernel,
        out_shape=jax.ShapeDtypeStruct((Bsz, Npad, d), jnp.bfloat16),
        grid=(Bsz,),
        in_specs=[pl.BlockSpec((1, Npad, three_d), lambda b: (b, 0, 0)),
                  pl.BlockSpec((d, d), lambda b: (0, 0)),
                  pl.BlockSpec((1, d), lambda b: (0, 0)),
                  pl.BlockSpec((1, Npad, d), lambda b: (b, 0, 0))],
        out_specs=pl.BlockSpec((1, Npad, d), lambda b: (b, 0, 0)),
        scratch_shapes=[pltpu.VMEM((Npad, d), jnp.bfloat16)],
        compiler_params=pltpu.CompilerParams(
            dimension_semantics=("parallel",),
            vmem_limit_bytes=VMEM_LIMIT),
    )(qkv, proj_w, proj_b.reshape(1, d), residual)


# ----------------------------- parameter init -------------------------------
def init_params(key):
    """f32 parameters in PyTorch layouts (Conv2d (D,C,P,P), Linear (in,out))."""
    def nrm(k, shape, std=0.02):
        return (std * jax.random.normal(k, shape)).astype(jnp.float32)

    keys = jax.random.split(key, 8 + DEPTH)
    params = {
        "patch_w": nrm(keys[0], (D, C, P, P)),
        "patch_b": jnp.zeros((D,), jnp.float32),
        "cls_token": nrm(keys[1], (1, 1, D)),
        "pos_embed": nrm(keys[2], (1, N, D)),
        "norm_g": jnp.ones((D,), jnp.float32),
        "norm_b": jnp.zeros((D,), jnp.float32),
        "head_w": nrm(keys[3], (D, 1)),
        "head_b": jnp.zeros((1,), jnp.float32),
        "blocks": [],
    }
    for d in range(DEPTH):
        bk = jax.random.split(keys[8 + d], 4)
        params["blocks"].append({
            "ln1_g": jnp.ones((D,), jnp.float32),
            "ln1_b": jnp.zeros((D,), jnp.float32),
            "qkv_w": nrm(bk[0], (D, 3 * D)),
            "qkv_b": jnp.zeros((3 * D,), jnp.float32),
            "proj_w": nrm(bk[1], (D, D)),
            "proj_b": jnp.zeros((D,), jnp.float32),
            "ln2_g": jnp.ones((D,), jnp.float32),
            "ln2_b": jnp.zeros((D,), jnp.float32),
            "fc1_w": nrm(bk[2], (D, MLP)),
            "fc1_b": jnp.zeros((MLP,), jnp.float32),
            "fc2_w": nrm(bk[3], (MLP, D)),
            "fc2_b": jnp.zeros((D,), jnp.float32),
        })
    return params


def prepare_params(p):
    """One-time kernel-ready prep: bf16 matmul weights, conv weight reshaped
    to (C*P*P, D), attention scale folded into the q columns of qkv_w/qkv_b."""
    scale = 1.0 / math.sqrt(HD)
    out = {
        "patch_w": p["patch_w"].reshape(D, C * P * P).T.astype(jnp.bfloat16),
        "patch_b": p["patch_b"],
        "cls_token": p["cls_token"],
        "pos_embed": p["pos_embed"],
        "norm_g": p["norm_g"], "norm_b": p["norm_b"],
        "head_w": p["head_w"], "head_b": p["head_b"],
        "blocks": [],
    }
    for blk in p["blocks"]:
        qkv_w = blk["qkv_w"].at[:, :D].multiply(scale)   # fold scale into q
        qkv_b = blk["qkv_b"].at[:D].multiply(scale)
        out["blocks"].append({
            "ln1_g": blk["ln1_g"], "ln1_b": blk["ln1_b"],
            "qkv_w": qkv_w.astype(jnp.bfloat16), "qkv_b": qkv_b,
            "proj_w": blk["proj_w"].astype(jnp.bfloat16), "proj_b": blk["proj_b"],
            "ln2_g": blk["ln2_g"], "ln2_b": blk["ln2_b"],
            "fc1_w": blk["fc1_w"].astype(jnp.bfloat16), "fc1_b": blk["fc1_b"],
            "fc2_w": blk["fc2_w"].astype(jnp.bfloat16), "fc2_b": blk["fc2_b"],
        })
    return out


# ----------------------------- forward pass ----------------------------------
def vit_forward(params, x):
    """x: (B, C, IMG, IMG) float32 NCHW (like PyTorch). Returns (B, 1) f32."""
    b, c, h, w = x.shape
    nh, nw = h // P, w // P

    # --- patch embed (conv k=P, s=P) as im2col + fused matmul ---
    patches = x.reshape(b, c, nh, P, nw, P)
    patches = patches.transpose(0, 2, 4, 1, 3, 5).reshape(b * nh * nw, c * P * P)
    tok = fused_linear(patches, params["patch_w"], params["patch_b"])  # bf16
    tok = tok.reshape(b, nh * nw, D)

    # --- cls token + pos embed, pad sequence once to a sublane multiple ---
    cls = jnp.broadcast_to(params["cls_token"], (b, 1, D)).astype(jnp.float32)
    xseq = jnp.concatenate([cls, tok.astype(jnp.float32)], axis=1) + params["pos_embed"]
    if NPAD != N:
        xseq = jnp.pad(xseq, ((0, 0), (0, NPAD - N), (0, 0)))
    xf = xseq.reshape(b * NPAD, D).astype(jnp.bfloat16)   # residual stream, bf16

    for blk in params["blocks"]:
        # LN1 + qkv projection fused into one kernel (scale pre-folded)
        qkv = fused_linear(xf, blk["qkv_w"], blk["qkv_b"],
                           gamma=blk["ln1_g"], beta=blk["ln1_b"])      # (M, 3D)
        # all-heads attention + out-proj + residual, one batch elem / grid step
        xf = attention_proj(qkv.reshape(b, NPAD, 3 * D), blk["proj_w"],
                            blk["proj_b"], xf.reshape(b, NPAD, D),
                            n_valid=N).reshape(b * NPAD, D)
        # LN2 + fc1 + exact-erf GELU fused
        h2 = fused_linear(xf, blk["fc1_w"], blk["fc1_b"],
                          gamma=blk["ln2_g"], beta=blk["ln2_b"],
                          activation="gelu")
        # fc2 + residual add fused
        xf = fused_linear(h2, blk["fc2_w"], blk["fc2_b"], residual=xf)

    # --- final norm on cls token + (D -> 1) head: tiny epilogue, plain JAX ---
    # TODO(synk): an Nf=1 Pallas output is a 1/128-lane masked store; XLA fuses
    # this tiny epilogue better, so it stays outside Pallas.
    cls_tok = xf.reshape(b, NPAD, D)[:, 0, :].astype(jnp.float32)      # (B, D)
    mu = jnp.mean(cls_tok, axis=-1, keepdims=True)
    xc = cls_tok - mu
    var = jnp.mean(xc * xc, axis=-1, keepdims=True)
    cls_n = xc * lax.rsqrt(var + EPS) * params["norm_g"] + params["norm_b"]
    out = cls_n @ params["head_w"] + params["head_b"]                  # (B, 1)
    return out


if __name__ == "__main__":
    key = jax.random.PRNGKey(0)
    pkey, xkey = jax.random.split(key)
    params = prepare_params(init_params(pkey))
    x = jax.random.normal(xkey, (B, C, IMG, IMG), dtype=jnp.float32)

    fwd = jax.jit(vit_forward)
    out = fwd(params, x)
    jax.block_until_ready(out)
    assert out.shape == (B, 1), out.shape
    print("KERNEL_OK")
</pallas_src>

<mosaic_0001>
module attributes {stable_mosaic.version = 11 : i64} {
  func.func @_fused_linear_kernel(%arg0: i32, %arg1: i32, %arg2: memref<32x192xf32, #tpu.memory_space<vmem>>, %arg3: memref<192x128xbf16, #tpu.memory_space<vmem>>, %arg4: memref<1x128xf32, #tpu.memory_space<vmem>>, %arg5: memref<32x128xbf16, #tpu.memory_space<vmem>>) attributes {dimension_semantics = [#tpu.dimension_semantics<parallel>, #tpu.dimension_semantics<parallel>], iteration_bounds = array<i64: 1, 1>, scalar_prefetch = 0 : i64, scratch_operands = 0 : i64, tpu.core_type = #tpu.core_type<tc>, window_params = [{transform_indices = @transform_0, window_bounds = array<i64: 32, 192>}, {transform_indices = @transform_1, window_bounds = array<i64: 192, 128>}, {transform_indices = @transform_2, window_bounds = array<i64: 1, 128>}, {transform_indices = @transform_3, window_bounds = array<i64: 32, 128>}]} {
    %c0 = arith.constant 0 : index
    %c0_0 = arith.constant 0 : index
    %0 = vector.load %arg2[%c0, %c0_0] : memref<32x192xf32, #tpu.memory_space<vmem>>, vector<32x192xf32>
    %1 = arith.truncf %0 : vector<32x192xf32> to vector<32x192xbf16>
    %c0_1 = arith.constant 0 : index
    %c0_2 = arith.constant 0 : index
    %2 = vector.load %arg3[%c0_1, %c0_2] : memref<192x128xbf16, #tpu.memory_space<vmem>>, vector<192x128xbf16>
    %cst = arith.constant dense<0.000000e+00> : vector<32x128xf32>
    %3 = tpu.matmul %1, %2, %cst {dimension_numbers = #tpu.dot_dimension_numbers<[1], [0], [0], [1], [0, 0, 1, 1], [], []>} : vector<32x192xbf16>, vector<192x128xbf16>, vector<32x128xf32> -> vector<32x128xf32>
    %c0_3 = arith.constant 0 : index
    %c0_4 = arith.constant 0 : index
    %4 = vector.load %arg4[%c0_3, %c0_4] : memref<1x128xf32, #tpu.memory_space<vmem>>, vector<1x128xf32>
    %5 = vector.broadcast %4 : vector<1x128xf32> to vector<32x128xf32>
    %6 = arith.addf %3, %5 : vector<32x128xf32>
    %7 = arith.truncf %6 : vector<32x128xf32> to vector<32x128xbf16>
    %c0_5 = arith.constant 0 : index
    %c0_6 = arith.constant 0 : index
    %8 = vector.load %arg5[%c0_5, %c0_6] : memref<32x128xbf16, #tpu.memory_space<vmem>>, vector<32x128xbf16>
    tpu.vector_store %arg5[%c0_5, %c0_6], %7 {strides = array<i32>} : memref<32x128xbf16, #tpu.memory_space<vmem>>, vector<32x128xbf16>,
    return
  }
  func.func @transform_0(%arg0: i32, %arg1: i32) -> (i32, i32) {
    %c0_i32 = arith.constant 0 : i32
    %c0_i32_0 = arith.constant 0 : i32
    return %arg0, %c0_i32 : i32, i32
  }
  func.func @transform_1(%arg0: i32, %arg1: i32) -> (i32, i32) {
    %c0_i32 = arith.constant 0 : i32
    %c0_i32_0 = arith.constant 0 : i32
    return %c0_i32, %arg1 : i32, i32
  }
  func.func @transform_2(%arg0: i32, %arg1: i32) -> (i32, i32) {
    %c0_i32 = arith.constant 0 : i32
    %c0_i32_0 = arith.constant 0 : i32
    return %c0_i32, %arg1 : i32, i32
  }
  func.func @transform_3(%arg0: i32, %arg1: i32) -> (i32, i32) {
    %c0_i32 = arith.constant 0 : i32
    return %arg0, %arg1 : i32, i32
  }
}

module attributes {stable_mosaic.version = 11 : i64} {
  func.func @_attn_proj_kernel(%arg0: i32, %arg1: memref<1x32x384xbf16, #tpu.memory_space<vmem>>, %arg2: memref<128x128xbf16, #tpu.memory_space<vmem>>, %arg3: memref<1x128xf32, #tpu.memory_space<vmem>>, %arg4: memref<1x32x128xbf16, #tpu.memory_space<vmem>>, %arg5: memref<1x32x128xbf16, #tpu.memory_space<vmem>>, %arg6: memref<32x128xbf16, #tpu.memory_space<vmem>>) attributes {dimension_semantics = [#tpu.dimension_semantics<parallel>], iteration_bounds = array<i64: 2>, scalar_prefetch = 0 : i64, scratch_operands = 1 : i64, tpu.core_type = #tpu.core_type<tc>, window_params = [{transform_indices = @transform_0, window_bounds = array<i64: 1, 32, 384>}, {pipeline_mode = #tpu.pipeline_mode<synchronous>, transform_indices = @transform_1, window_bounds = array<i64: 128, 128>}, {pipeline_mode = #tpu.pipeline_mode<synchronous>, transform_indices = @transform_2, window_bounds = array<i64: 1, 128>}, {transform_indices = @transform_3, window_bounds = array<i64: 1, 32, 128>}, {transform_indices = @transform_4, window_bounds = array<i64: 1, 32, 128>}]} {
    %c0 = arith.constant 0 : index
    %c0_0 = arith.constant 0 : index
    %c0_1 = arith.constant 0 : index
    %0 = vector.load %arg1[%c0, %c0_0, %c0_1] : memref<1x32x384xbf16, #tpu.memory_space<vmem>>, vector<1x32x384xbf16>
    %1 = vector.shape_cast %0 : vector<1x32x384xbf16> to vector<32x384xbf16>
    %2 = tpu.iota {dimensions = array<i32: 1>} : vector<1x32xi32>
    %c17_i32 = arith.constant 17 : i32
    %3 = vector.broadcast %c17_i32 : i32 to vector<1x32xi32>
    %4 = arith.cmpi slt, %2, %3 : vector<1x32xi32>
    %cst = arith.constant 0.000000e+00 : f32
    %cst_2 = arith.constant -1.000000e+30 : f32
    %5 = vector.broadcast %cst : f32 to vector<1x32xf32>
    %6 = vector.broadcast %cst_2 : f32 to vector<1x32xf32>
    %7 = arith.select %4, %5, %6 : vector<1x32xi1>, vector<1x32xf32>
    %8 = vector.extract_strided_slice %1 {offsets = [0, 0], sizes = [32, 32], strides = [1, 1]} : vector<32x384xbf16> to vector<32x32xbf16>
    %9 = vector.extract_strided_slice %1 {offsets = [0, 128], sizes = [32, 32], strides = [1, 1]} : vector<32x384xbf16> to vector<32x32xbf16>
    %10 = vector.extract_strided_slice %1 {offsets = [0, 256], sizes = [32, 32], strides = [1, 1]} : vector<32x384xbf16> to vector<32x32xbf16>
    %cst_3 = arith.constant dense<0.000000e+00> : vector<32x32xf32>
    %11 = tpu.matmul %8, %9, %cst_3 {dimension_numbers = #tpu.dot_dimension_numbers<[1], [1], [0], [0], [0, 0, 1, 0], [], []>} : vector<32x32xbf16>, vector<32x32xbf16>, vector<32x32xf32> -> vector<32x32xf32>
    %12 = vector.broadcast %7 : vector<1x32xf32> to vector<32x32xf32>
    %13 = arith.addf %11, %12 : vector<32x32xf32>
    %cst_4 = arith.constant dense<0xFF800000> : vector<32xf32>
    %14 = vector.multi_reduction <maximumf>, %13, %cst_4 [1] : vector<32x32xf32> to vector<32xf32>
    %15 = vector.shape_cast %14 : vector<32xf32> to vector<32x1xf32>
    %16 = vector.broadcast %15 : vector<32x1xf32> to vector<32x32xf32>
    %17 = arith.subf %13, %16 : vector<32x32xf32>
    %18 = math.exp %17 : vector<32x32xf32>
    %cst_5 = arith.constant dense<0.000000e+00> : vector<32xf32>
    %19 = vector.multi_reduction <add>, %18, %cst_5 [1] : vector<32x32xf32> to vector<32xf32>
    %20 = vector.shape_cast %19 : vector<32xf32> to vector<32x1xf32>
    %21 = tpu.reciprocal %20 {approx = true} : vector<32x1xf32> -> vector<32x1xf32>
    %22 = vector.broadcast %21 : vector<32x1xf32> to vector<32x32xf32>
    %23 = arith.mulf %18, %22 : vector<32x32xf32>
    %24 = arith.truncf %23 : vector<32x32xf32> to vector<32x32xbf16>
    %cst_6 = arith.constant dense<0.000000e+00> : vector<32x32xf32>
    %25 = tpu.matmul %24, %10, %cst_6 {dimension_numbers = #tpu.dot_dimension_numbers<[1], [0], [0], [1], [0, 0, 1, 1], [], []>} : vector<32x32xbf16>, vector<32x32xbf16>, vector<32x32xf32> -> vector<32x32xf32>
    %26 = arith.truncf %25 : vector<32x32xf32> to vector<32x32xbf16>
    %c0_7 = arith.constant 0 : index
    %c0_8 = arith.constant 0 : index
    %27 = vector.load %arg6[%c0_7, %c0_8] : memref<32x128xbf16, #tpu.memory_space<vmem>>, vector<32x32xbf16>
    tpu.vector_store %arg6[%c0_7, %c0_8], %26 {strides = array<i32>} : memref<32x128xbf16, #tpu.memory_space<vmem>>, vector<32x32xbf16>,
    %28 = vector.extract_strided_slice %1 {offsets = [0, 32], sizes = [32, 32], strides = [1, 1]} : vector<32x384xbf16> to vector<32x32xbf16>
    %29 = vector.extract_strided_slice %1 {offsets = [0, 160], sizes = [32, 32], strides = [1, 1]} : vector<32x384xbf16> to vector<32x32xbf16>
    %30 = vector.extract_strided_slice %1 {offsets = [0, 288], sizes = [32, 32], strides = [1, 1]} : vector<32x384xbf16> to vector<32x32xbf16>
    %cst_9 = arith.constant dense<0.000000e+00> : vector<32x32xf32>
    %31 = tpu.matmul %28, %29, %cst_9 {dimension_numbers = #tpu.dot_dimension_numbers<[1], [1], [0], [0], [0, 0, 1, 0], [], []>} : vector<32x32xbf16>, vector<32x32xbf16>, vector<32x32xf32> -> vector<32x32xf32>
    %32 = vector.broadcast %7 : vector<1x32xf32> to vector<32x32xf32>
    %33 = arith.addf %31, %32 : vector<32x32xf32>
    %cst_10 = arith.constant dense<0xFF800000> : vector<32xf32>
    %34 = vector.multi_reduction <maximumf>, %33, %cst_10 [1] : vector<32x32xf32> to vector<32xf32>
    %35 = vector.shape_cast %34 : vector<32xf32> to vector<32x1xf32>
    %36 = vector.broadcast %35 : vector<32x1xf32> to vector<32x32xf32>
    %37 = arith.subf %33, %36 : vector<32x32xf32>
    %38 = math.exp %37 : vector<32x32xf32>
    %cst_11 = arith.constant dense<0.000000e+00> : vector<32xf32>
    %39 = vector.multi_reduction <add>, %38, %cst_11 [1] : vector<32x32xf32> to vector<32xf32>
    %40 = vector.shape_cast %39 : vector<32xf32> to vector<32x1xf32>
    %41 = tpu.reciprocal %40 {approx = true} : vector<32x1xf32> -> vector<32x1xf32>
    %42 = vector.broadcast %41 : vector<32x1xf32> to vector<32x32xf32>
    %43 = arith.mulf %38, %42 : vector<32x32xf32>
    %44 = arith.truncf %43 : vector<32x32xf32> to vector<32x32xbf16>
    %cst_12 = arith.constant dense<0.000000e+00> : vector<32x32xf32>
    %45 = tpu.matmul %44, %30, %cst_12 {dimension_numbers = #tpu.dot_dimension_numbers<[1], [0], [0], [1], [0, 0, 1, 1], [], []>} : vector<32x32xbf16>, vector<32x32xbf16>, vector<32x32xf32> -> vector<32x32xf32>
    %46 = arith.truncf %45 : vector<32x32xf32> to vector<32x32xbf16>
    %c0_13 = arith.constant 0 : index
    %c32 = arith.constant 32 : index
    %47 = vector.load %arg6[%c0_13, %c32] : memref<32x128xbf16, #tpu.memory_space<vmem>>, vector<32x32xbf16>
    tpu.vector_store %arg6[%c0_13, %c32], %46 {strides = array<i32>} : memref<32x128xbf16, #tpu.memory_space<vmem>>, vector<32x32xbf16>,
    %48 = vector.extract_strided_slice %1 {offsets = [0, 64], sizes = [32, 32], strides = [1, 1]} : vector<32x384xbf16> to vector<32x32xbf16>
    %49 = vector.extract_strided_slice %1 {offsets = [0, 192], sizes = [32, 32], strides = [1, 1]} : vector<32x384xbf16> to vector<32x32xbf16>
    %50 = vector.extract_strided_slice %1 {offsets = [0, 320], sizes = [32, 32], strides = [1, 1]} : vector<32x384xbf16> to vector<32x32xbf16>
    %cst_14 = arith.constant dense<0.000000e+00> : vector<32x32xf32>
    %51 = tpu.matmul %48, %49, %cst_14 {dimension_numbers = #tpu.dot_dimension_numbers<[1], [1], [0], [0], [0, 0, 1, 0], [], []>} : vector<32x32xbf16>, vector<32x32xbf16>, vector<32x32xf32> -> vector<32x32xf32>
    %52 = vector.broadcast %7 : vector<1x32xf32> to vector<32x32xf32>
    %53 = arith.addf %51, %52 : vector<32x32xf32>
    %cst_15 = arith.constant dense<0xFF800000> : vector<32xf32>
    %54 = vector.multi_reduction <maximumf>, %53, %cst_15 [1] : vector<32x32xf32> to vector<32xf32>
    %55 = vector.shape_cast %54 : vector<32xf32> to vector<32x1xf32>
    %56 = vector.broadcast %55 : vector<32x1xf32> to vector<32x32xf32>
    %57 = arith.subf %53, %56 : vector<32x32xf32>
    %58 = math.exp %57 : vector<32x32xf32>
    %cst_16 = arith.constant dense<0.000000e+00> : vector<32xf32>
    %59 = vector.multi_reduction <add>, %58, %cst_16 [1] : vector<32x32xf32> to vector<32xf32>
    %60 = vector.shape_cast %59 : vector<32xf32> to vector<32x1xf32>
    %61 = tpu.reciprocal %60 {approx = true} : vector<32x1xf32> -> vector<32x1xf32>
    %62 = vector.broadcast %61 : vector<32x1xf32> to vector<32x32xf32>
    %63 = arith.mulf %58, %62 : vector<32x32xf32>
    %64 = arith.truncf %63 : vector<32x32xf32> to vector<32x32xbf16>
    %cst_17 = arith.constant dense<0.000000e+00> : vector<32x32xf32>
    %65 = tpu.matmul %64, %50, %cst_17 {dimension_numbers = #tpu.dot_dimension_numbers<[1], [0], [0], [1], [0, 0, 1, 1], [], []>} : vector<32x32xbf16>, vector<32x32xbf16>, vector<32x32xf32> -> vector<32x32xf32>
    %66 = arith.truncf %65 : vector<32x32xf32> to vector<32x32xbf16>
    %c0_18 = arith.constant 0 : index
    %c64 = arith.constant 64 : index
    %67 = vector.load %arg6[%c0_18, %c64] : memref<32x128xbf16, #tpu.memory_space<vmem>>, vector<32x32xbf16>
    tpu.vector_store %arg6[%c0_18, %c64], %66 {strides = array<i32>} : memref<32x128xbf16, #tpu.memory_space<vmem>>, vector<32x32xbf16>,
    %68 = vector.extract_strided_slice %1 {offsets = [0, 96], sizes = [32, 32], strides = [1, 1]} : vector<32x384xbf16> to vector<32x32xbf16>
    %69 = vector.extract_strided_slice %1 {offsets = [0, 224], sizes = [32, 32], strides = [1, 1]} : vector<32x384xbf16> to vector<32x32xbf16>
    %70 = vector.extract_strided_slice %1 {offsets = [0, 352], sizes = [32, 32], strides = [1, 1]} : vector<32x384xbf16> to vector<32x32xbf16>
    %cst_19 = arith.constant dense<0.000000e+00> : vector<32x32xf32>
    %71 = tpu.matmul %68, %69, %cst_19 {dimension_numbers = #tpu.dot_dimension_numbers<[1], [1], [0], [0], [0, 0, 1, 0], [], []>} : vector<32x32xbf16>, vector<32x32xbf16>, vector<32x32xf32> -> vector<32x32xf32>
    %72 = vector.broadcast %7 : vector<1x32xf32> to vector<32x32xf32>
    %73 = arith.addf %71, %72 : vector<32x32xf32>
    %cst_20 = arith.constant dense<0xFF800000> : vector<32xf32>
    %74 = vector.multi_reduction <maximumf>, %73, %cst_20 [1] : vector<32x32xf32> to vector<32xf32>
    %75 = vector.shape_cast %74 : vector<32xf32> to vector<32x1xf32>
    %76 = vector.broadcast %75 : vector<32x1xf32> to vector<32x32xf32>
    %77 = arith.subf %73, %76 : vector<32x32xf32>
    %78 = math.exp %77 : vector<32x32xf32>
    %cst_21 = arith.constant dense<0.000000e+00> : vector<32xf32>
    %79 = vector.multi_reduction <add>, %78, %cst_21 [1] : vector<32x32xf32> to vector<32xf32>
    %80 = vector.shape_cast %79 : vector<32xf32> to vector<32x1xf32>
    %81 = tpu.reciprocal %80 {approx = true} : vector<32x1xf32> -> vector<32x1xf32>
    %82 = vector.broadcast %81 : vector<32x1xf32> to vector<32x32xf32>
    %83 = arith.mulf %78, %82 : vector<32x32xf32>
    %84 = arith.truncf %83 : vector<32x32xf32> to vector<32x32xbf16>
    %cst_22 = arith.constant dense<0.000000e+00> : vector<32x32xf32>
    %85 = tpu.matmul %84, %70, %cst_22 {dimension_numbers = #tpu.dot_dimension_numbers<[1], [0], [0], [1], [0, 0, 1, 1], [], []>} : vector<32x32xbf16>, vector<32x32xbf16>, vector<32x32xf32> -> vector<32x32xf32>
    %86 = arith.truncf %85 : vector<32x32xf32> to vector<32x32xbf16>
    %c0_23 = arith.constant 0 : index
    %c96 = arith.constant 96 : index
    %87 = vector.load %arg6[%c0_23, %c96] : memref<32x128xbf16, #tpu.memory_space<vmem>>, vector<32x32xbf16>
    tpu.vector_store %arg6[%c0_23, %c96], %86 {strides = array<i32>} : memref<32x128xbf16, #tpu.memory_space<vmem>>, vector<32x32xbf16>,
    %c0_24 = arith.constant 0 : index
    %c0_25 = arith.constant 0 : index
    %88 = vector.load %arg6[%c0_24, %c0_25] : memref<32x128xbf16, #tpu.memory_space<vmem>>, vector<32x128xbf16>
    %c0_26 = arith.constant 0 : index
    %c0_27 = arith.constant 0 : index
    %89 = vector.load %arg2[%c0_26, %c0_27] : memref<128x128xbf16, #tpu.memory_space<vmem>>, vector<128x128xbf16>
    %cst_28 = arith.constant dense<0.000000e+00> : vector<32x128xf32>
    %90 = tpu.matmul %88, %89, %cst_28 {dimension_numbers = #tpu.dot_dimension_numbers<[1], [0], [0], [1], [0, 0, 1, 1], [], []>} : vector<32x128xbf16>, vector<128x128xbf16>, vector<32x128xf32> -> vector<32x128xf32>
    %c0_29 = arith.constant 0 : index
    %c0_30 = arith.constant 0 : index
    %91 = vector.load %arg3[%c0_29, %c0_30] : memref<1x128xf32, #tpu.memory_space<vmem>>, vector<1x128xf32>
    %92 = vector.broadcast %91 : vector<1x128xf32> to vector<32x128xf32>
    %93 = arith.addf %90, %92 : vector<32x128xf32>
    %c0_31 = arith.constant 0 : index
    %c0_32 = arith.constant 0 : index
    %c0_33 = arith.constant 0 : index
    %94 = vector.load %arg4[%c0_31, %c0_32, %c0_33] : memref<1x32x128xbf16, #tpu.memory_space<vmem>>, vector<1x32x128xbf16>
    %95 = vector.shape_cast %94 : vector<1x32x128xbf16> to vector<32x128xbf16>
    %96 = arith.extf %95 : vector<32x128xbf16> to vector<32x128xf32>
    %97 = arith.addf %93, %96 : vector<32x128xf32>
    %98 = arith.truncf %97 : vector<32x128xf32> to vector<32x128xbf16>
    %c0_34 = arith.constant 0 : index
    %c0_35 = arith.constant 0 : index
    %c0_36 = arith.constant 0 : index
    %99 = vector.load %arg5[%c0_34, %c0_35, %c0_36] : memref<1x32x128xbf16, #tpu.memory_space<vmem>>, vector<1x32x128xbf16>
    %100 = vector.shape_cast %99 : vector<1x32x128xbf16> to vector<32x128xbf16>
    %101 = vector.shape_cast %98 : vector<32x128xbf16> to vector<1x32x128xbf16>
    tpu.vector_store %arg5[%c0_34, %c0_35, %c0_36], %101 {strides = array<i32>} : memref<1x32x128xbf16, #tpu.memory_space<vmem>>, vector<1x32x128xbf16>,
    return
  }
  func.func @transform_0(%arg0: i32) -> (i32, i32, i32) {
    %c0_i32 = arith.constant 0 : i32
    %c0_i32_0 = arith.constant 0 : i32
    %c0_i32_1 = arith.constant 0 : i32
    return %arg0, %c0_i32, %c0_i32_0 : i32, i32, i32
  }
  func.func @transform_1(%arg0: i32) -> (i32, i32) {
    %c0_i32 = arith.constant 0 : i32
    %c0_i32_0 = arith.constant 0 : i32
    %c0_i32_1 = arith.constant 0 : i32
    return %c0_i32, %c0_i32_0 : i32, i32
  }
  func.func @transform_2(%arg0: i32) -> (i32, i32) {
    %c0_i32 = arith.constant 0 : i32
    %c0_i32_0 = arith.constant 0 : i32
    %c0_i32_1 = arith.constant 0 : i32
    return %c0_i32, %c0_i32_0 : i32, i32
  }
  func.func @transform_3(%arg0: i32) -> (i32, i32, i32) {
    %c0_i32 = arith.constant 0 : i32
    %c0_i32_0 = arith.constant 0 : i32
    %c0_i32_1 = arith.constant 0 : i32
    return %arg0, %c0_i32, %c0_i32_0 : i32, i32, i32
  }
  func.func @transform_4(%arg0: i32) -> (i32, i32, i32) {
    %c0_i32 = arith.constant 0 : i32
    %c0_i32_0 = arith.constant 0 : i32
    %c0_i32_1 = arith.constant 0 : i32
    return %arg0, %c0_i32, %c0_i32_0 : i32, i32, i32
  }
}

module attributes {stable_mosaic.version = 11 : i64} {
  func.func @_fused_linear_kernel(%arg0: i32, %arg1: i32, %arg2: memref<64x128xbf16, #tpu.memory_space<vmem>>, %arg3: memref<1x128xf32, #tpu.memory_space<vmem>>, %arg4: memref<1x128xf32, #tpu.memory_space<vmem>>, %arg5: memref<128x512xbf16, #tpu.memory_space<vmem>>, %arg6: memref<1x512xf32, #tpu.memory_space<vmem>>, %arg7: memref<64x512xbf16, #tpu.memory_space<vmem>>, %arg8: memref<64x128xbf16, #tpu.memory_space<vmem>>) attributes {dimension_semantics = [#tpu.dimension_semantics<parallel>, #tpu.dimension_semantics<arbitrary>], iteration_bounds = array<i64: 1, 1>, scalar_prefetch = 0 : i64, scratch_operands = 1 : i64, tpu.core_type = #tpu.core_type<tc>, window_params = [{transform_indices = @transform_0, window_bounds = array<i64: 64, 128>}, {pipeline_mode = #tpu.pipeline_mode<synchronous>, transform_indices = @transform_1, window_bounds = array<i64: 1, 128>}, {pipeline_mode = #tpu.pipeline_mode<synchronous>, transform_indices = @transform_2, window_bounds = array<i64: 1, 128>}, {transform_indices = @transform_3, window_bounds = array<i64: 128, 512>}, {transform_indices = @transform_4, window_bounds = array<i64: 1, 512>}, {transform_indices = @transform_5, window_bounds = array<i64: 64, 512>}]} {
    %c0_i32 = arith.constant 0 : i32
    %0 = arith.cmpi eq, %arg1, %c0_i32 : i32
    %1 = arith.extui %0 : i1 to i32
    %c0_i32_0 = arith.constant 0 : i32
    %2 = arith.cmpi ne, %1, %c0_i32_0 : i32
    scf.if %2 {
      %c0_11 = arith.constant 0 : index
      %c0_12 = arith.constant 0 : index
      %19 = vector.load %arg2[%c0_11, %c0_12] : memref<64x128xbf16, #tpu.memory_space<vmem>>, vector<64x128xbf16>
      %20 = arith.extf %19 : vector<64x128xbf16> to vector<64x128xf32>
      %cst_13 = arith.constant dense<0.000000e+00> : vector<64xf32>
      %21 = vector.multi_reduction <add>, %20, %cst_13 [1] : vector<64x128xf32> to vector<64xf32>
      %22 = vector.shape_cast %21 : vector<64xf32> to vector<64x1xf32>
      %cst_14 = arith.constant 1.280000e+02 : f32
      %23 = vector.broadcast %cst_14 : f32 to vector<64x1xf32>
      %24 = arith.divf %22, %23 : vector<64x1xf32>
      %25 = vector.broadcast %24 : vector<64x1xf32> to vector<64x128xf32>
      %26 = arith.subf %20, %25 : vector<64x128xf32>
      %27 = arith.mulf %26, %26 : vector<64x128xf32>
      %cst_15 = arith.constant dense<0.000000e+00> : vector<64xf32>
      %28 = vector.multi_reduction <add>, %27, %cst_15 [1] : vector<64x128xf32> to vector<64xf32>
      %29 = vector.shape_cast %28 : vector<64xf32> to vector<64x1xf32>
      %cst_16 = arith.constant 1.280000e+02 : f32
      %30 = vector.broadcast %cst_16 : f32 to vector<64x1xf32>
      %31 = arith.divf %29, %30 : vector<64x1xf32>
      %cst_17 = arith.constant 9.99999997E-7 : f32
      %32 = vector.broadcast %cst_17 : f32 to vector<64x1xf32>
      %33 = arith.addf %31, %32 : vector<64x1xf32>
      %34 = math.rsqrt %33 : vector<64x1xf32>
      %35 = vector.broadcast %34 : vector<64x1xf32> to vector<64x128xf32>
      %36 = arith.mulf %26, %35 : vector<64x128xf32>
      %c0_18 = arith.constant 0 : index
      %c0_19 = arith.constant 0 : index
      %37 = vector.load %arg3[%c0_18, %c0_19] : memref<1x128xf32, #tpu.memory_space<vmem>>, vector<1x128xf32>
      %38 = vector.broadcast %37 : vector<1x128xf32> to vector<64x128xf32>
      %39 = arith.mulf %36, %38 : vector<64x128xf32>
      %c0_20 = arith.constant 0 : index
      %c0_21 = arith.constant 0 : index
      %40 = vector.load %arg4[%c0_20, %c0_21] : memref<1x128xf32, #tpu.memory_space<vmem>>, vector<1x128xf32>
      %41 = vector.broadcast %40 : vector<1x128xf32> to vector<64x128xf32>
      %42 = arith.addf %39, %41 : vector<64x128xf32>
      %43 = arith.truncf %42 : vector<64x128xf32> to vector<64x128xbf16>
      %c0_22 = arith.constant 0 : index
      %c0_23 = arith.constant 0 : index
      %44 = vector.load %arg8[%c0_22, %c0_23] : memref<64x128xbf16, #tpu.memory_space<vmem>>, vector<64x128xbf16>
      tpu.vector_store %arg8[%c0_22, %c0_23], %43 {strides = array<i32>} : memref<64x128xbf16, #tpu.memory_space<vmem>>, vector<64x128xbf16>,
    } else {
    }
    %c0 = arith.constant 0 : index
    %c0_1 = arith.constant 0 : index
    %3 = vector.load %arg8[%c0, %c0_1] : memref<64x128xbf16, #tpu.memory_space<vmem>>, vector<64x128xbf16>
    %c0_2 = arith.constant 0 : index
    %c0_3 = arith.constant 0 : index
    %4 = vector.load %arg5[%c0_2, %c0_3] : memref<128x512xbf16, #tpu.memory_space<vmem>>, vector<128x512xbf16>
    %cst = arith.constant dense<0.000000e+00> : vector<64x512xf32>
    %5 = tpu.matmul %3, %4, %cst {dimension_numbers = #tpu.dot_dimension_numbers<[1], [0], [0], [1], [0, 0, 1, 1], [], []>} : vector<64x128xbf16>, vector<128x512xbf16>, vector<64x512xf32> -> vector<64x512xf32>
    %c0_4 = arith.constant 0 : index
    %c0_5 = arith.constant 0 : index
    %6 = vector.load %arg6[%c0_4, %c0_5] : memref<1x512xf32, #tpu.memory_space<vmem>>, vector<1x512xf32>
    %7 = vector.broadcast %6 : vector<1x512xf32> to vector<64x512xf32>
    %8 = arith.addf %5, %7 : vector<64x512xf32>
    %cst_6 = arith.constant 5.000000e-01 : f32
    %9 = vector.broadcast %cst_6 : f32 to vector<64x512xf32>
    %10 = arith.mulf %9, %8 : vector<64x512xf32>
    %cst_7 = arith.constant 0.707106769 : f32
    %11 = vector.broadcast %cst_7 : f32 to vector<64x512xf32>
    %12 = arith.mulf %8, %11 : vector<64x512xf32>
    %13 = math.erf %12 : vector<64x512xf32>
    %cst_8 = arith.constant 1.000000e+00 : f32
    %14 = vector.broadcast %cst_8 : f32 to vector<64x512xf32>
    %15 = arith.addf %14, %13 : vector<64x512xf32>
    %16 = arith.mulf %10, %15 : vector<64x512xf32>
    %17 = arith.truncf %16 : vector<64x512xf32> to vector<64x512xbf16>
    %c0_9 = arith.constant 0 : index
    %c0_10 = arith.constant 0 : index
    %18 = vector.load %arg7[%c0_9, %c0_10] : memref<64x512xbf16, #tpu.memory_space<vmem>>, vector<64x512xbf16>
    tpu.vector_store %arg7[%c0_9, %c0_10], %17 {strides = array<i32>} : memref<64x512xbf16, #tpu.memory_space<vmem>>, vector<64x512xbf16>,
    return
  }
  func.func @transform_0(%arg0: i32, %arg1: i32) -> (i32, i32) {
    %c0_i32 = arith.constant 0 : i32
    %c0_i32_0 = arith.constant 0 : i32
    return %arg0, %c0_i32 : i32, i32
  }
  func.func @transform_1(%arg0: i32, %arg1: i32) -> (i32, i32) {
    %c0_i32 = arith.constant 0 : i32
    %c0_i32_0 = arith.constant 0 : i32
    %c0_i32_1 = arith.constant 0 : i32
    return %c0_i32, %c0_i32_0 : i32, i32
  }
  func.func @transform_2(%arg0: i32, %arg1: i32) -> (i32, i32) {
    %c0_i32 = arith.constant 0 : i32
    %c0_i32_0 = arith.constant 0 : i32
    %c0_i32_1 = arith.constant 0 : i32
    return %c0_i32, %c0_i32_0 : i32, i32
  }
  func.func @transform_3(%arg0: i32, %arg1: i32) -> (i32, i32) {
    %c0_i32 = arith.constant 0 : i32
    %c0_i32_0 = arith.constant 0 : i32
    return %c0_i32, %arg1 : i32, i32
  }
  func.func @transform_4(%arg0: i32, %arg1: i32) -> (i32, i32) {
    %c0_i32 = arith.constant 0 : i32
    %c0_i32_0 = arith.constant 0 : i32
    return %c0_i32, %arg1 : i32, i32
  }
  func.func @transform_5(%arg0: i32, %arg1: i32) -> (i32, i32) {
    %c0_i32 = arith.constant 0 : i32
    return %arg0, %arg1 : i32, i32
  }
}

module attributes {stable_mosaic.version = 11 : i64} {
  func.func @_fused_linear_kernel(%arg0: i32, %arg1: i32, %arg2: memref<64x128xbf16, #tpu.memory_space<vmem>>, %arg3: memref<1x128xf32, #tpu.memory_space<vmem>>, %arg4: memref<1x128xf32, #tpu.memory_space<vmem>>, %arg5: memref<128x384xbf16, #tpu.memory_space<vmem>>, %arg6: memref<1x384xf32, #tpu.memory_space<vmem>>, %arg7: memref<64x384xbf16, #tpu.memory_space<vmem>>, %arg8: memref<64x128xbf16, #tpu.memory_space<vmem>>) attributes {dimension_semantics = [#tpu.dimension_semantics<parallel>, #tpu.dimension_semantics<arbitrary>], iteration_bounds = array<i64: 1, 1>, scalar_prefetch = 0 : i64, scratch_operands = 1 : i64, tpu.core_type = #tpu.core_type<tc>, window_params = [{transform_indices = @transform_0, window_bounds = array<i64: 64, 128>}, {pipeline_mode = #tpu.pipeline_mode<synchronous>, transform_indices = @transform_1, window_bounds = array<i64: 1, 128>}, {pipeline_mode = #tpu.pipeline_mode<synchronous>, transform_indices = @transform_2, window_bounds = array<i64: 1, 128>}, {transform_indices = @transform_3, window_bounds = array<i64: 128, 384>}, {transform_indices = @transform_4, window_bounds = array<i64: 1, 384>}, {transform_indices = @transform_5, window_bounds = array<i64: 64, 384>}]} {
    %c0_i32 = arith.constant 0 : i32
    %0 = arith.cmpi eq, %arg1, %c0_i32 : i32
    %1 = arith.extui %0 : i1 to i32
    %c0_i32_0 = arith.constant 0 : i32
    %2 = arith.cmpi ne, %1, %c0_i32_0 : i32
    scf.if %2 {
      %c0_8 = arith.constant 0 : index
      %c0_9 = arith.constant 0 : index
      %11 = vector.load %arg2[%c0_8, %c0_9] : memref<64x128xbf16, #tpu.memory_space<vmem>>, vector<64x128xbf16>
      %12 = arith.extf %11 : vector<64x128xbf16> to vector<64x128xf32>
      %cst_10 = arith.constant dense<0.000000e+00> : vector<64xf32>
      %13 = vector.multi_reduction <add>, %12, %cst_10 [1] : vector<64x128xf32> to vector<64xf32>
      %14 = vector.shape_cast %13 : vector<64xf32> to vector<64x1xf32>
      %cst_11 = arith.constant 1.280000e+02 : f32
      %15 = vector.broadcast %cst_11 : f32 to vector<64x1xf32>
      %16 = arith.divf %14, %15 : vector<64x1xf32>
      %17 = vector.broadcast %16 : vector<64x1xf32> to vector<64x128xf32>
      %18 = arith.subf %12, %17 : vector<64x128xf32>
      %19 = arith.mulf %18, %18 : vector<64x128xf32>
      %cst_12 = arith.constant dense<0.000000e+00> : vector<64xf32>
      %20 = vector.multi_reduction <add>, %19, %cst_12 [1] : vector<64x128xf32> to vector<64xf32>
      %21 = vector.shape_cast %20 : vector<64xf32> to vector<64x1xf32>
      %cst_13 = arith.constant 1.280000e+02 : f32
      %22 = vector.broadcast %cst_13 : f32 to vector<64x1xf32>
      %23 = arith.divf %21, %22 : vector<64x1xf32>
      %cst_14 = arith.constant 9.99999997E-7 : f32
      %24 = vector.broadcast %cst_14 : f32 to vector<64x1xf32>
      %25 = arith.addf %23, %24 : vector<64x1xf32>
      %26 = math.rsqrt %25 : vector<64x1xf32>
      %27 = vector.broadcast %26 : vector<64x1xf32> to vector<64x128xf32>
      %28 = arith.mulf %18, %27 : vector<64x128xf32>
      %c0_15 = arith.constant 0 : index
      %c0_16 = arith.constant 0 : index
      %29 = vector.load %arg3[%c0_15, %c0_16] : memref<1x128xf32, #tpu.memory_space<vmem>>, vector<1x128xf32>
      %30 = vector.broadcast %29 : vector<1x128xf32> to vector<64x128xf32>
      %31 = arith.mulf %28, %30 : vector<64x128xf32>
      %c0_17 = arith.constant 0 : index
      %c0_18 = arith.constant 0 : index
      %32 = vector.load %arg4[%c0_17, %c0_18] : memref<1x128xf32, #tpu.memory_space<vmem>>, vector<1x128xf32>
      %33 = vector.broadcast %32 : vector<1x128xf32> to vector<64x128xf32>
      %34 = arith.addf %31, %33 : vector<64x128xf32>
      %35 = arith.truncf %34 : vector<64x128xf32> to vector<64x128xbf16>
      %c0_19 = arith.constant 0 : index
      %c0_20 = arith.constant 0 : index
      %36 = vector.load %arg8[%c0_19, %c0_20] : memref<64x128xbf16, #tpu.memory_space<vmem>>, vector<64x128xbf16>
      tpu.vector_store %arg8[%c0_19, %c0_20], %35 {strides = array<i32>} : memref<64x128xbf16, #tpu.memory_space<vmem>>, vector<64x128xbf16>,
    } else {
    }
    %c0 = arith.constant 0 : index
    %c0_1 = arith.constant 0 : index
    %3 = vector.load %arg8[%c0, %c0_1] : memref<64x128xbf16, #tpu.memory_space<vmem>>, vector<64x128xbf16>
    %c0_2 = arith.constant 0 : index
    %c0_3 = arith.constant 0 : index
    %4 = vector.load %arg5[%c0_2, %c0_3] : memref<128x384xbf16, #tpu.memory_space<vmem>>, vector<128x384xbf16>
    %cst = arith.constant dense<0.000000e+00> : vector<64x384xf32>
    %5 = tpu.matmul %3, %4, %cst {dimension_numbers = #tpu.dot_dimension_numbers<[1], [0], [0], [1], [0, 0, 1, 1], [], []>} : vector<64x128xbf16>, vector<128x384xbf16>, vector<64x384xf32> -> vector<64x384xf32>
    %c0_4 = arith.constant 0 : index
    %c0_5 = arith.constant 0 : index
    %6 = vector.load %arg6[%c0_4, %c0_5] : memref<1x384xf32, #tpu.memory_space<vmem>>, vector<1x384xf32>
    %7 = vector.broadcast %6 : vector<1x384xf32> to vector<64x384xf32>
    %8 = arith.addf %5, %7 : vector<64x384xf32>
    %9 = arith.truncf %8 : vector<64x384xf32> to vector<64x384xbf16>
    %c0_6 = arith.constant 0 : index
    %c0_7 = arith.constant 0 : index
    %10 = vector.load %arg7[%c0_6, %c0_7] : memref<64x384xbf16, #tpu.memory_space<vmem>>, vector<64x384xbf16>
    tpu.vector_store %arg7[%c0_6, %c0_7], %9 {strides = array<i32>} : memref<64x384xbf16, #tpu.memory_space<vmem>>, vector<64x384xbf16>,
    return
  }
  func.func @transform_0(%arg0: i32, %arg1: i32) -> (i32, i32) {
    %c0_i32 = arith.constant 0 : i32
    %c0_i32_0 = arith.constant 0 : i32
    return %arg0, %c0_i32 : i32, i32
  }
  func.func @transform_1(%arg0: i32, %arg1: i32) -> (i32, i32) {
    %c0_i32 = arith.constant 0 : i32
    %c0_i32_0 = arith.constant 0 : i32
    %c0_i32_1 = arith.constant 0 : i32
    return %c0_i32, %c0_i32_0 : i32, i32
  }
  func.func @transform_2(%arg0: i32, %arg1: i32) -> (i32, i32) {
    %c0_i32 = arith.constant 0 : i32
    %c0_i32_0 = arith.constant 0 : i32
    %c0_i32_1 = arith.constant 0 : i32
    return %c0_i32, %c0_i32_0 : i32, i32
  }
  func.func @transform_3(%arg0: i32, %arg1: i32) -> (i32, i32) {
    %c0_i32 = arith.constant 0 : i32
    %c0_i32_0 = arith.constant 0 : i32
    return %c0_i32, %arg1 : i32, i32
  }
  func.func @transform_4(%arg0: i32, %arg1: i32) -> (i32, i32) {
    %c0_i32 = arith.constant 0 : i32
    %c0_i32_0 = arith.constant 0 : i32
    return %c0_i32, %arg1 : i32, i32
  }
  func.func @transform_5(%arg0: i32, %arg1: i32) -> (i32, i32) {
    %c0_i32 = arith.constant 0 : i32
    return %arg0, %arg1 : i32, i32
  }
}

module attributes {stable_mosaic.version = 11 : i64} {
  func.func @_fused_linear_kernel(%arg0: i32, %arg1: i32, %arg2: memref<64x512xbf16, #tpu.memory_space<vmem>>, %arg3: memref<512x128xbf16, #tpu.memory_space<vmem>>, %arg4: memref<1x128xf32, #tpu.memory_space<vmem>>, %arg5: memref<64x128xbf16, #tpu.memory_space<vmem>>, %arg6: memref<64x128xbf16, #tpu.memory_space<vmem>>) attributes {dimension_semantics = [#tpu.dimension_semantics<parallel>, #tpu.dimension_semantics<parallel>], iteration_bounds = array<i64: 1, 1>, scalar_prefetch = 0 : i64, scratch_operands = 0 : i64, tpu.core_type = #tpu.core_type<tc>, window_params = [{transform_indices = @transform_0, window_bounds = array<i64: 64, 512>}, {transform_indices = @transform_1, window_bounds = array<i64: 512, 128>}, {transform_indices = @transform_2, window_bounds = array<i64: 1, 128>}, {transform_indices = @transform_3, window_bounds = array<i64: 64, 128>}, {transform_indices = @transform_4, window_bounds = array<i64: 64, 128>}]} {
    %c0 = arith.constant 0 : index
    %c0_0 = arith.constant 0 : index
    %0 = vector.load %arg2[%c0, %c0_0] : memref<64x512xbf16, #tpu.memory_space<vmem>>, vector<64x512xbf16>
    %c0_1 = arith.constant 0 : index
    %c0_2 = arith.constant 0 : index
    %1 = vector.load %arg3[%c0_1, %c0_2] : memref<512x128xbf16, #tpu.memory_space<vmem>>, vector<512x128xbf16>
    %cst = arith.constant dense<0.000000e+00> : vector<64x128xf32>
    %2 = tpu.matmul %0, %1, %cst {dimension_numbers = #tpu.dot_dimension_numbers<[1], [0], [0], [1], [0, 0, 1, 1], [], []>} : vector<64x512xbf16>, vector<512x128xbf16>, vector<64x128xf32> -> vector<64x128xf32>
    %c0_3 = arith.constant 0 : index
    %c0_4 = arith.constant 0 : index
    %3 = vector.load %arg4[%c0_3, %c0_4] : memref<1x128xf32, #tpu.memory_space<vmem>>, vector<1x128xf32>
    %4 = vector.broadcast %3 : vector<1x128xf32> to vector<64x128xf32>
    %5 = arith.addf %2, %4 : vector<64x128xf32>
    %c0_5 = arith.constant 0 : index
    %c0_6 = arith.constant 0 : index
    %6 = vector.load %arg5[%c0_5, %c0_6] : memref<64x128xbf16, #tpu.memory_space<vmem>>, vector<64x128xbf16>
    %7 = arith.extf %6 : vector<64x128xbf16> to vector<64x128xf32>
    %8 = arith.addf %5, %7 : vector<64x128xf32>
    %9 = arith.truncf %8 : vector<64x128xf32> to vector<64x128xbf16>
    %c0_7 = arith.constant 0 : index
    %c0_8 = arith.constant 0 : index
    %10 = vector.load %arg6[%c0_7, %c0_8] : memref<64x128xbf16, #tpu.memory_space<vmem>>, vector<64x128xbf16>
    tpu.vector_store %arg6[%c0_7, %c0_8], %9 {strides = array<i32>} : memref<64x128xbf16, #tpu.memory_space<vmem>>, vector<64x128xbf16>,
    return
  }
  func.func @transform_0(%arg0: i32, %arg1: i32) -> (i32, i32) {
    %c0_i32 = arith.constant 0 : i32
    %c0_i32_0 = arith.constant 0 : i32
    return %arg0, %c0_i32 : i32, i32
  }
  func.func @transform_1(%arg0: i32, %arg1: i32) -> (i32, i32) {
    %c0_i32 = arith.constant 0 : i32
    %c0_i32_0 = arith.constant 0 : i32
    return %c0_i32, %arg1 : i32, i32
  }
  func.func @transform_2(%arg0: i32, %arg1: i32) -> (i32, i32) {
    %c0_i32 = arith.constant 0 : i32
    %c0_i32_0 = arith.constant 0 : i32
    return %c0_i32, %arg1 : i32, i32
  }
  func.func @transform_3(%arg0: i32, %arg1: i32) -> (i32, i32) {
    %c0_i32 = arith.constant 0 : i32
    return %arg0, %arg1 : i32, i32
  }
  func.func @transform_4(%arg0: i32, %arg1: i32) -> (i32, i32) {
    %c0_i32 = arith.constant 0 : i32
    return %arg0, %arg1 : i32, i32
  }
}

</mosaic_0001>

<llo_original>
// kernel: vit_forward.9
$region0: #{vit_forward.9}
  #allocation0 [shape = 'u32[]', space=smem, size = 0x4, offset = 0x4, fixed_abs, tag = 'smem constant byte address 0x4 - core index']
  #allocation1 [shape = 'u32[144,128]{1,0:T(1,128)}', space=vmem, size = 0x12000, scoped, tag = 'internal scratch']
  %s0 = inlined_call_operand.vmem [shape: f32[32,192], index: 0, kind: input, shape index: {}]
  %s1 = inlined_call_operand.vmem [shape: bf16[192,128], index: 1, kind: input, shape index: {}]
  %s2 = inlined_call_operand.vmem [shape: f32[1,128], index: 2, kind: input, shape index: {}]
  %s3 = inlined_call_operand.vmem [shape: bf16[32,128], index: 3, kind: output, shape index: {}]
  %s4 = sld [smem:[#allocation0]]
  $region22: #{vit_forward.9} parent=0
    _
  %s6 = ssub.s32 1, %s4
  %s7 = scalar_select 0, %s6, %s4
  // Predicated region
  $region2: #{vit_forward.9} parent=0 // pred_check
    _
  $region3: #{vit_forward.9} parent=0 // pred_check_branch
    %9 = sbr.rel (0) target = $region5
  $region4: #{vit_forward.9} parent=0 // pred_region
    _
  $region5: #{vit_forward.9} parent=0 // pred_fallthru
    _
  // Predicated region
  $region6: #{vit_forward.9} parent=0 // pred_check
    _
  $region7: #{vit_forward.9} parent=0 // pred_check_branch
    %11 = sbr.rel (0) target = $region9
  $region8: #{vit_forward.9} parent=0 // pred_region
    _
  $region9: #{vit_forward.9} parent=0 // pred_fallthru
    _
  // Predicated region
  $region10: #{vit_forward.9} parent=0 // pred_check
    _
  $region11: #{vit_forward.9} parent=0 // pred_check_branch
    %13 = sbr.rel (0) target = $region13
  $region12: #{vit_forward.9} parent=0 // pred_region
    _
  $region13: #{vit_forward.9} parent=0 // pred_fallthru
    _
  %v15 = vld [vmem:[%s0] sm:$0xff]
  %v16 = vld [vmem:[%s0 + $0x8] sm:$0xff]
  %v17 = vld [vmem:[%s0 + $0x10] sm:$0xff]
  %v18 = vld [vmem:[%s0 + $0x18] sm:$0xff]
  %v19 = vld [vmem:[%s0 + $0x20] sm:$0xff]
  %v20 = vld [vmem:[%s0 + $0x28] sm:$0xff]
  %v21 = vld [vmem:[%s0 + $0x30] sm:$0xff]
  %v22 = vld [vmem:[%s0 + $0x38] sm:$0xff]
  %v23 = vpack.c.bf16 %v17, %v15
  %v24 = vpack.c.bf16 %v18, %v16
  %v25 = vpack.c.bf16 %v21, %v19
  %v26 = vpack.c.bf16 %v22, %v20
  %v27 = vld [vmem:[%s1] sm:$0xf]
  %v28 = vld [vmem:[%s1 + $0x4] sm:$0xf]
  %v29 = vld [vmem:[%s1 + $0x8] sm:$0xf]
  %v30 = vld [vmem:[%s1 + $0xc] sm:$0xf]
  %v31 = vld [vmem:[%s1 + $0x10] sm:$0xf]
  %v32 = vld [vmem:[%s1 + $0x14] sm:$0xf]
  %v33 = vld [vmem:[%s1 + $0x18] sm:$0xf]
  %v34 = vld [vmem:[%s1 + $0x1c] sm:$0xf]
  %v35 = vld [vmem:[%s1 + $0x20] sm:$0xf]
  %v36 = vld [vmem:[%s1 + $0x24] sm:$0xf]
  %v37 = vld [vmem:[%s1 + $0x28] sm:$0xf]
  %v38 = vld [vmem:[%s1 + $0x2c] sm:$0xf]
  %v39 = vld [vmem:[%s1 + $0x30] sm:$0xf]
  %v40 = vld [vmem:[%s1 + $0x34] sm:$0xf]
  %v41 = vld [vmem:[%s1 + $0x38] sm:$0xf]
  %v42 = vld [vmem:[%s1 + $0x3c] sm:$0xf]
  %v43 = vld [vmem:[%s1 + $0x40] sm:$0xf]
  %v44 = vld [vmem:[%s1 + $0x44] sm:$0xf]
  %v45 = vld [vmem:[%s1 + $0x48] sm:$0xf]
  %v46 = vld [vmem:[%s1 + $0x4c] sm:$0xf]
  %v47 = vld [vmem:[%s1 + $0x50] sm:$0xf]
  %v48 = vld [vmem:[%s1 + $0x54] sm:$0xf]
  %v49 = vld [vmem:[%s1 + $0x58] sm:$0xf]
  %v50 = vld [vmem:[%s1 + $0x5c] sm:$0xf]
  %v51 = vld [vmem:[%s2] sm:$0x1]
  %v53 = vlaneseq
  %v54 = vshrl.u32 %v53, 7
  %v55 = vsub.s32 0, %v54
  %v56 = vrot.slane %v51, %v55
  %v82 = vunpack.c.l.b16 %v27
  %v83 = vunpack.c.l.b16 %v28
  %v84 = vunpack.c.l.b16 %v29
  %v85 = vunpack.c.l.b16 %v30
  %v86 = vunpack.c.l.b16 %v31
  %v87 = vunpack.c.l.b16 %v32
  %v88 = vunpack.c.l.b16 %v33
  %v89 = vunpack.c.l.b16 %v34
  %v90 = vunpack.c.l.b16 %v35
  %v91 = vunpack.c.l.b16 %v36
  %v92 = vunpack.c.l.b16 %v37
  %v93 = vunpack.c.l.b16 %v38
  %v94 = vunpack.c.l.b16 %v39
  %v95 = vunpack.c.l.b16 %v40
  %v96 = vunpack.c.l.b16 %v41
  %v97 = vunpack.c.l.b16 %v42
  %v98 = vunpack.c.l.b16 %v43
  %v99 = vunpack.c.l.b16 %v44
  %v100 = vunpack.c.l.b16 %v45
  %v101 = vunpack.c.l.b16 %v46
  %v102 = vunpack.c.l.b16 %v47
  %v103 = vunpack.c.l.b16 %v48
  %v104 = vunpack.c.l.b16 %v49
  %v105 = vunpack.c.l.b16 %v50
  %v106 = vpack.c.b16 %v83, %v82
  %v107 = vpack.c.b16 %v85, %v84
  %v108 = vpack.c.b16 %v87, %v86
  %v109 = vpack.c.b16 %v89, %v88
  %v110 = vpack.c.b16 %v91, %v90
  %v111 = vpack.c.b16 %v93, %v92
  %v112 = vpack.c.b16 %v95, %v94
  %v113 = vpack.c.b16 %v97, %v96
  %v114 = vpack.c.b16 %v99, %v98
  %v115 = vpack.c.b16 %v101, %v100
  %v116 = vpack.c.b16 %v103, %v102
  %v117 = vpack.c.b16 %v105, %v104
  %vm130 = vcmask 523264
  %v132 = vsel %vm130, %v24, 0
  %v135 = vsel %vm130, %v26, 0
  %137 = vmatprep.subr.bf16.mxu0 0
  %138 = vmatpush1.bf16.msra.mxu0 %v106
  %139 = vmatprep.subr.bf16.mxu0 0
  %140 = vmatpush1.bf16.msra.mxu0 %v107
  %141 = vmatprep.subr.bf16.mxu0 0
  %142 = vmatpush1.bf16.msra.mxu0 %v108
  %143 = vmatprep.subr.bf16.mxu0 0
  %144 = vmatpush1.bf16.msra.mxu0 %v109
  %145 = vmatprep.subr.bf16.mxu0 0
  %146 = vmatpush1.bf16.msra.mxu0 %v110
  %147 = vmatprep.subr.bf16.mxu0 0
  %148 = vmatpush1.bf16.msra.mxu0 %v111
  %149 = vmatprep.subr.bf16.mxu0 0
  %150 = vmatpush1.bf16.msra.mxu0 %v112
  %151 = vmatprep.subr.bf16.mxu0 0
  %152 = vmatpush1.bf16.msra.mxu0 %v113
  %153 = vmatprep.subr.bf16.mxu0 0
  %154 = vmatpush1.bf16.msra.mxu0 %v114
  %155 = vmatprep.subr.bf16.mxu0 0
  %156 = vmatpush1.bf16.msra.mxu0 %v115
  %157 = vmatprep.subr.bf16.mxu0 0
  %158 = vmatpush1.bf16.msra.mxu0 %v116
  %159 = vmatprep.subr.bf16.mxu0 0
  %160 = vmatpush1.bf16.msra.mxu0 %v117
  %161 = vmatprep.subr.bf16.mxu0 0
  %162 = vmatpush1.bf16.msra.mxu0 0
  %163 = vmatprep.subr.bf16.mxu0 0
  %164 = vmatpush1.bf16.msra.mxu0 0
  %165 = vmatprep.subr.bf16.mxu0 0
  %166 = vmatpush1.bf16.msra.mxu0 0
  %167 = vmatprep.subr.bf16.mxu0 0
  %168 = vmatpush1.bf16.msra.mxu0 0
  %169 = vmatprep.mubr.bf16.mxu0 %v132
  %170 = vmatmul.mubr.bf16.gmra.mrb[0].mxu0 %v23
  %v171 = vpop.f32.mrb[0].mxu0
  %v172 = vadd.f32 %v56, %v171
  %v173 = vpop.f32.mrb[0].mxu0
  %v174 = vpop.f32.mrb[0].mxu0
  %v175 = vadd.f32 %v56, %v174
  %v176 = vpop.f32.mrb[0].mxu0
  %177 = vmatprep.mubr.bf16.mxu0 %v135
  %178 = vmatmul.mubr.bf16.gmra.mrb[0].mxu0 %v25
  %v179 = vpop.f32.mrb[0].mxu0
  %v180 = vadd.f32 %v56, %v179
  %v181 = vpop.f32.mrb[0].mxu0
  %v182 = vpop.f32.mrb[0].mxu0
  %v183 = vadd.f32 %v56, %v182
  %v184 = vpop.f32.mrb[0].mxu0
  %185 = vdwg.mxu0
  %v186 = vpack.c.bf16 %v175, %v172
  %v187 = vpack.c.bf16 %v183, %v180
  %v190 = vunpack.c.l.b16 %v186
  %v191 = vunpack.c.h.b16 %v186
  %v192 = vunpack.c.l.b16 %v187
  %v193 = vunpack.c.h.b16 %v187
  %v194 = vpack.c.b16 %v190, %v190
  %v195 = vpack.c.b16 %v191, %v191
  %v196 = vpack.c.b16 %v192, %v192
  %v197 = vpack.c.b16 %v193, %v193
  %202 = vst [vmem:[%s3] sm:$0xf] %v194
  %203 = vst [vmem:[%s3 + $0x4] sm:$0xf] %v195
  %204 = vst [vmem:[%s3 + $0x8] sm:$0xf] %v196
  %205 = vst [vmem:[%s3 + $0xc] sm:$0xf] %v197
  // Predicated region
  $region14: #{vit_forward.9} parent=0 // pred_check
    _
  $region15: #{vit_forward.9} parent=0 // pred_check_branch
    %207 = sbr.rel (0) target = $region17
  $region16: #{vit_forward.9} parent=0 // pred_region
    _
  $region17: #{vit_forward.9} parent=0 // pred_fallthru
    _
  // Predicated region
  $region18: #{vit_forward.9} parent=0 // pred_check
    _
  $region19: #{vit_forward.9} parent=0 // pred_check_branch
    %209 = sbr.rel (0) target = $region21
  $region20: #{vit_forward.9} parent=0 // pred_region
    _
  $region21: #{vit_forward.9} parent=0 // pred_fallthru
    _

// kernel: vit_forward.10
$region0: #{vit_forward.10}
  #allocation0 [shape = 'u32[]', space=smem, size = 0x4, offset = 0x4, fixed_abs, tag = 'smem constant byte address 0x4 - core index']
  #allocation1 [shape = 'u32[144,128]{1,0:T(1,128)}', space=vmem, size = 0x12000, scoped, tag = 'internal scratch']
  #allocation2 [shape = 'bf16[64,128]{1,0:T(16,128)(2,1)}', space=vmem, size = 0x4000, scoped, tag = 'scratch operand']
  %s0 = inlined_call_operand.vmem [shape: bf16[64,128], index: 0, kind: input, shape index: {}]
  %s1 = inlined_call_operand.vmem [shape: f32[1,128], index: 1, kind: input, shape index: {}]
  %s2 = inlined_call_operand.vmem [shape: f32[1,128], index: 2, kind: input, shape index: {}]
  %s3 = inlined_call_operand.vmem [shape: bf16[128,384], index: 3, kind: input, shape index: {}]
  %s4 = inlined_call_operand.vmem [shape: f32[1,384], index: 4, kind: input, shape index: {}]
  %s5 = inlined_call_operand.vmem [shape: bf16[64,384], index: 5, kind: output, shape index: {}]
  %s6 = sld [smem:[#allocation0]]
  $region34: #{vit_forward.10} parent=0
    _
  %s8 = ssub.s32 1, %s6
  %s9 = scalar_select 0, %s8, %s6
  // Predicated region
  $region2: #{vit_forward.10} parent=0 // pred_check
    _
  $region3: #{vit_forward.10} parent=0 // pred_check_branch
    %11 = sbr.rel (0) target = $region5
  $region4: #{vit_forward.10} parent=0 // pred_region
    _
  $region5: #{vit_forward.10} parent=0 // pred_fallthru
    _
  // Predicated region
  $region6: #{vit_forward.10} parent=0 // pred_check
    _
  $region7: #{vit_forward.10} parent=0 // pred_check_branch
    %13 = sbr.rel (0) target = $region9
  $region8: #{vit_forward.10} parent=0 // pred_region
    _
  $region9: #{vit_forward.10} parent=0 // pred_fallthru
    _
  // Predicated region
  $region10: #{vit_forward.10} parent=0 // pred_check
    _
  $region11: #{vit_forward.10} parent=0 // pred_check_branch
    %15 = sbr.rel (0) target = $region13
  $region12: #{vit_forward.10} parent=0 // pred_region
    _
  $region13: #{vit_forward.10} parent=0 // pred_fallthru
    _
  // Predicated region
  $region14: #{vit_forward.10} parent=0 // pred_check
    _
  $region15: #{vit_forward.10} parent=0 // pred_check_branch
    %17 = sbr.rel (0) target = $region17
  $region16: #{vit_forward.10} parent=0 // pred_region
    _
  $region17: #{vit_forward.10} parent=0 // pred_fallthru
    _
  // Predicated region
  $region18: #{vit_forward.10} parent=0 // pred_check
    _
  $region19: #{vit_forward.10} parent=0 // pred_check_branch
    %19 = sbr.rel (0) target = $region21
  $region20: #{vit_forward.10} parent=0 // pred_region
    _
  $region21: #{vit_forward.10} parent=0 // pred_fallthru
    _
  %p21 = scmp.eq.s32.totalorder 0, 0
  // Predicated region
  $region22: #{vit_forward.10} parent=0 // pred_check
    %p22 = pneg %p21
  $region23: #{vit_forward.10} parent=0 // pred_check_branch
    %24 = sbr.rel (%p22) target = $region25
  $region24: #{vit_forward.10} parent=0 // pred_region
    %v25 = vld [vmem:[%s0] sm:$0xf]
    %v26 = vld [vmem:[%s0 + $0x4] sm:$0xf]
    %v27 = vld [vmem:[%s0 + $0x8] sm:$0xf]
    %v28 = vld [vmem:[%s0 + $0xc] sm:$0xf]
    %v29 = vld [vmem:[%s0 + $0x10] sm:$0xf]
    %v30 = vld [vmem:[%s0 + $0x14] sm:$0xf]
    %v31 = vld [vmem:[%s0 + $0x18] sm:$0xf]
    %v32 = vld [vmem:[%s0 + $0x1c] sm:$0xf]
    %v33 = vunpack.c.l.bf16 %v25
    %v34 = vunpack.c.l.bf16 %v26
    %v35 = vunpack.c.l.bf16 %v27
    %v36 = vunpack.c.l.bf16 %v28
    %v37 = vunpack.c.l.bf16 %v29
    %v38 = vunpack.c.l.bf16 %v30
    %v39 = vunpack.c.l.bf16 %v31
    %v40 = vunpack.c.l.bf16 %v32
    %41 = vadd.xlane.f32.xlu0 %v33
    %v42 = vpop.xlane.xlu0 %41
    %43 = vadd.xlane.f32.xlu0 %v34
    %v44 = vpop.xlane.xlu0 %43
    %45 = vadd.xlane.f32.xlu0 %v35
    %v46 = vpop.xlane.xlu0 %45
    %47 = vadd.xlane.f32.xlu0 %v36
    %v48 = vpop.xlane.xlu0 %47
    %49 = vadd.xlane.f32.xlu0 %v37
    %v50 = vpop.xlane.xlu0 %49
    %51 = vadd.xlane.f32.xlu0 %v38
    %v52 = vpop.xlane.xlu0 %51
    %53 = vadd.xlane.f32.xlu0 %v39
    %v54 = vpop.xlane.xlu0 %53
    %55 = vadd.xlane.f32.xlu0 %v40
    %v56 = vpop.xlane.xlu0 %55
    %v57 = vrcp.pop 128.0
    %v58 = vmul.f32 %v42, %v57
    %v59 = vmul.f32 %v44, %v57
    %v60 = vmul.f32 %v46, %v57
    %v61 = vmul.f32 %v48, %v57
    %v62 = vmul.f32 %v50, %v57
    %v63 = vmul.f32 %v52, %v57
    %v64 = vmul.f32 %v54, %v57
    %v65 = vmul.f32 %v56, %v57
    %v66 = vsub.f32 %v33, %v58
    %v67 = vsub.f32 %v34, %v59
    %v68 = vsub.f32 %v35, %v60
    %v69 = vsub.f32 %v36, %v61
    %v70 = vsub.f32 %v37, %v62
    %v71 = vsub.f32 %v38, %v63
    %v72 = vsub.f32 %v39, %v64
    %v73 = vsub.f32 %v40, %v65
    %v74 = vmul.f32 %v66, %v66
    %v75 = vmul.f32 %v67, %v67
    %v76 = vmul.f32 %v68, %v68
    %v77 = vmul.f32 %v69, %v69
    %v78 = vmul.f32 %v70, %v70
    %v79 = vmul.f32 %v71, %v71
    %v80 = vmul.f32 %v72, %v72
    %v81 = vmul.f32 %v73, %v73
    %82 = vadd.xlane.f32.xlu0 %v74
    %v83 = vpop.xlane.xlu0 %82
    %84 = vadd.xlane.f32.xlu0 %v75
    %v85 = vpop.xlane.xlu0 %84
    %86 = vadd.xlane.f32.xlu0 %v76
    %v87 = vpop.xlane.xlu0 %86
    %88 = vadd.xlane.f32.xlu0 %v77
    %v89 = vpop.xlane.xlu0 %88
    %90 = vadd.xlane.f32.xlu0 %v78
    %v91 = vpop.xlane.xlu0 %90
    %92 = vadd.xlane.f32.xlu0 %v79
    %v93 = vpop.xlane.xlu0 %92
    %94 = vadd.xlane.f32.xlu0 %v80
    %v95 = vpop.xlane.xlu0 %94
    %96 = vadd.xlane.f32.xlu0 %v81
    %v97 = vpop.xlane.xlu0 %96
    %v98 = vmul.f32 %v83, %v57
    %v99 = vmul.f32 %v85, %v57
    %v100 = vmul.f32 %v87, %v57
    %v101 = vmul.f32 %v89, %v57
    %v102 = vmul.f32 %v91, %v57
    %v103 = vmul.f32 %v93, %v57
    %v104 = vmul.f32 %v95, %v57
    %v105 = vmul.f32 %v97, %v57
    %v106 = vadd.f32 %v98, 1e-06
    %v107 = vadd.f32 %v99, 1e-06
    %v108 = vadd.f32 %v100, 1e-06
    %v109 = vadd.f32 %v101, 1e-06
    %v110 = vadd.f32 %v102, 1e-06
    %v111 = vadd.f32 %v103, 1e-06
    %v112 = vadd.f32 %v104, 1e-06
    %v113 = vadd.f32 %v105, 1e-06
    %v114 = vrsqrt.pop %v106
    %v115 = vrsqrt.pop %v107
    %v116 = vrsqrt.pop %v108
    %v117 = vrsqrt.pop %v109
    %v118 = vrsqrt.pop %v110
    %v119 = vrsqrt.pop %v111
    %v120 = vrsqrt.pop %v112
    %v121 = vrsqrt.pop %v113
    %v122 = vmul.f32 %v66, %v114
    %v123 = vmul.f32 %v67, %v115
    %v124 = vmul.f32 %v68, %v116
    %v125 = vmul.f32 %v69, %v117
    %v126 = vmul.f32 %v70, %v118
    %v127 = vmul.f32 %v71, %v119
    %v128 = vmul.f32 %v72, %v120
    %v129 = vmul.f32 %v73, %v121
    %v130 = vld [vmem:[%s1] sm:$0x1]
    %v132 = vlaneseq
    %v133 = vshrl.u32 %v132, 7
    %v134 = vsub.s32 0, %v133
    %v135 = vrot.slane %v130, %v134
    %v137 = vmul.f32 %v122, %v135
    %v138 = vmul.f32 %v123, %v135
    %v139 = vmul.f32 %v124, %v135
    %v140 = vmul.f32 %v125, %v135
    %v141 = vmul.f32 %v126, %v135
    %v142 = vmul.f32 %v127, %v135
    %v143 = vmul.f32 %v128, %v135
    %v144 = vmul.f32 %v129, %v135
    %v145 = vld [vmem:[%s2] sm:$0x1]
    %v147 = vlaneseq
    %v148 = vshrl.u32 %v147, 7
    %v149 = vsub.s32 0, %v148
    %v150 = vrot.slane %v145, %v149
    %v152 = vadd.f32 %v137, %v150
    %v153 = vadd.f32 %v138, %v150
    %v154 = vadd.f32 %v139, %v150
    %v155 = vadd.f32 %v140, %v150
    %v156 = vadd.f32 %v141, %v150
    %v157 = vadd.f32 %v142, %v150
    %v158 = vadd.f32 %v143, %v150
    %v159 = vadd.f32 %v144, %v150
    %v160 = vpack.c.bf16 %v153, %v152
    %v161 = vpack.c.bf16 %v155, %v154
    %v162 = vpack.c.bf16 %v157, %v156
    %v163 = vpack.c.bf16 %v159, %v158
    %164 = vst [vmem:[#allocation2] sm:$0xff] %v160
    %165 = vst [vmem:[#allocation2 + $0x8] sm:$0xff] %v161
    %166 = vst [vmem:[#allocation2 + $0x10] sm:$0xff] %v162
    %167 = vst [vmem:[#allocation2 + $0x18] sm:$0xff] %v163
  $region25: #{vit_forward.10} parent=0 // pred_fallthru
    _
  %v168 = vld [vmem:[#allocation2] sm:$0xff]
  %v169 = vld [vmem:[#allocation2 + $0x8] sm:$0xff]
  %v170 = vld [vmem:[#allocation2 + $0x10] sm:$0xff]
  %v171 = vld [vmem:[#allocation2 + $0x18] sm:$0xff]
  %v172 = vld [vmem:[%s3] sm:$0xff]
  %v173 = vld [vmem:[%s3 + $0x8] sm:$0xf]
  %v174 = vld [vmem:[%s3 + $0xc] sm:$0xff]
  %v175 = vld [vmem:[%s3 + $0x14] sm:$0xf]
  %v176 = vld [vmem:[%s3 + $0x18] sm:$0xff]
  %v177 = vld [vmem:[%s3 + $0x20] sm:$0xf]
  %v178 = vld [vmem:[%s3 + $0x24] sm:$0xff]
  %v179 = vld [vmem:[%s3 + $0x2c] sm:$0xf]
  %v180 = vld [vmem:[%s3 + $0x30] sm:$0xff]
  %v181 = vld [vmem:[%s3 + $0x38] sm:$0xf]
  %v182 = vld [vmem:[%s3 + $0x3c] sm:$0xff]
  %v183 = vld [vmem:[%s3 + $0x44] sm:$0xf]
  %v184 = vld [vmem:[%s3 + $0x48] sm:$0xff]
  %v185 = vld [vmem:[%s3 + $0x50] sm:$0xf]
  %v186 = vld [vmem:[%s3 + $0x54] sm:$0xff]
  %v187 = vld [vmem:[%s3 + $0x5c] sm:$0xf]
  %v188 = vld [vmem:[%s3 + $0x60] sm:$0xff]
  %v189 = vld [vmem:[%s3 + $0x68] sm:$0xf]
  %v190 = vld [vmem:[%s3 + $0x6c] sm:$0xff]
  %v191 = vld [vmem:[%s3 + $0x74] sm:$0xf]
  %v192 = vld [vmem:[%s3 + $0x78] sm:$0xff]
  %v193 = vld [vmem:[%s3 + $0x80] sm:$0xf]
  %v194 = vld [vmem:[%s3 + $0x84] sm:$0xff]
  %v195 = vld [vmem:[%s3 + $0x8c] sm:$0xf]
  %v196 = vld [vmem:[%s3 + $0x90] sm:$0xff]
  %v197 = vld [vmem:[%s3 + $0x98] sm:$0xf]
  %v198 = vld [vmem:[%s3 + $0x9c] sm:$0xff]
  %v199 = vld [vmem:[%s3 + $0xa4] sm:$0xf]
  %v200 = vld [vmem:[%s3 + $0xa8] sm:$0xff]
  %v201 = vld [vmem:[%s3 + $0xb0] sm:$0xf]
  %v202 = vld [vmem:[%s3 + $0xb4] sm:$0xff]
  %v203 = vld [vmem:[%s3 + $0xbc] sm:$0xf]
  %v204 = vld [vmem:[%s4] sm:$0x7]
  %v206 = vlaneseq
  %v207 = vshrl.u32 %v206, 7
  %v208 = vsub.s32 0, %v207
  %v209 = vrot.slane %v204, %v208
  %v210 = vlaneseq
  %v211 = vshrl.u32 %v210, 7
  %v212 = vsub.s32 1, %v211
  %v213 = vrot.slane %v204, %v212
  %v214 = vlaneseq
  %v215 = vshrl.u32 %v214, 7
  %v216 = vsub.s32 2, %v215
  %v217 = vrot.slane %v204, %v216
  %v253 = vunpack.c.l.b16 %v172
  %v254 = vunpack.c.h.b16 %v172
  %v255 = vunpack.c.l.b16 %v173
  %v256 = vunpack.c.l.b16 %v174
  %v257 = vunpack.c.h.b16 %v174
  %v258 = vunpack.c.l.b16 %v175
  %v259 = vunpack.c.l.b16 %v176
  %v260 = vunpack.c.h.b16 %v176
  %v261 = vunpack.c.l.b16 %v177
  %v262 = vunpack.c.l.b16 %v178
  %v263 = vunpack.c.h.b16 %v178
  %v264 = vunpack.c.l.b16 %v179
  %v265 = vunpack.c.l.b16 %v180
  %v266 = vunpack.c.h.b16 %v180
  %v267 = vunpack.c.l.b16 %v181
  %v268 = vunpack.c.l.b16 %v182
  %v269 = vunpack.c.h.b16 %v182
  %v270 = vunpack.c.l.b16 %v183
  %v271 = vunpack.c.l.b16 %v184
  %v272 = vunpack.c.h.b16 %v184
  %v273 = vunpack.c.l.b16 %v185
  %v274 = vunpack.c.l.b16 %v186
  %v275 = vunpack.c.h.b16 %v186
  %v276 = vunpack.c.l.b16 %v187
  %v277 = vunpack.c.l.b16 %v188
  %v278 = vunpack.c.h.b16 %v188
  %v279 = vunpack.c.l.b16 %v189
  %v280 = vunpack.c.l.b16 %v190
  %v281 = vunpack.c.h.b16 %v190
  %v282 = vunpack.c.l.b16 %v191
  %v283 = vunpack.c.l.b16 %v192
  %v284 = vunpack.c.h.b16 %v192
  %v285 = vunpack.c.l.b16 %v193
  %v286 = vunpack.c.l.b16 %v194
  %v287 = vunpack.c.h.b16 %v194
  %v288 = vunpack.c.l.b16 %v195
  %v289 = vunpack.c.l.b16 %v196
  %v290 = vunpack.c.h.b16 %v196
  %v291 = vunpack.c.l.b16 %v197
  %v292 = vunpack.c.l.b16 %v198
  %v293 = vunpack.c.h.b16 %v198
  %v294 = vunpack.c.l.b16 %v199
  %v295 = vunpack.c.l.b16 %v200
  %v296 = vunpack.c.h.b16 %v200
  %v297 = vunpack.c.l.b16 %v201
  %v298 = vunpack.c.l.b16 %v202
  %v299 = vunpack.c.h.b16 %v202
  %v300 = vunpack.c.l.b16 %v203
  %v301 = vpack.c.b16 %v256, %v253
  %v302 = vpack.c.b16 %v257, %v254
  %v303 = vpack.c.b16 %v258, %v255
  %v304 = vpack.c.b16 %v262, %v259
  %v305 = vpack.c.b16 %v263, %v260
  %v306 = vpack.c.b16 %v264, %v261
  %v307 = vpack.c.b16 %v268, %v265
  %v308 = vpack.c.b16 %v269, %v266
  %v309 = vpack.c.b16 %v270, %v267
  %v310 = vpack.c.b16 %v274, %v271
  %v311 = vpack.c.b16 %v275, %v272
  %v312 = vpack.c.b16 %v276, %v273
  %v313 = vpack.c.b16 %v280, %v277
  %v314 = vpack.c.b16 %v281, %v278
  %v315 = vpack.c.b16 %v282, %v279
  %v316 = vpack.c.b16 %v286, %v283
  %v317 = vpack.c.b16 %v287, %v284
  %v318 = vpack.c.b16 %v288, %v285
  %v319 = vpack.c.b16 %v292, %v289
  %v320 = vpack.c.b16 %v293, %v290
  %v321 = vpack.c.b16 %v294, %v291
  %v322 = vpack.c.b16 %v298, %v295
  %v323 = vpack.c.b16 %v299, %v296
  %v324 = vpack.c.b16 %v300, %v297
  %349 = vmatprep.subr.bf16.mxu0 %v302
  %350 = vmatpush1.bf16.msra.mxu0 %v301
  %351 = vmatprep.subr.bf16.mxu0 %v305
  %352 = vmatpush1.bf16.msra.mxu0 %v304
  %353 = vmatprep.subr.bf16.mxu0 %v308
  %354 = vmatpush1.bf16.msra.mxu0 %v307
  %355 = vmatprep.subr.bf16.mxu0 %v311
  %356 = vmatpush1.bf16.msra.mxu0 %v310
  %357 = vmatprep.subr.bf16.mxu0 %v314
  %358 = vmatpush1.bf16.msra.mxu0 %v313
  %359 = vmatprep.subr.bf16.mxu0 %v317
  %360 = vmatpush1.bf16.msra.mxu0 %v316
  %361 = vmatprep.subr.bf16.mxu0 %v320
  %362 = vmatpush1.bf16.msra.mxu0 %v319
  %363 = vmatprep.subr.bf16.mxu0 %v323
  %364 = vmatpush1.bf16.msra.mxu0 %v322
  %365 = vmatprep.subr.bf16.mxu0 0
  %366 = vmatpush1.bf16.msra.mxu0 0
  %367 = vmatprep.subr.bf16.mxu0 0
  %368 = vmatpush1.bf16.msra.mxu0 0
  %369 = vmatprep.subr.bf16.mxu0 0
  %370 = vmatpush1.bf16.msra.mxu0 0
  %371 = vmatprep.subr.bf16.mxu0 0
  %372 = vmatpush1.bf16.msra.mxu0 0
  %373 = vmatprep.subr.bf16.mxu0 0
  %374 = vmatpush1.bf16.msra.mxu0 0
  %375 = vmatprep.subr.bf16.mxu0 0
  %376 = vmatpush1.bf16.msra.mxu0 0
  %377 = vmatprep.subr.bf16.mxu0 0
  %378 = vmatpush1.bf16.msra.mxu0 0
  %379 = vmatprep.subr.bf16.mxu0 0
  %380 = vmatpush1.bf16.msra.mxu0 0
  %381 = vmatprep.mubr.bf16.mxu0 0
  %382 = vmatmul.mubr.bf16.gmra.mrb[0].mxu0 %v168
  %v383 = vpop.f32.mrb[0].mxu0
  %v384 = vadd.f32 %v209, %v383
  %v385 = vpop.f32.mrb[0].mxu0
  %v386 = vadd.f32 %v213, %v385
  %v387 = vpop.f32.mrb[0].mxu0
  %v388 = vadd.f32 %v209, %v387
  %v389 = vpop.f32.mrb[0].mxu0
  %v390 = vadd.f32 %v213, %v389
  %391 = vmatprep.mubr.bf16.mxu0 0
  %392 = vmatmul.mubr.bf16.gmra.mrb[0].mxu0 %v169
  %v393 = vpop.f32.mrb[0].mxu0
  %v394 = vadd.f32 %v209, %v393
  %v395 = vpop.f32.mrb[0].mxu0
  %v396 = vadd.f32 %v213, %v395
  %v397 = vpop.f32.mrb[0].mxu0
  %v398 = vadd.f32 %v209, %v397
  %v399 = vpop.f32.mrb[0].mxu0
  %v400 = vadd.f32 %v213, %v399
  %401 = vmatprep.mubr.bf16.mxu0 0
  %402 = vmatmul.mubr.bf16.gmra.mrb[0].mxu0 %v170
  %v403 = vpop.f32.mrb[0].mxu0
  %v404 = vadd.f32 %v209, %v403
  %v405 = vpop.f32.mrb[0].mxu0
  %v406 = vadd.f32 %v213, %v405
  %v407 = vpop.f32.mrb[0].mxu0
  %v408 = vadd.f32 %v209, %v407
  %v409 = vpop.f32.mrb[0].mxu0
  %v410 = vadd.f32 %v213, %v409
  %411 = vmatprep.mubr.bf16.mxu0 0
  %412 = vmatmul.mubr.bf16.gmra.mrb[0].mxu0 %v171
  %v413 = vpop.f32.mrb[0].mxu0
  %v414 = vadd.f32 %v209, %v413
  %v415 = vpop.f32.mrb[0].mxu0
  %v416 = vadd.f32 %v213, %v415
  %v417 = vpop.f32.mrb[0].mxu0
  %v418 = vadd.f32 %v209, %v417
  %v419 = vpop.f32.mrb[0].mxu0
  %v420 = vadd.f32 %v213, %v419
  %421 = vdwg.mxu0
  %422 = vmatprep.subr.bf16.mxu0 0
  %423 = vmatpush1.bf16.msra.mxu0 %v303
  %424 = vmatprep.subr.bf16.mxu0 0
  %425 = vmatpush1.bf16.msra.mxu0 %v306
  %426 = vmatprep.subr.bf16.mxu0 0
  %427 = vmatpush1.bf16.msra.mxu0 %v309
  %428 = vmatprep.subr.bf16.mxu0 0
  %429 = vmatpush1.bf16.msra.mxu0 %v312
  %430 = vmatprep.subr.bf16.mxu0 0
  %431 = vmatpush1.bf16.msra.mxu0 %v315
  %432 = vmatprep.subr.bf16.mxu0 0
  %433 = vmatpush1.bf16.msra.mxu0 %v318
  %434 = vmatprep.subr.bf16.mxu0 0
  %435 = vmatpush1.bf16.msra.mxu0 %v321
  %436 = vmatprep.subr.bf16.mxu0 0
  %437 = vmatpush1.bf16.msra.mxu0 %v324
  %438 = vmatprep.subr.bf16.mxu0 0
  %439 = vmatpush1.bf16.msra.mxu0 0
  %440 = vmatprep.subr.bf16.mxu0 0
  %441 = vmatpush1.bf16.msra.mxu0 0
  %442 = vmatprep.subr.bf16.mxu0 0
  %443 = vmatpush1.bf16.msra.mxu0 0
  %444 = vmatprep.subr.bf16.mxu0 0
  %445 = vmatpush1.bf16.msra.mxu0 0
  %446 = vmatprep.subr.bf16.mxu0 0
  %447 = vmatpush1.bf16.msra.mxu0 0
  %448 = vmatprep.subr.bf16.mxu0 0
  %449 = vmatpush1.bf16.msra.mxu0 0
  %450 = vmatprep.subr.bf16.mxu0 0
  %451 = vmatpush1.bf16.msra.mxu0 0
  %452 = vmatprep.subr.bf16.mxu0 0
  %453 = vmatpush1.bf16.msra.mxu0 0
  %454 = vmatprep.mubr.bf16.mxu0 0
  %455 = vmatmul.mubr.bf16.gmra.mrb[0].mxu0 %v168
  %v456 = vpop.f32.mrb[0].mxu0
  %v457 = vadd.f32 %v217, %v456
  %v458 = vpop.f32.mrb[0].mxu0
  %v459 = vpop.f32.mrb[0].mxu0
  %v460 = vadd.f32 %v217, %v459
  %v461 = vpop.f32.mrb[0].mxu0
  %462 = vmatprep.mubr.bf16.mxu0 0
  %463 = vmatmul.mubr.bf16.gmra.mrb[0].mxu0 %v169
  %v464 = vpop.f32.mrb[0].mxu0
  %v465 = vadd.f32 %v217, %v464
  %v466 = vpop.f32.mrb[0].mxu0
  %v467 = vpop.f32.mrb[0].mxu0
  %v468 = vadd.f32 %v217, %v467
  %v469 = vpop.f32.mrb[0].mxu0
  %470 = vmatprep.mubr.bf16.mxu0 0
  %471 = vmatmul.mubr.bf16.gmra.mrb[0].mxu0 %v170
  %v472 = vpop.f32.mrb[0].mxu0
  %v473 = vadd.f32 %v217, %v472
  %v474 = vpop.f32.mrb[0].mxu0
  %v475 = vpop.f32.mrb[0].mxu0
  %v476 = vadd.f32 %v217, %v475
  %v477 = vpop.f32.mrb[0].mxu0
  %478 = vmatprep.mubr.bf16.mxu0 0
  %479 = vmatmul.mubr.bf16.gmra.mrb[0].mxu0 %v171
  %v480 = vpop.f32.mrb[0].mxu0
  %v481 = vadd.f32 %v217, %v480
  %v482 = vpop.f32.mrb[0].mxu0
  %v483 = vpop.f32.mrb[0].mxu0
  %v484 = vadd.f32 %v217, %v483
  %v485 = vpop.f32.mrb[0].mxu0
  %486 = vdwg.mxu0
  %v487 = vpack.c.bf16 %v388, %v384
  %v488 = vpack.c.bf16 %v390, %v386
  %v489 = vpack.c.bf16 %v460, %v457
  %v490 = vpack.c.bf16 %v398, %v394
  %v491 = vpack.c.bf16 %v400, %v396
  %v492 = vpack.c.bf16 %v468, %v465
  %v493 = vpack.c.bf16 %v408, %v404
  %v494 = vpack.c.bf16 %v410, %v406
  %v495 = vpack.c.bf16 %v476, %v473
  %v496 = vpack.c.bf16 %v418, %v414
  %v497 = vpack.c.bf16 %v420, %v416
  %v498 = vpack.c.bf16 %v484, %v481
  %v511 = vunpack.c.l.b16 %v487
  %v512 = vunpack.c.l.b16 %v488
  %v513 = vunpack.c.l.b16 %v489
  %v514 = vunpack.c.h.b16 %v487
  %v515 = vunpack.c.h.b16 %v488
  %v516 = vunpack.c.h.b16 %v489
  %v517 = vunpack.c.l.b16 %v490
  %v518 = vunpack.c.l.b16 %v491
  %v519 = vunpack.c.l.b16 %v492
  %v520 = vunpack.c.h.b16 %v490
  %v521 = vunpack.c.h.b16 %v491
  %v522 = vunpack.c.h.b16 %v492
  %v523 = vunpack.c.l.b16 %v493
  %v524 = vunpack.c.l.b16 %v494
  %v525 = vunpack.c.l.b16 %v495
  %v526 = vunpack.c.h.b16 %v493
  %v527 = vunpack.c.h.b16 %v494
  %v528 = vunpack.c.h.b16 %v495
  %v529 = vunpack.c.l.b16 %v496
  %v530 = vunpack.c.l.b16 %v497
  %v531 = vunpack.c.l.b16 %v498
  %v532 = vunpack.c.h.b16 %v496
  %v533 = vunpack.c.h.b16 %v497
  %v534 = vunpack.c.h.b16 %v498
  %v535 = vpack.c.b16 %v512, %v511
  %v536 = vpack.c.b16 %v513, %v513
  %v537 = vpack.c.b16 %v515, %v514
  %v538 = vpack.c.b16 %v516, %v516
  %v539 = vpack.c.b16 %v518, %v517
  %v540 = vpack.c.b16 %v519, %v519
  %v541 = vpack.c.b16 %v521, %v520
  %v542 = vpack.c.b16 %v522, %v522
  %v543 = vpack.c.b16 %v524, %v523
  %v544 = vpack.c.b16 %v525, %v525
  %v545 = vpack.c.b16 %v527, %v526
  %v546 = vpack.c.b16 %v528, %v528
  %v547 = vpack.c.b16 %v530, %v529
  %v548 = vpack.c.b16 %v531, %v531
  %v549 = vpack.c.b16 %v533, %v532
  %v550 = vpack.c.b16 %v534, %v534
  %567 = vst [vmem:[%s5] sm:$0xff] %v535
  %568 = vst [vmem:[%s5 + $0x8] sm:$0xf] %v536
  %569 = vst [vmem:[%s5 + $0xc] sm:$0xff] %v537
  %570 = vst [vmem:[%s5 + $0x14] sm:$0xf] %v538
  %571 = vst [vmem:[%s5 + $0x18] sm:$0xff] %v539
  %572 = vst [vmem:[%s5 + $0x20] sm:$0xf] %v540
  %573 = vst [vmem:[%s5 + $0x24] sm:$0xff] %v541
  %574 = vst [vmem:[%s5 + $0x2c] sm:$0xf] %v542
  %575 = vst [vmem:[%s5 + $0x30] sm:$0xff] %v543
  %576 = vst [vmem:[%s5 + $0x38] sm:$0xf] %v544
  %577 = vst [vmem:[%s5 + $0x3c] sm:$0xff] %v545
  %578 = vst [vmem:[%s5 + $0x44] sm:$0xf] %v546
  %579 = vst [vmem:[%s5 + $0x48] sm:$0xff] %v547
  %580 = vst [vmem:[%s5 + $0x50] sm:$0xf] %v548
  %581 = vst [vmem:[%s5 + $0x54] sm:$0xff] %v549
  %582 = vst [vmem:[%s5 + $0x5c] sm:$0xf] %v550
  // Predicated region
  $region26: #{vit_forward.10} parent=0 // pred_check
    _
  $region27: #{vit_forward.10} parent=0 // pred_check_branch
    %584 = sbr.rel (0) target = $region29
  $region28: #{vit_forward.10} parent=0 // pred_region
    _
  $region29: #{vit_forward.10} parent=0 // pred_fallthru
    _
  // Predicated region
  $region30: #{vit_forward.10} parent=0 // pred_check
    _
  $region31: #{vit_forward.10} parent=0 // pred_check_branch
    %586 = sbr.rel (0) target = $region33
  $region32: #{vit_forward.10} parent=0 // pred_region
    _
  $region33: #{vit_forward.10} parent=0 // pred_fallthru
    _

// kernel: vit_forward.12
$region0: #{vit_forward.12}
  #allocation0 [shape = 'u32[]', space=smem, size = 0x4, offset = 0x4, fixed_abs, tag = 'smem constant byte address 0x4 - core index']
  #allocation1 [shape = 'u32[144,128]{1,0:T(1,128)}', space=vmem, size = 0x12000, scoped, tag = 'internal scratch']
  #allocation2 [shape = 'bf16[64,128]{1,0:T(16,128)(2,1)}', space=vmem, size = 0x4000, scoped, tag = 'scratch operand']
  %s0 = inlined_call_operand.vmem [shape: bf16[64,128], index: 0, kind: input, shape index: {}]
  %s1 = inlined_call_operand.vmem [shape: f32[1,128], index: 1, kind: input, shape index: {}]
  %s2 = inlined_call_operand.vmem [shape: f32[1,128], index: 2, kind: input, shape index: {}]
  %s3 = inlined_call_operand.vmem [shape: bf16[128,512], index: 3, kind: input, shape index: {}]
  %s4 = inlined_call_operand.vmem [shape: f32[1,512], index: 4, kind: input, shape index: {}]
  %s5 = inlined_call_operand.vmem [shape: bf16[64,512], index: 5, kind: output, shape index: {}]
  %s6 = sld [smem:[#allocation0]]
  $region34: #{vit_forward.12} parent=0
    _
  %s8 = ssub.s32 1, %s6
  %s9 = scalar_select 0, %s8, %s6
  // Predicated region
  $region2: #{vit_forward.12} parent=0 // pred_check
    _
  $region3: #{vit_forward.12} parent=0 // pred_check_branch
    %11 = sbr.rel (0) target = $region5
  $region4: #{vit_forward.12} parent=0 // pred_region
    _
  $region5: #{vit_forward.12} parent=0 // pred_fallthru
    _
  // Predicated region
  $region6: #{vit_forward.12} parent=0 // pred_check
    _
  $region7: #{vit_forward.12} parent=0 // pred_check_branch
    %13 = sbr.rel (0) target = $region9
  $region8: #{vit_forward.12} parent=0 // pred_region
    _
  $region9: #{vit_forward.12} parent=0 // pred_fallthru
    _
  // Predicated region
  $region10: #{vit_forward.12} parent=0 // pred_check
    _
  $region11: #{vit_forward.12} parent=0 // pred_check_branch
    %15 = sbr.rel (0) target = $region13
  $region12: #{vit_forward.12} parent=0 // pred_region
    _
  $region13: #{vit_forward.12} parent=0 // pred_fallthru
    _
  // Predicated region
  $region14: #{vit_forward.12} parent=0 // pred_check
    _
  $region15: #{vit_forward.12} parent=0 // pred_check_branch
    %17 = sbr.rel (0) target = $region17
  $region16: #{vit_forward.12} parent=0 // pred_region
    _
  $region17: #{vit_forward.12} parent=0 // pred_fallthru
    _
  // Predicated region
  $region18: #{vit_forward.12} parent=0 // pred_check
    _
  $region19: #{vit_forward.12} parent=0 // pred_check_branch
    %19 = sbr.rel (0) target = $region21
  $region20: #{vit_forward.12} parent=0 // pred_region
    _
  $region21: #{vit_forward.12} parent=0 // pred_fallthru
    _
  %p21 = scmp.eq.s32.totalorder 0, 0
  // Predicated region
  $region22: #{vit_forward.12} parent=0 // pred_check
    %p22 = pneg %p21
  $region23: #{vit_forward.12} parent=0 // pred_check_branch
    %24 = sbr.rel (%p22) target = $region25
  $region24: #{vit_forward.12} parent=0 // pred_region
    %v25 = vld [vmem:[%s0] sm:$0xf]
    %v26 = vld [vmem:[%s0 + $0x4] sm:$0xf]
    %v27 = vld [vmem:[%s0 + $0x8] sm:$0xf]
    %v28 = vld [vmem:[%s0 + $0xc] sm:$0xf]
    %v29 = vld [vmem:[%s0 + $0x10] sm:$0xf]
    %v30 = vld [vmem:[%s0 + $0x14] sm:$0xf]
    %v31 = vld [vmem:[%s0 + $0x18] sm:$0xf]
    %v32 = vld [vmem:[%s0 + $0x1c] sm:$0xf]
    %v33 = vunpack.c.l.bf16 %v25
    %v34 = vunpack.c.l.bf16 %v26
    %v35 = vunpack.c.l.bf16 %v27
    %v36 = vunpack.c.l.bf16 %v28
    %v37 = vunpack.c.l.bf16 %v29
    %v38 = vunpack.c.l.bf16 %v30
    %v39 = vunpack.c.l.bf16 %v31
    %v40 = vunpack.c.l.bf16 %v32
    %41 = vadd.xlane.f32.xlu0 %v33
    %v42 = vpop.xlane.xlu0 %41
    %43 = vadd.xlane.f32.xlu0 %v34
    %v44 = vpop.xlane.xlu0 %43
    %45 = vadd.xlane.f32.xlu0 %v35
    %v46 = vpop.xlane.xlu0 %45
    %47 = vadd.xlane.f32.xlu0 %v36
    %v48 = vpop.xlane.xlu0 %47
    %49 = vadd.xlane.f32.xlu0 %v37
    %v50 = vpop.xlane.xlu0 %49
    %51 = vadd.xlane.f32.xlu0 %v38
    %v52 = vpop.xlane.xlu0 %51
    %53 = vadd.xlane.f32.xlu0 %v39
    %v54 = vpop.xlane.xlu0 %53
    %55 = vadd.xlane.f32.xlu0 %v40
    %v56 = vpop.xlane.xlu0 %55
    %v57 = vrcp.pop 128.0
    %v58 = vmul.f32 %v42, %v57
    %v59 = vmul.f32 %v44, %v57
    %v60 = vmul.f32 %v46, %v57
    %v61 = vmul.f32 %v48, %v57
    %v62 = vmul.f32 %v50, %v57
    %v63 = vmul.f32 %v52, %v57
    %v64 = vmul.f32 %v54, %v57
    %v65 = vmul.f32 %v56, %v57
    %v66 = vsub.f32 %v33, %v58
    %v67 = vsub.f32 %v34, %v59
    %v68 = vsub.f32 %v35, %v60
    %v69 = vsub.f32 %v36, %v61
    %v70 = vsub.f32 %v37, %v62
    %v71 = vsub.f32 %v38, %v63
    %v72 = vsub.f32 %v39, %v64
    %v73 = vsub.f32 %v40, %v65
    %v74 = vmul.f32 %v66, %v66
    %v75 = vmul.f32 %v67, %v67
    %v76 = vmul.f32 %v68, %v68
    %v77 = vmul.f32 %v69, %v69
    %v78 = vmul.f32 %v70, %v70
    %v79 = vmul.f32 %v71, %v71
    %v80 = vmul.f32 %v72, %v72
    %v81 = vmul.f32 %v73, %v73
    %82 = vadd.xlane.f32.xlu0 %v74
    %v83 = vpop.xlane.xlu0 %82
    %84 = vadd.xlane.f32.xlu0 %v75
    %v85 = vpop.xlane.xlu0 %84
    %86 = vadd.xlane.f32.xlu0 %v76
    %v87 = vpop.xlane.xlu0 %86
    %88 = vadd.xlane.f32.xlu0 %v77
    %v89 = vpop.xlane.xlu0 %88
    %90 = vadd.xlane.f32.xlu0 %v78
    %v91 = vpop.xlane.xlu0 %90
    %92 = vadd.xlane.f32.xlu0 %v79
    %v93 = vpop.xlane.xlu0 %92
    %94 = vadd.xlane.f32.xlu0 %v80
    %v95 = vpop.xlane.xlu0 %94
    %96 = vadd.xlane.f32.xlu0 %v81
    %v97 = vpop.xlane.xlu0 %96
    %v98 = vmul.f32 %v83, %v57
    %v99 = vmul.f32 %v85, %v57
    %v100 = vmul.f32 %v87, %v57
    %v101 = vmul.f32 %v89, %v57
    %v102 = vmul.f32 %v91, %v57
    %v103 = vmul.f32 %v93, %v57
    %v104 = vmul.f32 %v95, %v57
    %v105 = vmul.f32 %v97, %v57
    %v106 = vadd.f32 %v98, 1e-06
    %v107 = vadd.f32 %v99, 1e-06
    %v108 = vadd.f32 %v100, 1e-06
    %v109 = vadd.f32 %v101, 1e-06
    %v110 = vadd.f32 %v102, 1e-06
    %v111 = vadd.f32 %v103, 1e-06
    %v112 = vadd.f32 %v104, 1e-06
    %v113 = vadd.f32 %v105, 1e-06
    %v114 = vrsqrt.pop %v106
    %v115 = vrsqrt.pop %v107
    %v116 = vrsqrt.pop %v108
    %v117 = vrsqrt.pop %v109
    %v118 = vrsqrt.pop %v110
    %v119 = vrsqrt.pop %v111
    %v120 = vrsqrt.pop %v112
    %v121 = vrsqrt.pop %v113
    %v122 = vmul.f32 %v66, %v114
    %v123 = vmul.f32 %v67, %v115
    %v124 = vmul.f32 %v68, %v116
    %v125 = vmul.f32 %v69, %v117
    %v126 = vmul.f32 %v70, %v118
    %v127 = vmul.f32 %v71, %v119
    %v128 = vmul.f32 %v72, %v120
    %v129 = vmul.f32 %v73, %v121
    %v130 = vld [vmem:[%s1] sm:$0x1]
    %v132 = vlaneseq
    %v133 = vshrl.u32 %v132, 7
    %v134 = vsub.s32 0, %v133
    %v135 = vrot.slane %v130, %v134
    %v137 = vmul.f32 %v122, %v135
    %v138 = vmul.f32 %v123, %v135
    %v139 = vmul.f32 %v124, %v135
    %v140 = vmul.f32 %v125, %v135
    %v141 = vmul.f32 %v126, %v135
    %v142 = vmul.f32 %v127, %v135
    %v143 = vmul.f32 %v128, %v135
    %v144 = vmul.f32 %v129, %v135
    %v145 = vld [vmem:[%s2] sm:$0x1]
    %v147 = vlaneseq
    %v148 = vshrl.u32 %v147, 7
    %v149 = vsub.s32 0, %v148
    %v150 = vrot.slane %v145, %v149
    %v152 = vadd.f32 %v137, %v150
    %v153 = vadd.f32 %v138, %v150
    %v154 = vadd.f32 %v139, %v150
    %v155 = vadd.f32 %v140, %v150
    %v156 = vadd.f32 %v141, %v150
    %v157 = vadd.f32 %v142, %v150
    %v158 = vadd.f32 %v143, %v150
    %v159 = vadd.f32 %v144, %v150
    %v160 = vpack.c.bf16 %v153, %v152
    %v161 = vpack.c.bf16 %v155, %v154
    %v162 = vpack.c.bf16 %v157, %v156
    %v163 = vpack.c.bf16 %v159, %v158
    %164 = vst [vmem:[#allocation2] sm:$0xff] %v160
    %165 = vst [vmem:[#allocation2 + $0x8] sm:$0xff] %v161
    %166 = vst [vmem:[#allocation2 + $0x10] sm:$0xff] %v162
    %167 = vst [vmem:[#allocation2 + $0x18] sm:$0xff] %v163
  $region25: #{vit_forward.12} parent=0 // pred_fallthru
    _
  %v168 = vld [vmem:[#allocation2] sm:$0xff]
  %v169 = vld [vmem:[#allocation2 + $0x8] sm:$0xff]
  %v170 = vld [vmem:[#allocation2 + $0x10] sm:$0xff]
  %v171 = vld [vmem:[#allocation2 + $0x18] sm:$0xff]
  %v172 = vld [vmem:[%s3] sm:$0xff]
  %v173 = vld [vmem:[%s3 + $0x8] sm:$0xff]
  %v174 = vld [vmem:[%s3 + $0x10] sm:$0xff]
  %v175 = vld [vmem:[%s3 + $0x18] sm:$0xff]
  %v176 = vld [vmem:[%s3 + $0x20] sm:$0xff]
  %v177 = vld [vmem:[%s3 + $0x28] sm:$0xff]
  %v178 = vld [vmem:[%s3 + $0x30] sm:$0xff]
  %v179 = vld [vmem:[%s3 + $0x38] sm:$0xff]
  %v180 = vld [vmem:[%s3 + $0x40] sm:$0xff]
  %v181 = vld [vmem:[%s3 + $0x48] sm:$0xff]
  %v182 = vld [vmem:[%s3 + $0x50] sm:$0xff]
  %v183 = vld [vmem:[%s3 + $0x58] sm:$0xff]
  %v184 = vld [vmem:[%s3 + $0x60] sm:$0xff]
  %v185 = vld [vmem:[%s3 + $0x68] sm:$0xff]
  %v186 = vld [vmem:[%s3 + $0x70] sm:$0xff]
  %v187 = vld [vmem:[%s3 + $0x78] sm:$0xff]
  %v188 = vld [vmem:[%s3 + $0x80] sm:$0xff]
  %v189 = vld [vmem:[%s3 + $0x88] sm:$0xff]
  %v190 = vld [vmem:[%s3 + $0x90] sm:$0xff]
  %v191 = vld [vmem:[%s3 + $0x98] sm:$0xff]
  %v192 = vld [vmem:[%s3 + $0xa0] sm:$0xff]
  %v193 = vld [vmem:[%s3 + $0xa8] sm:$0xff]
  %v194 = vld [vmem:[%s3 + $0xb0] sm:$0xff]
  %v195 = vld [vmem:[%s3 + $0xb8] sm:$0xff]
  %v196 = vld [vmem:[%s3 + $0xc0] sm:$0xff]
  %v197 = vld [vmem:[%s3 + $0xc8] sm:$0xff]
  %v198 = vld [vmem:[%s3 + $0xd0] sm:$0xff]
  %v199 = vld [vmem:[%s3 + $0xd8] sm:$0xff]
  %v200 = vld [vmem:[%s3 + $0xe0] sm:$0xff]
  %v201 = vld [vmem:[%s3 + $0xe8] sm:$0xff]
  %v202 = vld [vmem:[%s3 + $0xf0] sm:$0xff]
  %v203 = vld [vmem:[%s3 + $0xf8] sm:$0xff]
  %v204 = vld [vmem:[%s4] sm:$0xf]
  %v206 = vlaneseq
  %v207 = vshrl.u32 %v206, 7
  %v208 = vsub.s32 0, %v207
  %v209 = vrot.slane %v204, %v208
  %v210 = vlaneseq
  %v211 = vshrl.u32 %v210, 7
  %v212 = vsub.s32 1, %v211
  %v213 = vrot.slane %v204, %v212
  %v214 = vlaneseq
  %v215 = vshrl.u32 %v214, 7
  %v216 = vsub.s32 2, %v215
  %v217 = vrot.slane %v204, %v216
  %v218 = vlaneseq
  %v219 = vshrl.u32 %v218, 7
  %v220 = vsub.s32 3, %v219
  %v221 = vrot.slane %v204, %v220
  %v258 = vunpack.c.l.b16 %v172
  %v259 = vunpack.c.h.b16 %v172
  %v260 = vunpack.c.l.b16 %v173
  %v261 = vunpack.c.h.b16 %v173
  %v262 = vunpack.c.l.b16 %v174
  %v263 = vunpack.c.h.b16 %v174
  %v264 = vunpack.c.l.b16 %v175
  %v265 = vunpack.c.h.b16 %v175
  %v266 = vunpack.c.l.b16 %v176
  %v267 = vunpack.c.h.b16 %v176
  %v268 = vunpack.c.l.b16 %v177
  %v269 = vunpack.c.h.b16 %v177
  %v270 = vunpack.c.l.b16 %v178
  %v271 = vunpack.c.h.b16 %v178
  %v272 = vunpack.c.l.b16 %v179
  %v273 = vunpack.c.h.b16 %v179
  %v274 = vunpack.c.l.b16 %v180
  %v275 = vunpack.c.h.b16 %v180
  %v276 = vunpack.c.l.b16 %v181
  %v277 = vunpack.c.h.b16 %v181
  %v278 = vunpack.c.l.b16 %v182
  %v279 = vunpack.c.h.b16 %v182
  %v280 = vunpack.c.l.b16 %v183
  %v281 = vunpack.c.h.b16 %v183
  %v282 = vunpack.c.l.b16 %v184
  %v283 = vunpack.c.h.b16 %v184
  %v284 = vunpack.c.l.b16 %v185
  %v285 = vunpack.c.h.b16 %v185
  %v286 = vunpack.c.l.b16 %v186
  %v287 = vunpack.c.h.b16 %v186
  %v288 = vunpack.c.l.b16 %v187
  %v289 = vunpack.c.h.b16 %v187
  %v290 = vunpack.c.l.b16 %v188
  %v291 = vunpack.c.h.b16 %v188
  %v292 = vunpack.c.l.b16 %v189
  %v293 = vunpack.c.h.b16 %v189
  %v294 = vunpack.c.l.b16 %v190
  %v295 = vunpack.c.h.b16 %v190
  %v296 = vunpack.c.l.b16 %v191
  %v297 = vunpack.c.h.b16 %v191
  %v298 = vunpack.c.l.b16 %v192
  %v299 = vunpack.c.h.b16 %v192
  %v300 = vunpack.c.l.b16 %v193
  %v301 = vunpack.c.h.b16 %v193
  %v302 = vunpack.c.l.b16 %v194
  %v303 = vunpack.c.h.b16 %v194
  %v304 = vunpack.c.l.b16 %v195
  %v305 = vunpack.c.h.b16 %v195
  %v306 = vunpack.c.l.b16 %v196
  %v307 = vunpack.c.h.b16 %v196
  %v308 = vunpack.c.l.b16 %v197
  %v309 = vunpack.c.h.b16 %v197
  %v310 = vunpack.c.l.b16 %v198
  %v311 = vunpack.c.h.b16 %v198
  %v312 = vunpack.c.l.b16 %v199
  %v313 = vunpack.c.h.b16 %v199
  %v314 = vunpack.c.l.b16 %v200
  %v315 = vunpack.c.h.b16 %v200
  %v316 = vunpack.c.l.b16 %v201
  %v317 = vunpack.c.h.b16 %v201
  %v318 = vunpack.c.l.b16 %v202
  %v319 = vunpack.c.h.b16 %v202
  %v320 = vunpack.c.l.b16 %v203
  %v321 = vunpack.c.h.b16 %v203
  %v322 = vpack.c.b16 %v262, %v258
  %v323 = vpack.c.b16 %v263, %v259
  %v324 = vpack.c.b16 %v264, %v260
  %v325 = vpack.c.b16 %v265, %v261
  %v326 = vpack.c.b16 %v270, %v266
  %v327 = vpack.c.b16 %v271, %v267
  %v328 = vpack.c.b16 %v272, %v268
  %v329 = vpack.c.b16 %v273, %v269
  %v330 = vpack.c.b16 %v278, %v274
  %v331 = vpack.c.b16 %v279, %v275
  %v332 = vpack.c.b16 %v280, %v276
  %v333 = vpack.c.b16 %v281, %v277
  %v334 = vpack.c.b16 %v286, %v282
  %v335 = vpack.c.b16 %v287, %v283
  %v336 = vpack.c.b16 %v288, %v284
  %v337 = vpack.c.b16 %v289, %v285
  %v338 = vpack.c.b16 %v294, %v290
  %v339 = vpack.c.b16 %v295, %v291
  %v340 = vpack.c.b16 %v296, %v292
  %v341 = vpack.c.b16 %v297, %v293
  %v342 = vpack.c.b16 %v302, %v298
  %v343 = vpack.c.b16 %v303, %v299
  %v344 = vpack.c.b16 %v304, %v300
  %v345 = vpack.c.b16 %v305, %v301
  %v346 = vpack.c.b16 %v310, %v306
  %v347 = vpack.c.b16 %v311, %v307
  %v348 = vpack.c.b16 %v312, %v308
  %v349 = vpack.c.b16 %v313, %v309
  %v350 = vpack.c.b16 %v318, %v314
  %v351 = vpack.c.b16 %v319, %v315
  %v352 = vpack.c.b16 %v320, %v316
  %v353 = vpack.c.b16 %v321, %v317
  %386 = vmatprep.subr.bf16.mxu0 %v323
  %387 = vmatpush1.bf16.msra.mxu0 %v322
  %388 = vmatprep.subr.bf16.mxu0 %v327
  %389 = vmatpush1.bf16.msra.mxu0 %v326
  %390 = vmatprep.subr.bf16.mxu0 %v331
  %391 = vmatpush1.bf16.msra.mxu0 %v330
  %392 = vmatprep.subr.bf16.mxu0 %v335
  %393 = vmatpush1.bf16.msra.mxu0 %v334
  %394 = vmatprep.subr.bf16.mxu0 %v339
  %395 = vmatpush1.bf16.msra.mxu0 %v338
  %396 = vmatprep.subr.bf16.mxu0 %v343
  %397 = vmatpush1.bf16.msra.mxu0 %v342
  %398 = vmatprep.subr.bf16.mxu0 %v347
  %399 = vmatpush1.bf16.msra.mxu0 %v346
  %400 = vmatprep.subr.bf16.mxu0 %v351
  %401 = vmatpush1.bf16.msra.mxu0 %v350
  %402 = vmatprep.subr.bf16.mxu0 0
  %403 = vmatpush1.bf16.msra.mxu0 0
  %404 = vmatprep.subr.bf16.mxu0 0
  %405 = vmatpush1.bf16.msra.mxu0 0
  %406 = vmatprep.subr.bf16.mxu0 0
  %407 = vmatpush1.bf16.msra.mxu0 0
  %408 = vmatprep.subr.bf16.mxu0 0
  %409 = vmatpush1.bf16.msra.mxu0 0
  %410 = vmatprep.subr.bf16.mxu0 0
  %411 = vmatpush1.bf16.msra.mxu0 0
  %412 = vmatprep.subr.bf16.mxu0 0
  %413 = vmatpush1.bf16.msra.mxu0 0
  %414 = vmatprep.subr.bf16.mxu0 0
  %415 = vmatpush1.bf16.msra.mxu0 0
  %416 = vmatprep.subr.bf16.mxu0 0
  %417 = vmatpush1.bf16.msra.mxu0 0
  %418 = vmatprep.mubr.bf16.mxu0 0
  %419 = vmatmul.mubr.bf16.gmra.mrb[0].mxu0 %v168
  %v420 = vpop.f32.mrb[0].mxu0
  %v421 = vadd.f32 %v209, %v420
  %v422 = vpop.f32.mrb[0].mxu0
  %v423 = vadd.f32 %v213, %v422
  %v424 = vpop.f32.mrb[0].mxu0
  %v425 = vadd.f32 %v209, %v424
  %v426 = vpop.f32.mrb[0].mxu0
  %v427 = vadd.f32 %v213, %v426
  %428 = vmatprep.mubr.bf16.mxu0 0
  %429 = vmatmul.mubr.bf16.gmra.mrb[0].mxu0 %v169
  %v430 = vpop.f32.mrb[0].mxu0
  %v431 = vadd.f32 %v209, %v430
  %v432 = vpop.f32.mrb[0].mxu0
  %v433 = vadd.f32 %v213, %v432
  %v434 = vpop.f32.mrb[0].mxu0
  %v435 = vadd.f32 %v209, %v434
  %v436 = vpop.f32.mrb[0].mxu0
  %v437 = vadd.f32 %v213, %v436
  %438 = vmatprep.mubr.bf16.mxu0 0
  %439 = vmatmul.mubr.bf16.gmra.mrb[0].mxu0 %v170
  %v440 = vpop.f32.mrb[0].mxu0
  %v441 = vadd.f32 %v209, %v440
  %v442 = vpop.f32.mrb[0].mxu0
  %v443 = vadd.f32 %v213, %v442
  %v444 = vpop.f32.mrb[0].mxu0
  %v445 = vadd.f32 %v209, %v444
  %v446 = vpop.f32.mrb[0].mxu0
  %v447 = vadd.f32 %v213, %v446
  %448 = vmatprep.mubr.bf16.mxu0 0
  %449 = vmatmul.mubr.bf16.gmra.mrb[0].mxu0 %v171
  %v450 = vpop.f32.mrb[0].mxu0
  %v451 = vadd.f32 %v209, %v450
  %v452 = vpop.f32.mrb[0].mxu0
  %v453 = vadd.f32 %v213, %v452
  %v454 = vpop.f32.mrb[0].mxu0
  %v455 = vadd.f32 %v209, %v454
  %v456 = vpop.f32.mrb[0].mxu0
  %v457 = vadd.f32 %v213, %v456
  %458 = vdwg.mxu0
  %459 = vmatprep.subr.bf16.mxu0 %v325
  %460 = vmatpush1.bf16.msra.mxu0 %v324
  %461 = vmatprep.subr.bf16.mxu0 %v329
  %462 = vmatpush1.bf16.msra.mxu0 %v328
  %463 = vmatprep.subr.bf16.mxu0 %v333
  %464 = vmatpush1.bf16.msra.mxu0 %v332
  %465 = vmatprep.subr.bf16.mxu0 %v337
  %466 = vmatpush1.bf16.msra.mxu0 %v336
  %467 = vmatprep.subr.bf16.mxu0 %v341
  %468 = vmatpush1.bf16.msra.mxu0 %v340
  %469 = vmatprep.subr.bf16.mxu0 %v345
  %470 = vmatpush1.bf16.msra.mxu0 %v344
  %471 = vmatprep.subr.bf16.mxu0 %v349
  %472 = vmatpush1.bf16.msra.mxu0 %v348
  %473 = vmatprep.subr.bf16.mxu0 %v353
  %474 = vmatpush1.bf16.msra.mxu0 %v352
  %475 = vmatprep.subr.bf16.mxu0 0
  %476 = vmatpush1.bf16.msra.mxu0 0
  %477 = vmatprep.subr.bf16.mxu0 0
  %478 = vmatpush1.bf16.msra.mxu0 0
  %479 = vmatprep.subr.bf16.mxu0 0
  %480 = vmatpush1.bf16.msra.mxu0 0
  %481 = vmatprep.subr.bf16.mxu0 0
  %482 = vmatpush1.bf16.msra.mxu0 0
  %483 = vmatprep.subr.bf16.mxu0 0
  %484 = vmatpush1.bf16.msra.mxu0 0
  %485 = vmatprep.subr.bf16.mxu0 0
  %486 = vmatpush1.bf16.msra.mxu0 0
  %487 = vmatprep.subr.bf16.mxu0 0
  %488 = vmatpush1.bf16.msra.mxu0 0
  %489 = vmatprep.subr.bf16.mxu0 0
  %490 = vmatpush1.bf16.msra.mxu0 0
  %491 = vmatprep.mubr.bf16.mxu0 0
  %492 = vmatmul.mubr.bf16.gmra.mrb[0].mxu0 %v168
  %v493 = vpop.f32.mrb[0].mxu0
  %v494 = vadd.f32 %v217, %v493
  %v495 = vpop.f32.mrb[0].mxu0
  %v496 = vadd.f32 %v221, %v495
  %v497 = vpop.f32.mrb[0].mxu0
  %v498 = vadd.f32 %v217, %v497
  %v499 = vpop.f32.mrb[0].mxu0
  %v500 = vadd.f32 %v221, %v499
  %501 = vmatprep.mubr.bf16.mxu0 0
  %502 = vmatmul.mubr.bf16.gmra.mrb[0].mxu0 %v169
  %v503 = vpop.f32.mrb[0].mxu0
  %v504 = vadd.f32 %v217, %v503
  %v505 = vpop.f32.mrb[0].mxu0
  %v506 = vadd.f32 %v221, %v505
  %v507 = vpop.f32.mrb[0].mxu0
  %v508 = vadd.f32 %v217, %v507
  %v509 = vpop.f32.mrb[0].mxu0
  %v510 = vadd.f32 %v221, %v509
  %511 = vmatprep.mubr.bf16.mxu0 0
  %512 = vmatmul.mubr.bf16.gmra.mrb[0].mxu0 %v170
  %v513 = vpop.f32.mrb[0].mxu0
  %v514 = vadd.f32 %v217, %v513
  %v515 = vpop.f32.mrb[0].mxu0
  %v516 = vadd.f32 %v221, %v515
  %v517 = vpop.f32.mrb[0].mxu0
  %v518 = vadd.f32 %v217, %v517
  %v519 = vpop.f32.mrb[0].mxu0
  %v520 = vadd.f32 %v221, %v519
  %521 = vmatprep.mubr.bf16.mxu0 0
  %522 = vmatmul.mubr.bf16.gmra.mrb[0].mxu0 %v171
  %v523 = vpop.f32.mrb[0].mxu0
  %v524 = vadd.f32 %v217, %v523
  %v525 = vpop.f32.mrb[0].mxu0
  %v526 = vadd.f32 %v221, %v525
  %v527 = vpop.f32.mrb[0].mxu0
  %v528 = vadd.f32 %v217, %v527
  %v529 = vpop.f32.mrb[0].mxu0
  %v530 = vadd.f32 %v221, %v529
  %531 = vdwg.mxu0
  %v532 = vmul.f32 %v421, 0.5
  %v533 = vmul.f32 %v423, 0.5
  %v534 = vmul.f32 %v494, 0.5
  %v535 = vmul.f32 %v496, 0.5
  %v536 = vmul.f32 %v425, 0.5
  %v537 = vmul.f32 %v427, 0.5
  %v538 = vmul.f32 %v498, 0.5
  %v539 = vmul.f32 %v500, 0.5
  %v540 = vmul.f32 %v431, 0.5
  %v541 = vmul.f32 %v433, 0.5
  %v542 = vmul.f32 %v504, 0.5
  %v543 = vmul.f32 %v506, 0.5
  %v544 = vmul.f32 %v435, 0.5
  %v545 = vmul.f32 %v437, 0.5
  %v546 = vmul.f32 %v508, 0.5
  %v547 = vmul.f32 %v510, 0.5
  %v548 = vmul.f32 %v441, 0.5
  %v549 = vmul.f32 %v443, 0.5
  %v550 = vmul.f32 %v514, 0.5
  %v551 = vmul.f32 %v516, 0.5
  %v552 = vmul.f32 %v445, 0.5
  %v553 = vmul.f32 %v447, 0.5
  %v554 = vmul.f32 %v518, 0.5
  %v555 = vmul.f32 %v520, 0.5
  %v556 = vmul.f32 %v451, 0.5
  %v557 = vmul.f32 %v453, 0.5
  %v558 = vmul.f32 %v524, 0.5
  %v559 = vmul.f32 %v526, 0.5
  %v560 = vmul.f32 %v455, 0.5
  %v561 = vmul.f32 %v457, 0.5
  %v562 = vmul.f32 %v528, 0.5
  %v563 = vmul.f32 %v530, 0.5
  %v564 = vmul.f32 %v421, 0.70710677
  %v565 = vmul.f32 %v423, 0.70710677
  %v566 = vmul.f32 %v494, 0.70710677
  %v567 = vmul.f32 %v496, 0.70710677
  %v568 = vmul.f32 %v425, 0.70710677
  %v569 = vmul.f32 %v427, 0.70710677
  %v570 = vmul.f32 %v498, 0.70710677
  %v571 = vmul.f32 %v500, 0.70710677
  %v572 = vmul.f32 %v431, 0.70710677
  %v573 = vmul.f32 %v433, 0.70710677
  %v574 = vmul.f32 %v504, 0.70710677
  %v575 = vmul.f32 %v506, 0.70710677
  %v576 = vmul.f32 %v435, 0.70710677
  %v577 = vmul.f32 %v437, 0.70710677
  %v578 = vmul.f32 %v508, 0.70710677
  %v579 = vmul.f32 %v510, 0.70710677
  %v580 = vmul.f32 %v441, 0.70710677
  %v581 = vmul.f32 %v443, 0.70710677
  %v582 = vmul.f32 %v514, 0.70710677
  %v583 = vmul.f32 %v516, 0.70710677
  %v584 = vmul.f32 %v445, 0.70710677
  %v585 = vmul.f32 %v447, 0.70710677
  %v586 = vmul.f32 %v518, 0.70710677
  %v587 = vmul.f32 %v520, 0.70710677
  %v588 = vmul.f32 %v451, 0.70710677
  %v589 = vmul.f32 %v453, 0.70710677
  %v590 = vmul.f32 %v524, 0.70710677
  %v591 = vmul.f32 %v526, 0.70710677
  %v592 = vmul.f32 %v455, 0.70710677
  %v593 = vmul.f32 %v457, 0.70710677
  %v594 = vmul.f32 %v528, 0.70710677
  %v595 = vmul.f32 %v530, 0.70710677
  %v596 = verf.f32.pop %v564
  %v597 = verf.f32.pop %v565
  %v598 = verf.f32.pop %v566
  %v599 = verf.f32.pop %v567
  %v600 = verf.f32.pop %v568
  %v601 = verf.f32.pop %v569
  %v602 = verf.f32.pop %v570
  %v603 = verf.f32.pop %v571
  %v604 = verf.f32.pop %v572
  %v605 = verf.f32.pop %v573
  %v606 = verf.f32.pop %v574
  %v607 = verf.f32.pop %v575
  %v608 = verf.f32.pop %v576
  %v609 = verf.f32.pop %v577
  %v610 = verf.f32.pop %v578
  %v611 = verf.f32.pop %v579
  %v612 = verf.f32.pop %v580
  %v613 = verf.f32.pop %v581
  %v614 = verf.f32.pop %v582
  %v615 = verf.f32.pop %v583
  %v616 = verf.f32.pop %v584
  %v617 = verf.f32.pop %v585
  %v618 = verf.f32.pop %v586
  %v619 = verf.f32.pop %v587
  %v620 = verf.f32.pop %v588
  %v621 = verf.f32.pop %v589
  %v622 = verf.f32.pop %v590
  %v623 = verf.f32.pop %v591
  %v624 = verf.f32.pop %v592
  %v625 = verf.f32.pop %v593
  %v626 = verf.f32.pop %v594
  %v627 = verf.f32.pop %v595
  %v628 = vadd.f32 %v596, 1.0
  %v629 = vadd.f32 %v597, 1.0
  %v630 = vadd.f32 %v598, 1.0
  %v631 = vadd.f32 %v599, 1.0
  %v632 = vadd.f32 %v600, 1.0
  %v633 = vadd.f32 %v601, 1.0
  %v634 = vadd.f32 %v602, 1.0
  %v635 = vadd.f32 %v603, 1.0
  %v636 = vadd.f32 %v604, 1.0
  %v637 = vadd.f32 %v605, 1.0
  %v638 = vadd.f32 %v606, 1.0
  %v639 = vadd.f32 %v607, 1.0
  %v640 = vadd.f32 %v608, 1.0
  %v641 = vadd.f32 %v609, 1.0
  %v642 = vadd.f32 %v610, 1.0
  %v643 = vadd.f32 %v611, 1.0
  %v644 = vadd.f32 %v612, 1.0
  %v645 = vadd.f32 %v613, 1.0
  %v646 = vadd.f32 %v614, 1.0
  %v647 = vadd.f32 %v615, 1.0
  %v648 = vadd.f32 %v616, 1.0
  %v649 = vadd.f32 %v617, 1.0
  %v650 = vadd.f32 %v618, 1.0
  %v651 = vadd.f32 %v619, 1.0
  %v652 = vadd.f32 %v620, 1.0
  %v653 = vadd.f32 %v621, 1.0
  %v654 = vadd.f32 %v622, 1.0
  %v655 = vadd.f32 %v623, 1.0
  %v656 = vadd.f32 %v624, 1.0
  %v657 = vadd.f32 %v625, 1.0
  %v658 = vadd.f32 %v626, 1.0
  %v659 = vadd.f32 %v627, 1.0
  %v660 = vmul.f32 %v532, %v628
  %v661 = vmul.f32 %v533, %v629
  %v662 = vmul.f32 %v534, %v630
  %v663 = vmul.f32 %v535, %v631
  %v664 = vmul.f32 %v536, %v632
  %v665 = vmul.f32 %v537, %v633
  %v666 = vmul.f32 %v538, %v634
  %v667 = vmul.f32 %v539, %v635
  %v668 = vmul.f32 %v540, %v636
  %v669 = vmul.f32 %v541, %v637
  %v670 = vmul.f32 %v542, %v638
  %v671 = vmul.f32 %v543, %v639
  %v672 = vmul.f32 %v544, %v640
  %v673 = vmul.f32 %v545, %v641
  %v674 = vmul.f32 %v546, %v642
  %v675 = vmul.f32 %v547, %v643
  %v676 = vmul.f32 %v548, %v644
  %v677 = vmul.f32 %v549, %v645
  %v678 = vmul.f32 %v550, %v646
  %v679 = vmul.f32 %v551, %v647
  %v680 = vmul.f32 %v552, %v648
  %v681 = vmul.f32 %v553, %v649
  %v682 = vmul.f32 %v554, %v650
  %v683 = vmul.f32 %v555, %v651
  %v684 = vmul.f32 %v556, %v652
  %v685 = vmul.f32 %v557, %v653
  %v686 = vmul.f32 %v558, %v654
  %v687 = vmul.f32 %v559, %v655
  %v688 = vmul.f32 %v560, %v656
  %v689 = vmul.f32 %v561, %v657
  %v690 = vmul.f32 %v562, %v658
  %v691 = vmul.f32 %v563, %v659
  %v692 = vpack.c.bf16 %v664, %v660
  %v693 = vpack.c.bf16 %v665, %v661
  %v694 = vpack.c.bf16 %v666, %v662
  %v695 = vpack.c.bf16 %v667, %v663
  %v696 = vpack.c.bf16 %v672, %v668
  %v697 = vpack.c.bf16 %v673, %v669
  %v698 = vpack.c.bf16 %v674, %v670
  %v699 = vpack.c.bf16 %v675, %v671
  %v700 = vpack.c.bf16 %v680, %v676
  %v701 = vpack.c.bf16 %v681, %v677
  %v702 = vpack.c.bf16 %v682, %v678
  %v703 = vpack.c.bf16 %v683, %v679
  %v704 = vpack.c.bf16 %v688, %v684
  %v705 = vpack.c.bf16 %v689, %v685
  %v706 = vpack.c.bf16 %v690, %v686
  %v707 = vpack.c.bf16 %v691, %v687
  %v724 = vunpack.c.l.b16 %v692
  %v725 = vunpack.c.l.b16 %v693
  %v726 = vunpack.c.l.b16 %v694
  %v727 = vunpack.c.l.b16 %v695
  %v728 = vunpack.c.h.b16 %v692
  %v729 = vunpack.c.h.b16 %v693
  %v730 = vunpack.c.h.b16 %v694
  %v731 = vunpack.c.h.b16 %v695
  %v732 = vunpack.c.l.b16 %v696
  %v733 = vunpack.c.l.b16 %v697
  %v734 = vunpack.c.l.b16 %v698
  %v735 = vunpack.c.l.b16 %v699
  %v736 = vunpack.c.h.b16 %v696
  %v737 = vunpack.c.h.b16 %v697
  %v738 = vunpack.c.h.b16 %v698
  %v739 = vunpack.c.h.b16 %v699
  %v740 = vunpack.c.l.b16 %v700
  %v741 = vunpack.c.l.b16 %v701
  %v742 = vunpack.c.l.b16 %v702
  %v743 = vunpack.c.l.b16 %v703
  %v744 = vunpack.c.h.b16 %v700
  %v745 = vunpack.c.h.b16 %v701
  %v746 = vunpack.c.h.b16 %v702
  %v747 = vunpack.c.h.b16 %v703
  %v748 = vunpack.c.l.b16 %v704
  %v749 = vunpack.c.l.b16 %v705
  %v750 = vunpack.c.l.b16 %v706
  %v751 = vunpack.c.l.b16 %v707
  %v752 = vunpack.c.h.b16 %v704
  %v753 = vunpack.c.h.b16 %v705
  %v754 = vunpack.c.h.b16 %v706
  %v755 = vunpack.c.h.b16 %v707
  %v756 = vpack.c.b16 %v725, %v724
  %v757 = vpack.c.b16 %v727, %v726
  %v758 = vpack.c.b16 %v729, %v728
  %v759 = vpack.c.b16 %v731, %v730
  %v760 = vpack.c.b16 %v733, %v732
  %v761 = vpack.c.b16 %v735, %v734
  %v762 = vpack.c.b16 %v737, %v736
  %v763 = vpack.c.b16 %v739, %v738
  %v764 = vpack.c.b16 %v741, %v740
  %v765 = vpack.c.b16 %v743, %v742
  %v766 = vpack.c.b16 %v745, %v744
  %v767 = vpack.c.b16 %v747, %v746
  %v768 = vpack.c.b16 %v749, %v748
  %v769 = vpack.c.b16 %v751, %v750
  %v770 = vpack.c.b16 %v753, %v752
  %v771 = vpack.c.b16 %v755, %v754
  %788 = vst [vmem:[%s5] sm:$0xff] %v756
  %789 = vst [vmem:[%s5 + $0x8] sm:$0xff] %v757
  %790 = vst [vmem:[%s5 + $0x10] sm:$0xff] %v758
  %791 = vst [vmem:[%s5 + $0x18] sm:$0xff] %v759
  %792 = vst [vmem:[%s5 + $0x20] sm:$0xff] %v760
  %793 = vst [vmem:[%s5 + $0x28] sm:$0xff] %v761
  %794 = vst [vmem:[%s5 + $0x30] sm:$0xff] %v762
  %795 = vst [vmem:[%s5 + $0x38] sm:$0xff] %v763
  %796 = vst [vmem:[%s5 + $0x40] sm:$0xff] %v764
  %797 = vst [vmem:[%s5 + $0x48] sm:$0xff] %v765
  %798 = vst [vmem:[%s5 + $0x50] sm:$0xff] %v766
  %799 = vst [vmem:[%s5 + $0x58] sm:$0xff] %v767
  %800 = vst [vmem:[%s5 + $0x60] sm:$0xff] %v768
  %801 = vst [vmem:[%s5 + $0x68] sm:$0xff] %v769
  %802 = vst [vmem:[%s5 + $0x70] sm:$0xff] %v770
  %803 = vst [vmem:[%s5 + $0x78] sm:$0xff] %v771
  // Predicated region
  $region26: #{vit_forward.12} parent=0 // pred_check
    _
  $region27: #{vit_forward.12} parent=0 // pred_check_branch
    %805 = sbr.rel (0) target = $region29
  $region28: #{vit_forward.12} parent=0 // pred_region
    _
  $region29: #{vit_forward.12} parent=0 // pred_fallthru
    _
  // Predicated region
  $region30: #{vit_forward.12} parent=0 // pred_check
    _
  $region31: #{vit_forward.12} parent=0 // pred_check_branch
    %807 = sbr.rel (0) target = $region33
  $region32: #{vit_forward.12} parent=0 // pred_region
    _
  $region33: #{vit_forward.12} parent=0 // pred_fallthru
    _

// kernel: vit_forward.11
$region0: #{vit_forward.11}
  #allocation0 [shape = 'u32[]', space=smem, size = 0x4, offset = 0x4, fixed_abs, tag = 'smem constant byte address 0x4 - core index']
  #allocation1 [shape = 'u32[144,128]{1,0:T(1,128)}', space=vmem, size = 0x12000, scoped, tag = 'internal scratch']
  #allocation2 [shape = 'bf16[32,128]{1,0:T(16,128)(2,1)}', space=vmem, size = 0x2000, scoped, tag = 'scratch operand']
  %s0 = inlined_call_operand.vmem [shape: bf16[2,32,384], index: 0, kind: input, shape index: {}]
  %s1 = inlined_call_operand.vmem [shape: bf16[128,128], index: 1, kind: input, shape index: {}]
  %s2 = inlined_call_operand.vmem [shape: f32[1,128], index: 2, kind: input, shape index: {}]
  %s3 = inlined_call_operand.vmem [shape: bf16[2,32,128], index: 3, kind: input, shape index: {}]
  %s4 = inlined_call_operand.vmem [shape: bf16[2,32,128], index: 4, kind: output, shape index: {}]
  %s5 = sld [smem:[#allocation0]]
  $region49: #{vit_forward.11} parent=0
    _
  %s7 = ssub.s32 1, %s5
  %s8 = scalar_select 0, %s7, %s5
  loop: start=0, step=1, limit=4
  $region2: #{vit_forward.11} parent=0 // loop_pre_header
    _
  $region3: #{vit_forward.11} parent=0 // loop_header
    %s10 = sphi 0, %s14
    %p11 = scmp.ge.s32.totalorder %s10, 4
    %s20 = sphi 0, %s22
    %s23 = sphi 0, %s20
    %s24 = sphi 0, %s23
    %s40 = sphi 0, %s24
    %s44 = sphi 0, %s44
    %s46 = sphi 0, %s44
    %s47 = sphi 0, %s46
    %s61 = sphi 0, %s47
    %s65 = sphi 0, %s65
    %s67 = sphi 0, %s65
    %s68 = sphi 0, %s67
    %s82 = sphi 0, %s68
    %s88 = sphi 0, %s90
    %s91 = sphi 0, %s88
    %s92 = sphi 0, %s91
    %s108 = sphi 0, %s92
    %s114 = sphi 0, %s116
    %s117 = sphi 0, %s114
    %s118 = sphi 0, %s117
    %s134 = sphi 0, %s118
  $region4: #{vit_forward.11} parent=0 // loop_header_branch
    %13 = sbr.rel (%p11) target = $region8
  $region5: #{vit_forward.11} parent=0 // loop_body
    %s15 = ssub.s32 %s10, 1
    %s16 = ssub.s32 %s10, 2
    %s17 = sadd.s32 %s10, 1
    %s18 = ssub.s32 %s10, %s17
    %p19 = scmp.eq.s32.totalorder %s18, 0
    %s21 = sadd.s32 %s20, 1
    %s22 = scalar_select %p19, %s20, %s21
    %p25 = pneg %p19
    %p26 = scmp.eq.s32.totalorder %s10, 1
    %p27 = por %p25, %p26
    %p28 = scmp.ne.s32.totalorder %s20, %s23
    %p29 = scmp.eq.s32.totalorder %s10, 0
    %p30 = por %p28, %p29
    %p31 = scmp.ne.s32.totalorder %s20, %s23
    %p32 = scmp.eq.s32.totalorder %s15, 1
    %p33 = por %p31, %p32
    %p34 = scmp.ne.s32.totalorder %s23, %s24
    %p35 = scmp.eq.s32.totalorder %s15, 0
    %p36 = por %p34, %p35
    %p37 = scmp.ne.s32.totalorder %s23, %s24
    %p38 = scmp.eq.s32.totalorder %s16, 1
    %p39 = por %p37, %p38
    %p41 = scmp.ne.s32.totalorder %s24, %s40
    %p42 = scmp.eq.s32.totalorder %s16, 0
    %p43 = por %p41, %p42
    %s45 = sadd.s32 %s44, 1
    %p48 = scmp.eq.s32.totalorder %s10, 1
    %p49 = scmp.ne.s32.totalorder %s44, %s46
    %p50 = scmp.eq.s32.totalorder %s10, 0
    %p51 = por %p49, %p50
    %p52 = scmp.ne.s32.totalorder %s44, %s46
    %p53 = scmp.eq.s32.totalorder %s15, 1
    %p54 = por %p52, %p53
    %p55 = scmp.ne.s32.totalorder %s46, %s47
    %p56 = scmp.eq.s32.totalorder %s15, 0
    %p57 = por %p55, %p56
    %p58 = scmp.ne.s32.totalorder %s46, %s47
    %p59 = scmp.eq.s32.totalorder %s16, 1
    %p60 = por %p58, %p59
    %p62 = scmp.ne.s32.totalorder %s47, %s61
    %p63 = scmp.eq.s32.totalorder %s16, 0
    %p64 = por %p62, %p63
    %s66 = sadd.s32 %s65, 1
    %p69 = scmp.eq.s32.totalorder %s10, 1
    %p70 = scmp.ne.s32.totalorder %s65, %s67
    %p71 = scmp.eq.s32.totalorder %s10, 0
    %p72 = por %p70, %p71
    %p73 = scmp.ne.s32.totalorder %s65, %s67
    %p74 = scmp.eq.s32.totalorder %s15, 1
    %p75 = por %p73, %p74
    %p76 = scmp.ne.s32.totalorder %s67, %s68
    %p77 = scmp.eq.s32.totalorder %s15, 0
    %p78 = por %p76, %p77
    %p79 = scmp.ne.s32.totalorder %s67, %s68
    %p80 = scmp.eq.s32.totalorder %s16, 1
    %p81 = por %p79, %p80
    %p83 = scmp.ne.s32.totalorder %s68, %s82
    %p84 = scmp.eq.s32.totalorder %s16, 0
    %p85 = por %p83, %p84
    %s86 = ssub.s32 %s10, %s17
    %p87 = scmp.eq.s32.totalorder %s86, 0
    %s89 = sadd.s32 %s88, 1
    %s90 = scalar_select %p87, %s88, %s89
    %p93 = pneg %p87
    %p94 = scmp.eq.s32.totalorder %s10, 1
    %p95 = por %p93, %p94
    %p96 = scmp.ne.s32.totalorder %s88, %s91
    %p97 = scmp.eq.s32.totalorder %s10, 0
    %p98 = por %p96, %p97
    %p99 = scmp.ne.s32.totalorder %s88, %s91
    %p100 = scmp.eq.s32.totalorder %s15, 1
    %p101 = por %p99, %p100
    %p102 = scmp.ne.s32.totalorder %s91, %s92
    %p103 = scmp.eq.s32.totalorder %s15, 0
    %p104 = por %p102, %p103
    %p105 = scmp.ne.s32.totalorder %s91, %s92
    %p106 = scmp.eq.s32.totalorder %s16, 1
    %p107 = por %p105, %p106
    %p109 = scmp.ne.s32.totalorder %s92, %s108
    %p110 = scmp.eq.s32.totalorder %s16, 0
    %p111 = por %p109, %p110
    %s112 = ssub.s32 %s10, %s17
    %p113 = scmp.eq.s32.totalorder %s112, 0
    %s115 = sadd.s32 %s114, 1
    %s116 = scalar_select %p113, %s114, %s115
    %p119 = pneg %p113
    %p120 = scmp.eq.s32.totalorder %s10, 1
    %p121 = por %p119, %p120
    %p122 = scmp.ne.s32.totalorder %s114, %s117
    %p123 = scmp.eq.s32.totalorder %s10, 0
    %p124 = por %p122, %p123
    %p125 = scmp.ne.s32.totalorder %s114, %s117
    %p126 = scmp.eq.s32.totalorder %s15, 1
    %p127 = por %p125, %p126
    %p128 = scmp.ne.s32.totalorder %s117, %s118
    %p129 = scmp.eq.s32.totalorder %s15, 0
    %p130 = por %p128, %p129
    %p131 = scmp.ne.s32.totalorder %s117, %s118
    %p132 = scmp.eq.s32.totalorder %s16, 1
    %p133 = por %p131, %p132
    %p135 = scmp.ne.s32.totalorder %s118, %s134
    %p136 = scmp.eq.s32.totalorder %s16, 0
    %p137 = por %p135, %p136
    %p138 = scmp.le.s32.totalorder 1, %s10
    %p139 = scmp.lt.s32.totalorder %s10, 3
    %p140 = pnand %p138, %p139
    %p141 = pneg %p140
    // Predicated region
    $region9: #{vit_forward.11} parent=5 // pred_check
      _
    $region10: #{vit_forward.11} parent=5 // pred_check_branch
      %143 = sbr.rel (%p140) target = $region12
    $region11: #{vit_forward.11} parent=5 // pred_region
      %s144 = ssub.s32 %s10, 1
      // Predicated region
      $region13: #{vit_forward.11} parent=11 // pred_check
        %p145 = pneg %p57
      $region14: #{vit_forward.11} parent=11 // pred_check_branch
        %147 = sbr.rel (%p145) target = $region16
      $region15: #{vit_forward.11} parent=11 // pred_region
        _
      $region16: #{vit_forward.11} parent=11 // pred_fallthru
        _
      // Predicated region
      $region17: #{vit_forward.11} parent=11 // pred_check
        %p148 = pneg %p78
      $region18: #{vit_forward.11} parent=11 // pred_check_branch
        %150 = sbr.rel (%p148) target = $region20
      $region19: #{vit_forward.11} parent=11 // pred_region
        _
      $region20: #{vit_forward.11} parent=11 // pred_fallthru
        _
    $region12: #{vit_forward.11} parent=5 // pred_fallthru
      _
    %p151 = scmp.lt.s32.totalorder %s10, 2
    // Predicated region
    $region21: #{vit_forward.11} parent=5 // pred_check
      %p152 = pneg %p151
    $region22: #{vit_forward.11} parent=5 // pred_check_branch
      %154 = sbr.rel (%p152) target = $region24
    $region23: #{vit_forward.11} parent=5 // pred_region
      // Predicated region
      $region25: #{vit_forward.11} parent=23 // pred_check
        %p155 = pneg %p30
      $region26: #{vit_forward.11} parent=23 // pred_check_branch
        %157 = sbr.rel (%p155) target = $region28
      $region27: #{vit_forward.11} parent=23 // pred_region
        %p158 = scmp.lt.s32.totalorder %s10, 1
        %s159 = scalar_select %p158, %s10, 1
        %s160 = smul.addr %s159, 12
        %s161 = smul.addr %s160, 4
        %s162 = scalar_lea.vmem %s0, %s161
      $region28: #{vit_forward.11} parent=23 // pred_fallthru
        _
      // Predicated region
      $region29: #{vit_forward.11} parent=23 // pred_check
        %p163 = pneg %p98
      $region30: #{vit_forward.11} parent=23 // pred_check_branch
        %165 = sbr.rel (%p163) target = $region32
      $region31: #{vit_forward.11} parent=23 // pred_region
        %p166 = scmp.lt.s32.totalorder %s10, 1
        %s167 = scalar_select %p166, %s10, 1
        %s168 = smul.addr %s167, 4
        %s169 = smul.addr %s168, 4
        %s170 = scalar_lea.vmem %s3, %s169
      $region32: #{vit_forward.11} parent=23 // pred_fallthru
        _
    $region24: #{vit_forward.11} parent=5 // pred_fallthru
      _
    %p171 = scmp.le.s32.totalorder 1, %s10
    %p172 = scmp.lt.s32.totalorder %s10, 3
    %p173 = pnand %p171, %p172
    %p174 = pneg %p173
    // Predicated region
    $region33: #{vit_forward.11} parent=5 // pred_check
      _
    $region34: #{vit_forward.11} parent=5 // pred_check_branch
      %176 = sbr.rel (%p173) target = $region36
    $region35: #{vit_forward.11} parent=5 // pred_region
      %s177 = ssub.s32 %s10, 1
      %p178 = scmp.lt.s32.totalorder %s15, 1
      %s179 = scalar_select %p178, %s15, 1
      %s180 = smul.addr %s179, 12
      %s181 = smul.addr %s180, 4
      %s182 = scalar_lea.vmem %s0, %s181
      %p183 = pneg %p36
      %p184 = pneg %p33
      %p185 = pneg %p57
      %p186 = pneg %p54
      %p187 = pneg %p78
      %p188 = pneg %p75
      %p189 = scmp.lt.s32.totalorder %s15, 1
      %s190 = scalar_select %p189, %s15, 1
      %s191 = smul.addr %s190, 4
      %s192 = smul.addr %s191, 4
      %s193 = scalar_lea.vmem %s3, %s192
      %p194 = pneg %p104
      %p195 = pneg %p101
      %p196 = pneg %p130
      %p197 = pneg %p127
      %p198 = scmp.lt.s32.totalorder %s15, 1
      %s199 = scalar_select %p198, %s15, 1
      %s200 = smul.addr %s199, 4
      %s201 = smul.addr %s200, 4
      %s202 = scalar_lea.vmem %s4, %s201
      %p203 = scmp.lt.s32.totalorder %s15, 1
      %s204 = scalar_select %p203, %s15, 1
      %s205 = smul.addr %s204, 12
      %s206 = smul.addr %s205, 4
      %s207 = scalar_lea.vmem %s0, %s206
      %p208 = scmp.lt.s32.totalorder %s15, 1
      %s209 = scalar_select %p208, %s15, 1
      %s210 = smul.addr %s209, 4
      %s211 = smul.addr %s210, 4
      %s212 = scalar_lea.vmem %s3, %s211
      %p213 = scmp.lt.s32.totalorder %s15, 1
      %s214 = scalar_select %p213, %s15, 1
      %s215 = smul.addr %s214, 4
      %s216 = smul.addr %s215, 4
      %s217 = scalar_lea.vmem %s4, %s216
      %v219 = vld [vmem:[%s207] sm:$0xff]
      %v220 = vld [vmem:[%s207 + $0x8] sm:$0xf]
      %v221 = vld [vmem:[%s207 + $0xc] sm:$0xff]
      %v222 = vld [vmem:[%s207 + $0x14] sm:$0xf]
      %v223 = vld [vmem:[%s207 + $0x18] sm:$0xff]
      %v224 = vld [vmem:[%s207 + $0x20] sm:$0xf]
      %v225 = vld [vmem:[%s207 + $0x24] sm:$0xff]
      %v226 = vld [vmem:[%s207 + $0x2c] sm:$0xf]
      %v227 = vlaneseq
      %v228 = vand.u32 %v227, 127
      %vm229 = vcmp.lt.s32.totalorder %v228, 17
      %v230 = vsel %vm229, 0.0, -1e+30
      %v235 = vunpack.c.l.b16 %v219
      %v236 = vunpack.c.l.b16 %v221
      %v237 = vunpack.c.l.b16 %v223
      %v238 = vunpack.c.l.b16 %v225
      %v239 = vpack.c.b16 %v236, %v235
      %v240 = vpack.c.b16 %v238, %v237
      %v241 = vunpack.c.h.b16 %v219
      %v242 = vunpack.c.h.b16 %v221
      %v243 = vunpack.c.h.b16 %v223
      %v244 = vunpack.c.h.b16 %v225
      %v245 = vpack.c.b16 %v242, %v241
      %v246 = vpack.c.b16 %v244, %v243
      %vm247 = vcmask 261120
      %v249 = vsel %vm247, %v239, 0
      %v252 = vsel %vm247, %v240, 0
      %v255 = vsel %vm247, %v245, 0
      %v258 = vsel %vm247, %v246, 0
      %260 = vmatprep.subr.bf16.mxu0 0
      %261 = vmatpush1.bf16.xpose.msra.mxu0 %v255
      %262 = vmatprep.subr.bf16.mxu0 0
      %263 = vmatpush1.bf16.xpose.msra.mxu0 %v258
      %264 = vmatprep.subr.bf16.mxu0 0
      %265 = vmatpush1.bf16.xpose.msra.mxu0 0
      %266 = vmatprep.subr.bf16.mxu0 0
      %267 = vmatpush1.bf16.xpose.msra.mxu0 0
      %268 = vmatprep.subr.bf16.mxu0 0
      %269 = vmatpush1.bf16.xpose.msra.mxu0 0
      %270 = vmatprep.subr.bf16.mxu0 0
      %271 = vmatpush1.bf16.xpose.msra.mxu0 0
      %272 = vmatprep.subr.bf16.mxu0 0
      %273 = vmatpush1.bf16.xpose.msra.mxu0 0
      %274 = vmatprep.subr.bf16.mxu0 0
      %275 = vmatpush1.bf16.xpose.msra.mxu0 0
      %276 = vmatprep.subr.bf16.mxu0 0
      %277 = vmatpush1.bf16.xpose.msra.mxu0 0
      %278 = vmatprep.subr.bf16.mxu0 0
      %279 = vmatpush1.bf16.xpose.msra.mxu0 0
      %280 = vmatprep.subr.bf16.mxu0 0
      %281 = vmatpush1.bf16.xpose.msra.mxu0 0
      %282 = vmatprep.subr.bf16.mxu0 0
      %283 = vmatpush1.bf16.xpose.msra.mxu0 0
      %284 = vmatprep.subr.bf16.mxu0 0
      %285 = vmatpush1.bf16.xpose.msra.mxu0 0
      %286 = vmatprep.subr.bf16.mxu0 0
      %287 = vmatpush1.bf16.xpose.msra.mxu0 0
      %288 = vmatprep.subr.bf16.mxu0 0
      %289 = vmatpush1.bf16.xpose.msra.mxu0 0
      %290 = vmatprep.subr.bf16.mxu0 0
      %291 = vmatpush1.bf16.xpose.msra.mxu0 0
      %292 = vmatprep.mubr.bf16.mxu0 0
      %293 = vmatmul.mubr.bf16.gmra.mrb[0].mxu0 %v249
      %v294 = vpop.f32.mrb[0].mxu0
      %v295 = vadd.f32 %v230, %v294
      %v296 = vpop.f32.mrb[0].mxu0
      %v297 = vpop.f32.mrb[0].mxu0
      %v298 = vadd.f32 %v230, %v297
      %v299 = vpop.f32.mrb[0].mxu0
      %300 = vmatprep.mubr.bf16.mxu0 0
      %301 = vmatmul.mubr.bf16.gmra.mrb[0].mxu0 %v252
      %v302 = vpop.f32.mrb[0].mxu0
      %v303 = vadd.f32 %v230, %v302
      %v304 = vpop.f32.mrb[0].mxu0
      %v305 = vpop.f32.mrb[0].mxu0
      %v306 = vadd.f32 %v230, %v305
      %v307 = vpop.f32.mrb[0].mxu0
      %308 = vdwg.mxu0
      %v309 = vsel %vm247, %v295, -inf
      %310 = vmax.xlane.f32.xlu0 %v309
      %v311 = vpop.xlane.xlu0 %310
      %v312 = vsel %vm247, %v298, -inf
      %313 = vmax.xlane.f32.xlu0 %v312
      %v314 = vpop.xlane.xlu0 %313
      %v315 = vsel %vm247, %v303, -inf
      %316 = vmax.xlane.f32.xlu0 %v315
      %v317 = vpop.xlane.xlu0 %316
      %v318 = vsel %vm247, %v306, -inf
      %319 = vmax.xlane.f32.xlu0 %v318
      %v320 = vpop.xlane.xlu0 %319
      %v321 = vsub.f32 %v295, %v311
      %v322 = vsub.f32 %v298, %v314
      %v323 = vsub.f32 %v303, %v317
      %v324 = vsub.f32 %v306, %v320
      %v325 = vmul.f32 %v321, 1.442695
      %v326 = vpow.pop %v325
      %v327 = vmul.f32 %v322, 1.442695
      %v328 = vpow.pop %v327
      %v329 = vmul.f32 %v323, 1.442695
      %v330 = vpow.pop %v329
      %v331 = vmul.f32 %v324, 1.442695
      %v332 = vpow.pop %v331
      %v333 = vsel %vm247, %v326, 0.0
      %334 = vadd.xlane.f32.xlu0 %v333
      %v335 = vpop.xlane.xlu0 %334
      %v336 = vsel %vm247, %v328, 0.0
      %337 = vadd.xlane.f32.xlu0 %v336
      %v338 = vpop.xlane.xlu0 %337
      %v339 = vsel %vm247, %v330, 0.0
      %340 = vadd.xlane.f32.xlu0 %v339
      %v341 = vpop.xlane.xlu0 %340
      %v342 = vsel %vm247, %v332, 0.0
      %343 = vadd.xlane.f32.xlu0 %v342
      %v344 = vpop.xlane.xlu0 %343
      %v345 = vrcp.pop %v335
      %v346 = vrcp.pop %v338
      %v347 = vrcp.pop %v341
      %v348 = vrcp.pop %v344
      %v349 = vmul.f32 %v326, %v345
      %v350 = vmul.f32 %v328, %v346
      %v351 = vmul.f32 %v330, %v347
      %v352 = vmul.f32 %v332, %v348
      %v353 = vpack.c.bf16 %v350, %v349
      %v354 = vpack.c.bf16 %v352, %v351
      %v359 = vunpack.c.l.b16 %v220
      %v360 = vunpack.c.l.b16 %v222
      %v361 = vunpack.c.l.b16 %v224
      %v362 = vunpack.c.l.b16 %v226
      %v363 = vpack.c.b16 %v360, %v359
      %v364 = vpack.c.b16 %v362, %v361
      %v368 = vsel %vm247, %v353, 0
      %v371 = vsel %vm247, %v354, 0
      %373 = vmatprep.subr.bf16.mxu0 0
      %374 = vmatpush1.bf16.msra.mxu0 %v363
      %375 = vmatprep.subr.bf16.mxu0 0
      %376 = vmatpush1.bf16.msra.mxu0 %v364
      %377 = vmatprep.subr.bf16.mxu0 0
      %378 = vmatpush1.bf16.msra.mxu0 0
      %379 = vmatprep.subr.bf16.mxu0 0
      %380 = vmatpush1.bf16.msra.mxu0 0
      %381 = vmatprep.subr.bf16.mxu0 0
      %382 = vmatpush1.bf16.msra.mxu0 0
      %383 = vmatprep.subr.bf16.mxu0 0
      %384 = vmatpush1.bf16.msra.mxu0 0
      %385 = vmatprep.subr.bf16.mxu0 0
      %386 = vmatpush1.bf16.msra.mxu0 0
      %387 = vmatprep.subr.bf16.mxu0 0
      %388 = vmatpush1.bf16.msra.mxu0 0
      %389 = vmatprep.subr.bf16.mxu0 0
      %390 = vmatpush1.bf16.msra.mxu0 0
      %391 = vmatprep.subr.bf16.mxu0 0
      %392 = vmatpush1.bf16.msra.mxu0 0
      %393 = vmatprep.subr.bf16.mxu0 0
      %394 = vmatpush1.bf16.msra.mxu0 0
      %395 = vmatprep.subr.bf16.mxu0 0
      %396 = vmatpush1.bf16.msra.mxu0 0
      %397 = vmatprep.subr.bf16.mxu0 0
      %398 = vmatpush1.bf16.msra.mxu0 0
      %399 = vmatprep.subr.bf16.mxu0 0
      %400 = vmatpush1.bf16.msra.mxu0 0
      %401 = vmatprep.subr.bf16.mxu0 0
      %402 = vmatpush1.bf16.msra.mxu0 0
      %403 = vmatprep.subr.bf16.mxu0 0
      %404 = vmatpush1.bf16.msra.mxu0 0
      %405 = vmatprep.mubr.bf16.mxu0 0
      %406 = vmatmul.mubr.bf16.gmra.mrb[0].mxu0 %v368
      %v407 = vpop.f32.mrb[0].mxu0
      %v408 = vadd.f32 0.0, %v407
      %v409 = vpop.f32.mrb[0].mxu0
      %v410 = vpop.f32.mrb[0].mxu0
      %v411 = vadd.f32 0.0, %v410
      %v412 = vpop.f32.mrb[0].mxu0
      %413 = vmatprep.mubr.bf16.mxu0 0
      %414 = vmatmul.mubr.bf16.gmra.mrb[0].mxu0 %v371
      %v415 = vpop.f32.mrb[0].mxu0
      %v416 = vadd.f32 0.0, %v415
      %v417 = vpop.f32.mrb[0].mxu0
      %v418 = vpop.f32.mrb[0].mxu0
      %v419 = vadd.f32 0.0, %v418
      %v420 = vpop.f32.mrb[0].mxu0
      %421 = vdwg.mxu0
      %v422 = vpack.c.bf16 %v411, %v408
      %v423 = vpack.c.bf16 %v419, %v416
      %424 = vst.msk [vmem:[#allocation2] sm:$0xff] %vm247, %v422
      %425 = vst.msk [vmem:[#allocation2 + $0x8] sm:$0xff] %vm247, %v423
      %426 = vrot.lane.b32.xlu0 %v239, 96
      %v427 = vpop.permute.xlu0 %426
      %428 = vrot.lane.b32.xlu0 %v240, 96
      %v429 = vpop.permute.xlu0 %428
      %430 = vrot.lane.b32.xlu0 %v245, 96
      %v431 = vpop.permute.xlu0 %430
      %432 = vrot.lane.b32.xlu0 %v246, 96
      %v433 = vpop.permute.xlu0 %432
      %v435 = vsel %vm247, %v427, 0
      %v438 = vsel %vm247, %v429, 0
      %v441 = vsel %vm247, %v431, 0
      %v444 = vsel %vm247, %v433, 0
      %446 = vmatprep.subr.bf16.mxu0 0
      %447 = vmatpush1.bf16.xpose.msra.mxu0 %v441
      %448 = vmatprep.subr.bf16.mxu0 0
      %449 = vmatpush1.bf16.xpose.msra.mxu0 %v444
      %450 = vmatprep.subr.bf16.mxu0 0
      %451 = vmatpush1.bf16.xpose.msra.mxu0 0
      %452 = vmatprep.subr.bf16.mxu0 0
      %453 = vmatpush1.bf16.xpose.msra.mxu0 0
      %454 = vmatprep.subr.bf16.mxu0 0
      %455 = vmatpush1.bf16.xpose.msra.mxu0 0
      %456 = vmatprep.subr.bf16.mxu0 0
      %457 = vmatpush1.bf16.xpose.msra.mxu0 0
      %458 = vmatprep.subr.bf16.mxu0 0
      %459 = vmatpush1.bf16.xpose.msra.mxu0 0
      %460 = vmatprep.subr.bf16.mxu0 0
      %461 = vmatpush1.bf16.xpose.msra.mxu0 0
      %462 = vmatprep.subr.bf16.mxu0 0
      %463 = vmatpush1.bf16.xpose.msra.mxu0 0
      %464 = vmatprep.subr.bf16.mxu0 0
      %465 = vmatpush1.bf16.xpose.msra.mxu0 0
      %466 = vmatprep.subr.bf16.mxu0 0
      %467 = vmatpush1.bf16.xpose.msra.mxu0 0
      %468 = vmatprep.subr.bf16.mxu0 0
      %469 = vmatpush1.bf16.xpose.msra.mxu0 0
      %470 = vmatprep.subr.bf16.mxu0 0
      %471 = vmatpush1.bf16.xpose.msra.mxu0 0
      %472 = vmatprep.subr.bf16.mxu0 0
      %473 = vmatpush1.bf16.xpose.msra.mxu0 0
      %474 = vmatprep.subr.bf16.mxu0 0
      %475 = vmatpush1.bf16.xpose.msra.mxu0 0
      %476 = vmatprep.subr.bf16.mxu0 0
      %477 = vmatpush1.bf16.xpose.msra.mxu0 0
      %478 = vmatprep.mubr.bf16.mxu0 0
      %479 = vmatmul.mubr.bf16.gmra.mrb[0].mxu0 %v435
      %v480 = vpop.f32.mrb[0].mxu0
      %v481 = vadd.f32 %v230, %v480
      %v482 = vpop.f32.mrb[0].mxu0
      %v483 = vpop.f32.mrb[0].mxu0
      %v484 = vadd.f32 %v230, %v483
      %v485 = vpop.f32.mrb[0].mxu0
      %486 = vmatprep.mubr.bf16.mxu0 0
      %487 = vmatmul.mubr.bf16.gmra.mrb[0].mxu0 %v438
      %v488 = vpop.f32.mrb[0].mxu0
      %v489 = vadd.f32 %v230, %v488
      %v490 = vpop.f32.mrb[0].mxu0
      %v491 = vpop.f32.mrb[0].mxu0
      %v492 = vadd.f32 %v230, %v491
      %v493 = vpop.f32.mrb[0].mxu0
      %494 = vdwg.mxu0
      %v495 = vsel %vm247, %v481, -inf
      %496 = vmax.xlane.f32.xlu0 %v495
      %v497 = vpop.xlane.xlu0 %496
      %v498 = vsel %vm247, %v484, -inf
      %499 = vmax.xlane.f32.xlu0 %v498
      %v500 = vpop.xlane.xlu0 %499
      %v501 = vsel %vm247, %v489, -inf
      %502 = vmax.xlane.f32.xlu0 %v501
      %v503 = vpop.xlane.xlu0 %502
      %v504 = vsel %vm247, %v492, -inf
      %505 = vmax.xlane.f32.xlu0 %v504
      %v506 = vpop.xlane.xlu0 %505
      %v507 = vsub.f32 %v481, %v497
      %v508 = vsub.f32 %v484, %v500
      %v509 = vsub.f32 %v489, %v503
      %v510 = vsub.f32 %v492, %v506
      %v511 = vmul.f32 %v507, 1.442695
      %v512 = vpow.pop %v511
      %v513 = vmul.f32 %v508, 1.442695
      %v514 = vpow.pop %v513
      %v515 = vmul.f32 %v509, 1.442695
      %v516 = vpow.pop %v515
      %v517 = vmul.f32 %v510, 1.442695
      %v518 = vpow.pop %v517
      %v519 = vsel %vm247, %v512, 0.0
      %520 = vadd.xlane.f32.xlu0 %v519
      %v521 = vpop.xlane.xlu0 %520
      %v522 = vsel %vm247, %v514, 0.0
      %523 = vadd.xlane.f32.xlu0 %v522
      %v524 = vpop.xlane.xlu0 %523
      %v525 = vsel %vm247, %v516, 0.0
      %526 = vadd.xlane.f32.xlu0 %v525
      %v527 = vpop.xlane.xlu0 %526
      %v528 = vsel %vm247, %v518, 0.0
      %529 = vadd.xlane.f32.xlu0 %v528
      %v530 = vpop.xlane.xlu0 %529
      %v531 = vrcp.pop %v521
      %v532 = vrcp.pop %v524
      %v533 = vrcp.pop %v527
      %v534 = vrcp.pop %v530
      %v535 = vmul.f32 %v512, %v531
      %v536 = vmul.f32 %v514, %v532
      %v537 = vmul.f32 %v516, %v533
      %v538 = vmul.f32 %v518, %v534
      %v539 = vpack.c.bf16 %v536, %v535
      %v540 = vpack.c.bf16 %v538, %v537
      %541 = vrot.lane.b32.xlu0 %v363, 96
      %v542 = vpop.permute.xlu0 %541
      %543 = vrot.lane.b32.xlu0 %v364, 96
      %v544 = vpop.permute.xlu0 %543
      %v548 = vsel %vm247, %v539, 0
      %v551 = vsel %vm247, %v540, 0
      %553 = vmatprep.subr.bf16.mxu0 0
      %554 = vmatpush1.bf16.msra.mxu0 %v542
      %555 = vmatprep.subr.bf16.mxu0 0
      %556 = vmatpush1.bf16.msra.mxu0 %v544
      %557 = vmatprep.subr.bf16.mxu0 0
      %558 = vmatpush1.bf16.msra.mxu0 0
      %559 = vmatprep.subr.bf16.mxu0 0
      %560 = vmatpush1.bf16.msra.mxu0 0
      %561 = vmatprep.subr.bf16.mxu0 0
      %562 = vmatpush1.bf16.msra.mxu0 0
      %563 = vmatprep.subr.bf16.mxu0 0
      %564 = vmatpush1.bf16.msra.mxu0 0
      %565 = vmatprep.subr.bf16.mxu0 0
      %566 = vmatpush1.bf16.msra.mxu0 0
      %567 = vmatprep.subr.bf16.mxu0 0
      %568 = vmatpush1.bf16.msra.mxu0 0
      %569 = vmatprep.subr.bf16.mxu0 0
      %570 = vmatpush1.bf16.msra.mxu0 0
      %571 = vmatprep.subr.bf16.mxu0 0
      %572 = vmatpush1.bf16.msra.mxu0 0
      %573 = vmatprep.subr.bf16.mxu0 0
      %574 = vmatpush1.bf16.msra.mxu0 0
      %575 = vmatprep.subr.bf16.mxu0 0
      %576 = vmatpush1.bf16.msra.mxu0 0
      %577 = vmatprep.subr.bf16.mxu0 0
      %578 = vmatpush1.bf16.msra.mxu0 0
      %579 = vmatprep.subr.bf16.mxu0 0
      %580 = vmatpush1.bf16.msra.mxu0 0
      %581 = vmatprep.subr.bf16.mxu0 0
      %582 = vmatpush1.bf16.msra.mxu0 0
      %583 = vmatprep.subr.bf16.mxu0 0
      %584 = vmatpush1.bf16.msra.mxu0 0
      %585 = vmatprep.mubr.bf16.mxu0 0
      %586 = vmatmul.mubr.bf16.gmra.mrb[0].mxu0 %v548
      %v587 = vpop.f32.mrb[0].mxu0
      %v588 = vadd.f32 0.0, %v587
      %v589 = vpop.f32.mrb[0].mxu0
      %v590 = vpop.f32.mrb[0].mxu0
      %v591 = vadd.f32 0.0, %v590
      %v592 = vpop.f32.mrb[0].mxu0
      %593 = vmatprep.mubr.bf16.mxu0 0
      %594 = vmatmul.mubr.bf16.gmra.mrb[0].mxu0 %v551
      %v595 = vpop.f32.mrb[0].mxu0
      %v596 = vadd.f32 0.0, %v595
      %v597 = vpop.f32.mrb[0].mxu0
      %v598 = vpop.f32.mrb[0].mxu0
      %v599 = vadd.f32 0.0, %v598
      %v600 = vpop.f32.mrb[0].mxu0
      %601 = vdwg.mxu0
      %v602 = vpack.c.bf16 %v591, %v588
      %v603 = vpack.c.bf16 %v599, %v596
      %606 = vrot.lane.b32.xlu0 %v602, 32
      %v607 = vpop.permute.xlu0 %606
      %608 = vrot.lane.b32.xlu0 %v603, 32
      %v609 = vpop.permute.xlu0 %608
      %vm612 = vcmask 523520
      %613 = vst.msk [vmem:[#allocation2] sm:$0xff] %vm612, %v607
      %614 = vst.msk [vmem:[#allocation2 + $0x8] sm:$0xff] %vm612, %v609
      %615 = vrot.lane.b32.xlu0 %v239, 64
      %v616 = vpop.permute.xlu0 %615
      %617 = vrot.lane.b32.xlu0 %v240, 64
      %v618 = vpop.permute.xlu0 %617
      %619 = vrot.lane.b32.xlu0 %v245, 64
      %v620 = vpop.permute.xlu0 %619
      %621 = vrot.lane.b32.xlu0 %v246, 64
      %v622 = vpop.permute.xlu0 %621
      %v624 = vsel %vm247, %v616, 0
      %v627 = vsel %vm247, %v618, 0
      %v630 = vsel %vm247, %v620, 0
      %v633 = vsel %vm247, %v622, 0
      %635 = vmatprep.subr.bf16.mxu0 0
      %636 = vmatpush1.bf16.xpose.msra.mxu0 %v630
      %637 = vmatprep.subr.bf16.mxu0 0
      %638 = vmatpush1.bf16.xpose.msra.mxu0 %v633
      %639 = vmatprep.subr.bf16.mxu0 0
      %640 = vmatpush1.bf16.xpose.msra.mxu0 0
      %641 = vmatprep.subr.bf16.mxu0 0
      %642 = vmatpush1.bf16.xpose.msra.mxu0 0
      %643 = vmatprep.subr.bf16.mxu0 0
      %644 = vmatpush1.bf16.xpose.msra.mxu0 0
      %645 = vmatprep.subr.bf16.mxu0 0
      %646 = vmatpush1.bf16.xpose.msra.mxu0 0
      %647 = vmatprep.subr.bf16.mxu0 0
      %648 = vmatpush1.bf16.xpose.msra.mxu0 0
      %649 = vmatprep.subr.bf16.mxu0 0
      %650 = vmatpush1.bf16.xpose.msra.mxu0 0
      %651 = vmatprep.subr.bf16.mxu0 0
      %652 = vmatpush1.bf16.xpose.msra.mxu0 0
      %653 = vmatprep.subr.bf16.mxu0 0
      %654 = vmatpush1.bf16.xpose.msra.mxu0 0
      %655 = vmatprep.subr.bf16.mxu0 0
      %656 = vmatpush1.bf16.xpose.msra.mxu0 0
      %657 = vmatprep.subr.bf16.mxu0 0
      %658 = vmatpush1.bf16.xpose.msra.mxu0 0
      %659 = vmatprep.subr.bf16.mxu0 0
      %660 = vmatpush1.bf16.xpose.msra.mxu0 0
      %661 = vmatprep.subr.bf16.mxu0 0
      %662 = vmatpush1.bf16.xpose.msra.mxu0 0
      %663 = vmatprep.subr.bf16.mxu0 0
      %664 = vmatpush1.bf16.xpose.msra.mxu0 0
      %665 = vmatprep.subr.bf16.mxu0 0
      %666 = vmatpush1.bf16.xpose.msra.mxu0 0
      %667 = vmatprep.mubr.bf16.mxu0 0
      %668 = vmatmul.mubr.bf16.gmra.mrb[0].mxu0 %v624
      %v669 = vpop.f32.mrb[0].mxu0
      %v670 = vadd.f32 %v230, %v669
      %v671 = vpop.f32.mrb[0].mxu0
      %v672 = vpop.f32.mrb[0].mxu0
      %v673 = vadd.f32 %v230, %v672
      %v674 = vpop.f32.mrb[0].mxu0
      %675 = vmatprep.mubr.bf16.mxu0 0
      %676 = vmatmul.mubr.bf16.gmra.mrb[0].mxu0 %v627
      %v677 = vpop.f32.mrb[0].mxu0
      %v678 = vadd.f32 %v230, %v677
      %v679 = vpop.f32.mrb[0].mxu0
      %v680 = vpop.f32.mrb[0].mxu0
      %v681 = vadd.f32 %v230, %v680
      %v682 = vpop.f32.mrb[0].mxu0
      %683 = vdwg.mxu0
      %v684 = vsel %vm247, %v670, -inf
      %685 = vmax.xlane.f32.xlu0 %v684
      %v686 = vpop.xlane.xlu0 %685
      %v687 = vsel %vm247, %v673, -inf
      %688 = vmax.xlane.f32.xlu0 %v687
      %v689 = vpop.xlane.xlu0 %688
      %v690 = vsel %vm247, %v678, -inf
      %691 = vmax.xlane.f32.xlu0 %v690
      %v692 = vpop.xlane.xlu0 %691
      %v693 = vsel %vm247, %v681, -inf
      %694 = vmax.xlane.f32.xlu0 %v693
      %v695 = vpop.xlane.xlu0 %694
      %v696 = vsub.f32 %v670, %v686
      %v697 = vsub.f32 %v673, %v689
      %v698 = vsub.f32 %v678, %v692
      %v699 = vsub.f32 %v681, %v695
      %v700 = vmul.f32 %v696, 1.442695
      %v701 = vpow.pop %v700
      %v702 = vmul.f32 %v697, 1.442695
      %v703 = vpow.pop %v702
      %v704 = vmul.f32 %v698, 1.442695
      %v705 = vpow.pop %v704
      %v706 = vmul.f32 %v699, 1.442695
      %v707 = vpow.pop %v706
      %v708 = vsel %vm247, %v701, 0.0
      %709 = vadd.xlane.f32.xlu0 %v708
      %v710 = vpop.xlane.xlu0 %709
      %v711 = vsel %vm247, %v703, 0.0
      %712 = vadd.xlane.f32.xlu0 %v711
      %v713 = vpop.xlane.xlu0 %712
      %v714 = vsel %vm247, %v705, 0.0
      %715 = vadd.xlane.f32.xlu0 %v714
      %v716 = vpop.xlane.xlu0 %715
      %v717 = vsel %vm247, %v707, 0.0
      %718 = vadd.xlane.f32.xlu0 %v717
      %v719 = vpop.xlane.xlu0 %718
      %v720 = vrcp.pop %v710
      %v721 = vrcp.pop %v713
      %v722 = vrcp.pop %v716
      %v723 = vrcp.pop %v719
      %v724 = vmul.f32 %v701, %v720
      %v725 = vmul.f32 %v703, %v721
      %v726 = vmul.f32 %v705, %v722
      %v727 = vmul.f32 %v707, %v723
      %v728 = vpack.c.bf16 %v725, %v724
      %v729 = vpack.c.bf16 %v727, %v726
      %730 = vrot.lane.b32.xlu0 %v363, 64
      %v731 = vpop.permute.xlu0 %730
      %732 = vrot.lane.b32.xlu0 %v364, 64
      %v733 = vpop.permute.xlu0 %732
      %v737 = vsel %vm247, %v728, 0
      %v740 = vsel %vm247, %v729, 0
      %742 = vmatprep.subr.bf16.mxu0 0
      %743 = vmatpush1.bf16.msra.mxu0 %v731
      %744 = vmatprep.subr.bf16.mxu0 0
      %745 = vmatpush1.bf16.msra.mxu0 %v733
      %746 = vmatprep.subr.bf16.mxu0 0
      %747 = vmatpush1.bf16.msra.mxu0 0
      %748 = vmatprep.subr.bf16.mxu0 0
      %749 = vmatpush1.bf16.msra.mxu0 0
      %750 = vmatprep.subr.bf16.mxu0 0
      %751 = vmatpush1.bf16.msra.mxu0 0
      %752 = vmatprep.subr.bf16.mxu0 0
      %753 = vmatpush1.bf16.msra.mxu0 0
      %754 = vmatprep.subr.bf16.mxu0 0
      %755 = vmatpush1.bf16.msra.mxu0 0
      %756 = vmatprep.subr.bf16.mxu0 0
      %757 = vmatpush1.bf16.msra.mxu0 0
      %758 = vmatprep.subr.bf16.mxu0 0
      %759 = vmatpush1.bf16.msra.mxu0 0
      %760 = vmatprep.subr.bf16.mxu0 0
      %761 = vmatpush1.bf16.msra.mxu0 0
      %762 = vmatprep.subr.bf16.mxu0 0
      %763 = vmatpush1.bf16.msra.mxu0 0
      %764 = vmatprep.subr.bf16.mxu0 0
      %765 = vmatpush1.bf16.msra.mxu0 0
      %766 = vmatprep.subr.bf16.mxu0 0
      %767 = vmatpush1.bf16.msra.mxu0 0
      %768 = vmatprep.subr.bf16.mxu0 0
      %769 = vmatpush1.bf16.msra.mxu0 0
      %770 = vmatprep.subr.bf16.mxu0 0
      %771 = vmatpush1.bf16.msra.mxu0 0
      %772 = vmatprep.subr.bf16.mxu0 0
      %773 = vmatpush1.bf16.msra.mxu0 0
      %774 = vmatprep.mubr.bf16.mxu0 0
      %775 = vmatmul.mubr.bf16.gmra.mrb[0].mxu0 %v737
      %v776 = vpop.f32.mrb[0].mxu0
      %v777 = vadd.f32 0.0, %v776
      %v778 = vpop.f32.mrb[0].mxu0
      %v779 = vpop.f32.mrb[0].mxu0
      %v780 = vadd.f32 0.0, %v779
      %v781 = vpop.f32.mrb[0].mxu0
      %782 = vmatprep.mubr.bf16.mxu0 0
      %783 = vmatmul.mubr.bf16.gmra.mrb[0].mxu0 %v740
      %v784 = vpop.f32.mrb[0].mxu0
      %v785 = vadd.f32 0.0, %v784
      %v786 = vpop.f32.mrb[0].mxu0
      %v787 = vpop.f32.mrb[0].mxu0
      %v788 = vadd.f32 0.0, %v787
      %v789 = vpop.f32.mrb[0].mxu0
      %790 = vdwg.mxu0
      %v791 = vpack.c.bf16 %v780, %v777
      %v792 = vpack.c.bf16 %v788, %v785
      %795 = vrot.lane.b32.xlu0 %v791, 64
      %v796 = vpop.permute.xlu0 %795
      %797 = vrot.lane.b32.xlu0 %v792, 64
      %v798 = vpop.permute.xlu0 %797
      %vm801 = vcmask 785920
      %802 = vst.msk [vmem:[#allocation2] sm:$0xff] %vm801, %v796
      %803 = vst.msk [vmem:[#allocation2 + $0x8] sm:$0xff] %vm801, %v798
      %804 = vrot.lane.b32.xlu0 %v239, 32
      %v805 = vpop.permute.xlu0 %804
      %806 = vrot.lane.b32.xlu0 %v240, 32
      %v807 = vpop.permute.xlu0 %806
      %808 = vrot.lane.b32.xlu0 %v245, 32
      %v809 = vpop.permute.xlu0 %808
      %810 = vrot.lane.b32.xlu0 %v246, 32
      %v811 = vpop.permute.xlu0 %810
      %v813 = vsel %vm247, %v805, 0
      %v816 = vsel %vm247, %v807, 0
      %v819 = vsel %vm247, %v809, 0
      %v822 = vsel %vm247, %v811, 0
      %824 = vmatprep.subr.bf16.mxu0 0
      %825 = vmatpush1.bf16.xpose.msra.mxu0 %v819
      %826 = vmatprep.subr.bf16.mxu0 0
      %827 = vmatpush1.bf16.xpose.msra.mxu0 %v822
      %828 = vmatprep.subr.bf16.mxu0 0
      %829 = vmatpush1.bf16.xpose.msra.mxu0 0
      %830 = vmatprep.subr.bf16.mxu0 0
      %831 = vmatpush1.bf16.xpose.msra.mxu0 0
      %832 = vmatprep.subr.bf16.mxu0 0
      %833 = vmatpush1.bf16.xpose.msra.mxu0 0
      %834 = vmatprep.subr.bf16.mxu0 0
      %835 = vmatpush1.bf16.xpose.msra.mxu0 0
      %836 = vmatprep.subr.bf16.mxu0 0
      %837 = vmatpush1.bf16.xpose.msra.mxu0 0
      %838 = vmatprep.subr.bf16.mxu0 0
      %839 = vmatpush1.bf16.xpose.msra.mxu0 0
      %840 = vmatprep.subr.bf16.mxu0 0
      %841 = vmatpush1.bf16.xpose.msra.mxu0 0
      %842 = vmatprep.subr.bf16.mxu0 0
      %843 = vmatpush1.bf16.xpose.msra.mxu0 0
      %844 = vmatprep.subr.bf16.mxu0 0
      %845 = vmatpush1.bf16.xpose.msra.mxu0 0
      %846 = vmatprep.subr.bf16.mxu0 0
      %847 = vmatpush1.bf16.xpose.msra.mxu0 0
      %848 = vmatprep.subr.bf16.mxu0 0
      %849 = vmatpush1.bf16.xpose.msra.mxu0 0
      %850 = vmatprep.subr.bf16.mxu0 0
      %851 = vmatpush1.bf16.xpose.msra.mxu0 0
      %852 = vmatprep.subr.bf16.mxu0 0
      %853 = vmatpush1.bf16.xpose.msra.mxu0 0
      %854 = vmatprep.subr.bf16.mxu0 0
      %855 = vmatpush1.bf16.xpose.msra.mxu0 0
      %856 = vmatprep.mubr.bf16.mxu0 0
      %857 = vmatmul.mubr.bf16.gmra.mrb[0].mxu0 %v813
      %v858 = vpop.f32.mrb[0].mxu0
      %v859 = vadd.f32 %v230, %v858
      %v860 = vpop.f32.mrb[0].mxu0
      %v861 = vpop.f32.mrb[0].mxu0
      %v862 = vadd.f32 %v230, %v861
      %v863 = vpop.f32.mrb[0].mxu0
      %864 = vmatprep.mubr.bf16.mxu0 0
      %865 = vmatmul.mubr.bf16.gmra.mrb[0].mxu0 %v816
      %v866 = vpop.f32.mrb[0].mxu0
      %v867 = vadd.f32 %v230, %v866
      %v868 = vpop.f32.mrb[0].mxu0
      %v869 = vpop.f32.mrb[0].mxu0
      %v870 = vadd.f32 %v230, %v869
      %v871 = vpop.f32.mrb[0].mxu0
      %872 = vdwg.mxu0
      %v873 = vsel %vm247, %v859, -inf
      %874 = vmax.xlane.f32.xlu0 %v873
      %v875 = vpop.xlane.xlu0 %874
      %v876 = vsel %vm247, %v862, -inf
      %877 = vmax.xlane.f32.xlu0 %v876
      %v878 = vpop.xlane.xlu0 %877
      %v879 = vsel %vm247, %v867, -inf
      %880 = vmax.xlane.f32.xlu0 %v879
      %v881 = vpop.xlane.xlu0 %880
      %v882 = vsel %vm247, %v870, -inf
      %883 = vmax.xlane.f32.xlu0 %v882
      %v884 = vpop.xlane.xlu0 %883
      %v885 = vsub.f32 %v859, %v875
      %v886 = vsub.f32 %v862, %v878
      %v887 = vsub.f32 %v867, %v881
      %v888 = vsub.f32 %v870, %v884
      %v889 = vmul.f32 %v885, 1.442695
      %v890 = vpow.pop %v889
      %v891 = vmul.f32 %v886, 1.442695
      %v892 = vpow.pop %v891
      %v893 = vmul.f32 %v887, 1.442695
      %v894 = vpow.pop %v893
      %v895 = vmul.f32 %v888, 1.442695
      %v896 = vpow.pop %v895
      %v897 = vsel %vm247, %v890, 0.0
      %898 = vadd.xlane.f32.xlu0 %v897
      %v899 = vpop.xlane.xlu0 %898
      %v900 = vsel %vm247, %v892, 0.0
      %901 = vadd.xlane.f32.xlu0 %v900
      %v902 = vpop.xlane.xlu0 %901
      %v903 = vsel %vm247, %v894, 0.0
      %904 = vadd.xlane.f32.xlu0 %v903
      %v905 = vpop.xlane.xlu0 %904
      %v906 = vsel %vm247, %v896, 0.0
      %907 = vadd.xlane.f32.xlu0 %v906
      %v908 = vpop.xlane.xlu0 %907
      %v909 = vrcp.pop %v899
      %v910 = vrcp.pop %v902
      %v911 = vrcp.pop %v905
      %v912 = vrcp.pop %v908
      %v913 = vmul.f32 %v890, %v909
      %v914 = vmul.f32 %v892, %v910
      %v915 = vmul.f32 %v894, %v911
      %v916 = vmul.f32 %v896, %v912
      %v917 = vpack.c.bf16 %v914, %v913
      %v918 = vpack.c.bf16 %v916, %v915
      %919 = vrot.lane.b32.xlu0 %v363, 32
      %v920 = vpop.permute.xlu0 %919
      %921 = vrot.lane.b32.xlu0 %v364, 32
      %v922 = vpop.permute.xlu0 %921
      %v926 = vsel %vm247, %v917, 0
      %v929 = vsel %vm247, %v918, 0
      %931 = vmatprep.subr.bf16.mxu0 0
      %932 = vmatpush1.bf16.msra.mxu0 %v920
      %933 = vmatprep.subr.bf16.mxu0 0
      %934 = vmatpush1.bf16.msra.mxu0 %v922
      %935 = vmatprep.subr.bf16.mxu0 0
      %936 = vmatpush1.bf16.msra.mxu0 0
      %937 = vmatprep.subr.bf16.mxu0 0
      %938 = vmatpush1.bf16.msra.mxu0 0
      %939 = vmatprep.subr.bf16.mxu0 0
      %940 = vmatpush1.bf16.msra.mxu0 0
      %941 = vmatprep.subr.bf16.mxu0 0
      %942 = vmatpush1.bf16.msra.mxu0 0
      %943 = vmatprep.subr.bf16.mxu0 0
      %944 = vmatpush1.bf16.msra.mxu0 0
      %945 = vmatprep.subr.bf16.mxu0 0
      %946 = vmatpush1.bf16.msra.mxu0 0
      %947 = vmatprep.subr.bf16.mxu0 0
      %948 = vmatpush1.bf16.msra.mxu0 0
      %949 = vmatprep.subr.bf16.mxu0 0
      %950 = vmatpush1.bf16.msra.mxu0 0
      %951 = vmatprep.subr.bf16.mxu0 0
      %952 = vmatpush1.bf16.msra.mxu0 0
      %953 = vmatprep.subr.bf16.mxu0 0
      %954 = vmatpush1.bf16.msra.mxu0 0
      %955 = vmatprep.subr.bf16.mxu0 0
      %956 = vmatpush1.bf16.msra.mxu0 0
      %957 = vmatprep.subr.bf16.mxu0 0
      %958 = vmatpush1.bf16.msra.mxu0 0
      %959 = vmatprep.subr.bf16.mxu0 0
      %960 = vmatpush1.bf16.msra.mxu0 0
      %961 = vmatprep.subr.bf16.mxu0 0
      %962 = vmatpush1.bf16.msra.mxu0 0
      %963 = vmatprep.mubr.bf16.mxu0 0
      %964 = vmatmul.mubr.bf16.gmra.mrb[0].mxu0 %v926
      %v965 = vpop.f32.mrb[0].mxu0
      %v966 = vadd.f32 0.0, %v965
      %v967 = vpop.f32.mrb[0].mxu0
      %v968 = vpop.f32.mrb[0].mxu0
      %v969 = vadd.f32 0.0, %v968
      %v970 = vpop.f32.mrb[0].mxu0
      %971 = vmatprep.mubr.bf16.mxu0 0
      %972 = vmatmul.mubr.bf16.gmra.mrb[0].mxu0 %v929
      %v973 = vpop.f32.mrb[0].mxu0
      %v974 = vadd.f32 0.0, %v973
      %v975 = vpop.f32.mrb[0].mxu0
      %v976 = vpop.f32.mrb[0].mxu0
      %v977 = vadd.f32 0.0, %v976
      %v978 = vpop.f32.mrb[0].mxu0
      %979 = vdwg.mxu0
      %v980 = vpack.c.bf16 %v969, %v966
      %v981 = vpack.c.bf16 %v977, %v974
      %984 = vrot.lane.b32.xlu0 %v980, 96
      %v985 = vpop.permute.xlu0 %984
      %986 = vrot.lane.b32.xlu0 %v981, 96
      %v987 = vpop.permute.xlu0 %986
      %vm990 = vcmask 1048320
      %991 = vst.msk [vmem:[#allocation2] sm:$0xff] %vm990, %v985
      %992 = vst.msk [vmem:[#allocation2 + $0x8] sm:$0xff] %vm990, %v987
      %v993 = vld [vmem:[#allocation2] sm:$0xff]
      %v994 = vld [vmem:[#allocation2 + $0x8] sm:$0xff]
      %v995 = vld [vmem:[%s1] sm:$0xf]
      %v996 = vld [vmem:[%s1 + $0x4] sm:$0xf]
      %v997 = vld [vmem:[%s1 + $0x8] sm:$0xf]
      %v998 = vld [vmem:[%s1 + $0xc] sm:$0xf]
      %v999 = vld [vmem:[%s1 + $0x10] sm:$0xf]
      %v1000 = vld [vmem:[%s1 + $0x14] sm:$0xf]
      %v1001 = vld [vmem:[%s1 + $0x18] sm:$0xf]
      %v1002 = vld [vmem:[%s1 + $0x1c] sm:$0xf]
      %v1003 = vld [vmem:[%s1 + $0x20] sm:$0xf]
      %v1004 = vld [vmem:[%s1 + $0x24] sm:$0xf]
      %v1005 = vld [vmem:[%s1 + $0x28] sm:$0xf]
      %v1006 = vld [vmem:[%s1 + $0x2c] sm:$0xf]
      %v1007 = vld [vmem:[%s1 + $0x30] sm:$0xf]
      %v1008 = vld [vmem:[%s1 + $0x34] sm:$0xf]
      %v1009 = vld [vmem:[%s1 + $0x38] sm:$0xf]
      %v1010 = vld [vmem:[%s1 + $0x3c] sm:$0xf]
      %v1011 = vld [vmem:[%s2] sm:$0x1]
      %v1013 = vlaneseq
      %v1014 = vshrl.u32 %v1013, 7
      %v1015 = vsub.s32 0, %v1014
      %v1016 = vrot.slane %v1011, %v1015
      %v1034 = vunpack.c.l.b16 %v995
      %v1035 = vunpack.c.l.b16 %v996
      %v1036 = vunpack.c.l.b16 %v997
      %v1037 = vunpack.c.l.b16 %v998
      %v1038 = vunpack.c.l.b16 %v999
      %v1039 = vunpack.c.l.b16 %v1000
      %v1040 = vunpack.c.l.b16 %v1001
      %v1041 = vunpack.c.l.b16 %v1002
      %v1042 = vunpack.c.l.b16 %v1003
      %v1043 = vunpack.c.l.b16 %v1004
      %v1044 = vunpack.c.l.b16 %v1005
      %v1045 = vunpack.c.l.b16 %v1006
      %v1046 = vunpack.c.l.b16 %v1007
      %v1047 = vunpack.c.l.b16 %v1008
      %v1048 = vunpack.c.l.b16 %v1009
      %v1049 = vunpack.c.l.b16 %v1010
      %v1050 = vpack.c.b16 %v1035, %v1034
      %v1051 = vpack.c.b16 %v1037, %v1036
      %v1052 = vpack.c.b16 %v1039, %v1038
      %v1053 = vpack.c.b16 %v1041, %v1040
      %v1054 = vpack.c.b16 %v1043, %v1042
      %v1055 = vpack.c.b16 %v1045, %v1044
      %v1056 = vpack.c.b16 %v1047, %v1046
      %v1057 = vpack.c.b16 %v1049, %v1048
      %1066 = vmatprep.subr.bf16.mxu0 0
      %1067 = vmatpush1.bf16.msra.mxu0 %v1050
      %1068 = vmatprep.subr.bf16.mxu0 0
      %1069 = vmatpush1.bf16.msra.mxu0 %v1051
      %1070 = vmatprep.subr.bf16.mxu0 0
      %1071 = vmatpush1.bf16.msra.mxu0 %v1052
      %1072 = vmatprep.subr.bf16.mxu0 0
      %1073 = vmatpush1.bf16.msra.mxu0 %v1053
      %1074 = vmatprep.subr.bf16.mxu0 0
      %1075 = vmatpush1.bf16.msra.mxu0 %v1054
      %1076 = vmatprep.subr.bf16.mxu0 0
      %1077 = vmatpush1.bf16.msra.mxu0 %v1055
      %1078 = vmatprep.subr.bf16.mxu0 0
      %1079 = vmatpush1.bf16.msra.mxu0 %v1056
      %1080 = vmatprep.subr.bf16.mxu0 0
      %1081 = vmatpush1.bf16.msra.mxu0 %v1057
      %1082 = vmatprep.subr.bf16.mxu0 0
      %1083 = vmatpush1.bf16.msra.mxu0 0
      %1084 = vmatprep.subr.bf16.mxu0 0
      %1085 = vmatpush1.bf16.msra.mxu0 0
      %1086 = vmatprep.subr.bf16.mxu0 0
      %1087 = vmatpush1.bf16.msra.mxu0 0
      %1088 = vmatprep.subr.bf16.mxu0 0
      %1089 = vmatpush1.bf16.msra.mxu0 0
      %1090 = vmatprep.subr.bf16.mxu0 0
      %1091 = vmatpush1.bf16.msra.mxu0 0
      %1092 = vmatprep.subr.bf16.mxu0 0
      %1093 = vmatpush1.bf16.msra.mxu0 0
      %1094 = vmatprep.subr.bf16.mxu0 0
      %1095 = vmatpush1.bf16.msra.mxu0 0
      %1096 = vmatprep.subr.bf16.mxu0 0
      %1097 = vmatpush1.bf16.msra.mxu0 0
      %1098 = vmatprep.mubr.bf16.mxu0 0
      %1099 = vmatmul.mubr.bf16.gmra.mrb[0].mxu0 %v993
      %v1100 = vpop.f32.mrb[0].mxu0
      %v1101 = vadd.f32 %v1016, %v1100
      %v1102 = vpop.f32.mrb[0].mxu0
      %v1103 = vpop.f32.mrb[0].mxu0
      %v1104 = vadd.f32 %v1016, %v1103
      %v1105 = vpop.f32.mrb[0].mxu0
      %1106 = vmatprep.mubr.bf16.mxu0 0
      %1107 = vmatmul.mubr.bf16.gmra.mrb[0].mxu0 %v994
      %v1108 = vpop.f32.mrb[0].mxu0
      %v1109 = vadd.f32 %v1016, %v1108
      %v1110 = vpop.f32.mrb[0].mxu0
      %v1111 = vpop.f32.mrb[0].mxu0
      %v1112 = vadd.f32 %v1016, %v1111
      %v1113 = vpop.f32.mrb[0].mxu0
      %1114 = vdwg.mxu0
      %v1115 = vld [vmem:[%s212] sm:$0xf]
      %v1116 = vld [vmem:[%s212 + $0x4] sm:$0xf]
      %v1117 = vld [vmem:[%s212 + $0x8] sm:$0xf]
      %v1118 = vld [vmem:[%s212 + $0xc] sm:$0xf]
      %v1119 = vunpack.c.l.bf16 %v1115
      %v1120 = vunpack.c.l.bf16 %v1116
      %v1121 = vunpack.c.l.bf16 %v1117
      %v1122 = vunpack.c.l.bf16 %v1118
      %v1123 = vadd.f32 %v1101, %v1119
      %v1124 = vadd.f32 %v1104, %v1120
      %v1125 = vadd.f32 %v1109, %v1121
      %v1126 = vadd.f32 %v1112, %v1122
      %v1127 = vpack.c.bf16 %v1124, %v1123
      %v1128 = vpack.c.bf16 %v1126, %v1125
      %v1131 = vunpack.c.l.b16 %v1127
      %v1132 = vunpack.c.h.b16 %v1127
      %v1133 = vunpack.c.l.b16 %v1128
      %v1134 = vunpack.c.h.b16 %v1128
      %v1135 = vpack.c.b16 %v1131, %v1131
      %v1136 = vpack.c.b16 %v1132, %v1132
      %v1137 = vpack.c.b16 %v1133, %v1133
      %v1138 = vpack.c.b16 %v1134, %v1134
      %1143 = vst [vmem:[%s217] sm:$0xf] %v1135
      %1144 = vst [vmem:[%s217 + $0x4] sm:$0xf] %v1136
      %1145 = vst [vmem:[%s217 + $0x8] sm:$0xf] %v1137
      %1146 = vst [vmem:[%s217 + $0xc] sm:$0xf] %v1138
      %p1147 = scmp.lt.s32.totalorder %s15, 1
      %s1148 = scalar_select %p1147, %s15, 1
      %s1149 = smul.addr %s1148, 4
      %s1150 = smul.addr %s1149, 4
      %s1151 = scalar_lea.vmem %s4, %s1150
      // Predicated region
      $region37: #{vit_forward.11} parent=35 // pred_check
        %p1152 = pneg %p127
      $region38: #{vit_forward.11} parent=35 // pred_check_branch
        %1154 = sbr.rel (%p1152) target = $region40
      $region39: #{vit_forward.11} parent=35 // pred_region
        _
      $region40: #{vit_forward.11} parent=35 // pred_fallthru
        _
    $region36: #{vit_forward.11} parent=5 // pred_fallthru
      _
    %p1155 = scmp.le.s32.totalorder 2, %s10
    // Predicated region
    $region41: #{vit_forward.11} parent=5 // pred_check
      %p1156 = pneg %p1155
    $region42: #{vit_forward.11} parent=5 // pred_check_branch
      %1158 = sbr.rel (%p1156) target = $region44
    $region43: #{vit_forward.11} parent=5 // pred_region
      %s1159 = ssub.s32 %s10, 2
      // Predicated region
      $region45: #{vit_forward.11} parent=43 // pred_check
        %p1160 = pneg %p133
      $region46: #{vit_forward.11} parent=43 // pred_check_branch
        %1162 = sbr.rel (%p1160) target = $region48
      $region47: #{vit_forward.11} parent=43 // pred_region
        %p1163 = scmp.lt.s32.totalorder %s16, 1
        %s1164 = scalar_select %p1163, %s16, 1
        %s1165 = smul.addr %s1164, 4
        %s1166 = smul.addr %s1165, 4
        %s1167 = scalar_lea.vmem %s4, %s1166
      $region48: #{vit_forward.11} parent=43 // pred_fallthru
        _
    $region44: #{vit_forward.11} parent=5 // pred_fallthru
      _
  $region6: #{vit_forward.11} parent=0 // loop_footer
    %s14 = sadd.s32 1, %s10
  $region7: #{vit_forward.11} parent=0 // loop_footer_branch
    %9 = sbr.rel target = $region3
  $region8: #{vit_forward.11} parent=0 // loop_exit
    _

// kernel: vit_forward.13
$region0: #{vit_forward.13}
  #allocation0 [shape = 'u32[]', space=smem, size = 0x4, offset = 0x4, fixed_abs, tag = 'smem constant byte address 0x4 - core index']
  #allocation1 [shape = 'u32[144,128]{1,0:T(1,128)}', space=vmem, size = 0x12000, scoped, tag = 'internal scratch']
  %s0 = inlined_call_operand.vmem [shape: bf16[64,512], index: 0, kind: input, shape index: {}]
  %s1 = inlined_call_operand.vmem [shape: bf16[512,128], index: 1, kind: input, shape index: {}]
  %s2 = inlined_call_operand.vmem [shape: f32[1,128], index: 2, kind: input, shape index: {}]
  %s3 = inlined_call_operand.vmem [shape: bf16[64,128], index: 3, kind: input, shape index: {}]
  %s4 = inlined_call_operand.vmem [shape: bf16[64,128], index: 4, kind: output, shape index: {}]
  %s5 = sld [smem:[#allocation0]]
  $region26: #{vit_forward.13} parent=0
    _
  %s7 = ssub.s32 1, %s5
  %s8 = scalar_select 0, %s7, %s5
  // Predicated region
  $region2: #{vit_forward.13} parent=0 // pred_check
    _
  $region3: #{vit_forward.13} parent=0 // pred_check_branch
    %10 = sbr.rel (0) target = $region5
  $region4: #{vit_forward.13} parent=0 // pred_region
    _
  $region5: #{vit_forward.13} parent=0 // pred_fallthru
    _
  // Predicated region
  $region6: #{vit_forward.13} parent=0 // pred_check
    _
  $region7: #{vit_forward.13} parent=0 // pred_check_branch
    %12 = sbr.rel (0) target = $region9
  $region8: #{vit_forward.13} parent=0 // pred_region
    _
  $region9: #{vit_forward.13} parent=0 // pred_fallthru
    _
  // Predicated region
  $region10: #{vit_forward.13} parent=0 // pred_check
    _
  $region11: #{vit_forward.13} parent=0 // pred_check_branch
    %14 = sbr.rel (0) target = $region13
  $region12: #{vit_forward.13} parent=0 // pred_region
    _
  $region13: #{vit_forward.13} parent=0 // pred_fallthru
    _
  // Predicated region
  $region14: #{vit_forward.13} parent=0 // pred_check
    _
  $region15: #{vit_forward.13} parent=0 // pred_check_branch
    %16 = sbr.rel (0) target = $region17
  $region16: #{vit_forward.13} parent=0 // pred_region
    _
  $region17: #{vit_forward.13} parent=0 // pred_fallthru
    _
  %v18 = vld [vmem:[%s0] sm:$0xff]
  %v19 = vld [vmem:[%s0 + $0x8] sm:$0xff]
  %v20 = vld [vmem:[%s0 + $0x10] sm:$0xff]
  %v21 = vld [vmem:[%s0 + $0x18] sm:$0xff]
  %v22 = vld [vmem:[%s0 + $0x20] sm:$0xff]
  %v23 = vld [vmem:[%s0 + $0x28] sm:$0xff]
  %v24 = vld [vmem:[%s0 + $0x30] sm:$0xff]
  %v25 = vld [vmem:[%s0 + $0x38] sm:$0xff]
  %v26 = vld [vmem:[%s0 + $0x40] sm:$0xff]
  %v27 = vld [vmem:[%s0 + $0x48] sm:$0xff]
  %v28 = vld [vmem:[%s0 + $0x50] sm:$0xff]
  %v29 = vld [vmem:[%s0 + $0x58] sm:$0xff]
  %v30 = vld [vmem:[%s0 + $0x60] sm:$0xff]
  %v31 = vld [vmem:[%s0 + $0x68] sm:$0xff]
  %v32 = vld [vmem:[%s0 + $0x70] sm:$0xff]
  %v33 = vld [vmem:[%s0 + $0x78] sm:$0xff]
  %v34 = vld [vmem:[%s1] sm:$0xf]
  %v35 = vld [vmem:[%s1 + $0x4] sm:$0xf]
  %v36 = vld [vmem:[%s1 + $0x8] sm:$0xf]
  %v37 = vld [vmem:[%s1 + $0xc] sm:$0xf]
  %v38 = vld [vmem:[%s1 + $0x10] sm:$0xf]
  %v39 = vld [vmem:[%s1 + $0x14] sm:$0xf]
  %v40 = vld [vmem:[%s1 + $0x18] sm:$0xf]
  %v41 = vld [vmem:[%s1 + $0x1c] sm:$0xf]
  %v42 = vld [vmem:[%s1 + $0x20] sm:$0xf]
  %v43 = vld [vmem:[%s1 + $0x24] sm:$0xf]
  %v44 = vld [vmem:[%s1 + $0x28] sm:$0xf]
  %v45 = vld [vmem:[%s1 + $0x2c] sm:$0xf]
  %v46 = vld [vmem:[%s1 + $0x30] sm:$0xf]
  %v47 = vld [vmem:[%s1 + $0x34] sm:$0xf]
  %v48 = vld [vmem:[%s1 + $0x38] sm:$0xf]
  %v49 = vld [vmem:[%s1 + $0x3c] sm:$0xf]
  %v50 = vld [vmem:[%s1 + $0x40] sm:$0xf]
  %v51 = vld [vmem:[%s1 + $0x44] sm:$0xf]
  %v52 = vld [vmem:[%s1 + $0x48] sm:$0xf]
  %v53 = vld [vmem:[%s1 + $0x4c] sm:$0xf]
  %v54 = vld [vmem:[%s1 + $0x50] sm:$0xf]
  %v55 = vld [vmem:[%s1 + $0x54] sm:$0xf]
  %v56 = vld [vmem:[%s1 + $0x58] sm:$0xf]
  %v57 = vld [vmem:[%s1 + $0x5c] sm:$0xf]
  %v58 = vld [vmem:[%s1 + $0x60] sm:$0xf]
  %v59 = vld [vmem:[%s1 + $0x64] sm:$0xf]
  %v60 = vld [vmem:[%s1 + $0x68] sm:$0xf]
  %v61 = vld [vmem:[%s1 + $0x6c] sm:$0xf]
  %v62 = vld [vmem:[%s1 + $0x70] sm:$0xf]
  %v63 = vld [vmem:[%s1 + $0x74] sm:$0xf]
  %v64 = vld [vmem:[%s1 + $0x78] sm:$0xf]
  %v65 = vld [vmem:[%s1 + $0x7c] sm:$0xf]
  %v66 = vld [vmem:[%s1 + $0x80] sm:$0xf]
  %v67 = vld [vmem:[%s1 + $0x84] sm:$0xf]
  %v68 = vld [vmem:[%s1 + $0x88] sm:$0xf]
  %v69 = vld [vmem:[%s1 + $0x8c] sm:$0xf]
  %v70 = vld [vmem:[%s1 + $0x90] sm:$0xf]
  %v71 = vld [vmem:[%s1 + $0x94] sm:$0xf]
  %v72 = vld [vmem:[%s1 + $0x98] sm:$0xf]
  %v73 = vld [vmem:[%s1 + $0x9c] sm:$0xf]
  %v74 = vld [vmem:[%s1 + $0xa0] sm:$0xf]
  %v75 = vld [vmem:[%s1 + $0xa4] sm:$0xf]
  %v76 = vld [vmem:[%s1 + $0xa8] sm:$0xf]
  %v77 = vld [vmem:[%s1 + $0xac] sm:$0xf]
  %v78 = vld [vmem:[%s1 + $0xb0] sm:$0xf]
  %v79 = vld [vmem:[%s1 + $0xb4] sm:$0xf]
  %v80 = vld [vmem:[%s1 + $0xb8] sm:$0xf]
  %v81 = vld [vmem:[%s1 + $0xbc] sm:$0xf]
  %v82 = vld [vmem:[%s1 + $0xc0] sm:$0xf]
  %v83 = vld [vmem:[%s1 + $0xc4] sm:$0xf]
  %v84 = vld [vmem:[%s1 + $0xc8] sm:$0xf]
  %v85 = vld [vmem:[%s1 + $0xcc] sm:$0xf]
  %v86 = vld [vmem:[%s1 + $0xd0] sm:$0xf]
  %v87 = vld [vmem:[%s1 + $0xd4] sm:$0xf]
  %v88 = vld [vmem:[%s1 + $0xd8] sm:$0xf]
  %v89 = vld [vmem:[%s1 + $0xdc] sm:$0xf]
  %v90 = vld [vmem:[%s1 + $0xe0] sm:$0xf]
  %v91 = vld [vmem:[%s1 + $0xe4] sm:$0xf]
  %v92 = vld [vmem:[%s1 + $0xe8] sm:$0xf]
  %v93 = vld [vmem:[%s1 + $0xec] sm:$0xf]
  %v94 = vld [vmem:[%s1 + $0xf0] sm:$0xf]
  %v95 = vld [vmem:[%s1 + $0xf4] sm:$0xf]
  %v96 = vld [vmem:[%s1 + $0xf8] sm:$0xf]
  %v97 = vld [vmem:[%s1 + $0xfc] sm:$0xf]
  %v98 = vld [vmem:[%s2] sm:$0x1]
  %v100 = vlaneseq
  %v101 = vshrl.u32 %v100, 7
  %v102 = vsub.s32 0, %v101
  %v103 = vrot.slane %v98, %v102
  %v121 = vunpack.c.l.b16 %v18
  %v122 = vunpack.c.h.b16 %v18
  %v123 = vunpack.c.l.b16 %v19
  %v124 = vunpack.c.h.b16 %v19
  %v125 = vunpack.c.l.b16 %v20
  %v126 = vunpack.c.h.b16 %v20
  %v127 = vunpack.c.l.b16 %v21
  %v128 = vunpack.c.h.b16 %v21
  %v129 = vunpack.c.l.b16 %v22
  %v130 = vunpack.c.h.b16 %v22
  %v131 = vunpack.c.l.b16 %v23
  %v132 = vunpack.c.h.b16 %v23
  %v133 = vunpack.c.l.b16 %v24
  %v134 = vunpack.c.h.b16 %v24
  %v135 = vunpack.c.l.b16 %v25
  %v136 = vunpack.c.h.b16 %v25
  %v137 = vunpack.c.l.b16 %v26
  %v138 = vunpack.c.h.b16 %v26
  %v139 = vunpack.c.l.b16 %v27
  %v140 = vunpack.c.h.b16 %v27
  %v141 = vunpack.c.l.b16 %v28
  %v142 = vunpack.c.h.b16 %v28
  %v143 = vunpack.c.l.b16 %v29
  %v144 = vunpack.c.h.b16 %v29
  %v145 = vunpack.c.l.b16 %v30
  %v146 = vunpack.c.h.b16 %v30
  %v147 = vunpack.c.l.b16 %v31
  %v148 = vunpack.c.h.b16 %v31
  %v149 = vunpack.c.l.b16 %v32
  %v150 = vunpack.c.h.b16 %v32
  %v151 = vunpack.c.l.b16 %v33
  %v152 = vunpack.c.h.b16 %v33
  %v153 = vpack.c.b16 %v125, %v121
  %v154 = vpack.c.b16 %v126, %v122
  %v155 = vpack.c.b16 %v127, %v123
  %v156 = vpack.c.b16 %v128, %v124
  %v157 = vpack.c.b16 %v133, %v129
  %v158 = vpack.c.b16 %v134, %v130
  %v159 = vpack.c.b16 %v135, %v131
  %v160 = vpack.c.b16 %v136, %v132
  %v161 = vpack.c.b16 %v141, %v137
  %v162 = vpack.c.b16 %v142, %v138
  %v163 = vpack.c.b16 %v143, %v139
  %v164 = vpack.c.b16 %v144, %v140
  %v165 = vpack.c.b16 %v149, %v145
  %v166 = vpack.c.b16 %v150, %v146
  %v167 = vpack.c.b16 %v151, %v147
  %v168 = vpack.c.b16 %v152, %v148
  %v249 = vunpack.c.l.b16 %v34
  %v250 = vunpack.c.l.b16 %v35
  %v251 = vunpack.c.l.b16 %v36
  %v252 = vunpack.c.l.b16 %v37
  %v253 = vunpack.c.l.b16 %v38
  %v254 = vunpack.c.l.b16 %v39
  %v255 = vunpack.c.l.b16 %v40
  %v256 = vunpack.c.l.b16 %v41
  %v257 = vunpack.c.l.b16 %v42
  %v258 = vunpack.c.l.b16 %v43
  %v259 = vunpack.c.l.b16 %v44
  %v260 = vunpack.c.l.b16 %v45
  %v261 = vunpack.c.l.b16 %v46
  %v262 = vunpack.c.l.b16 %v47
  %v263 = vunpack.c.l.b16 %v48
  %v264 = vunpack.c.l.b16 %v49
  %v265 = vunpack.c.l.b16 %v50
  %v266 = vunpack.c.l.b16 %v51
  %v267 = vunpack.c.l.b16 %v52
  %v268 = vunpack.c.l.b16 %v53
  %v269 = vunpack.c.l.b16 %v54
  %v270 = vunpack.c.l.b16 %v55
  %v271 = vunpack.c.l.b16 %v56
  %v272 = vunpack.c.l.b16 %v57
  %v273 = vunpack.c.l.b16 %v58
  %v274 = vunpack.c.l.b16 %v59
  %v275 = vunpack.c.l.b16 %v60
  %v276 = vunpack.c.l.b16 %v61
  %v277 = vunpack.c.l.b16 %v62
  %v278 = vunpack.c.l.b16 %v63
  %v279 = vunpack.c.l.b16 %v64
  %v280 = vunpack.c.l.b16 %v65
  %v281 = vunpack.c.l.b16 %v66
  %v282 = vunpack.c.l.b16 %v67
  %v283 = vunpack.c.l.b16 %v68
  %v284 = vunpack.c.l.b16 %v69
  %v285 = vunpack.c.l.b16 %v70
  %v286 = vunpack.c.l.b16 %v71
  %v287 = vunpack.c.l.b16 %v72
  %v288 = vunpack.c.l.b16 %v73
  %v289 = vunpack.c.l.b16 %v74
  %v290 = vunpack.c.l.b16 %v75
  %v291 = vunpack.c.l.b16 %v76
  %v292 = vunpack.c.l.b16 %v77
  %v293 = vunpack.c.l.b16 %v78
  %v294 = vunpack.c.l.b16 %v79
  %v295 = vunpack.c.l.b16 %v80
  %v296 = vunpack.c.l.b16 %v81
  %v297 = vunpack.c.l.b16 %v82
  %v298 = vunpack.c.l.b16 %v83
  %v299 = vunpack.c.l.b16 %v84
  %v300 = vunpack.c.l.b16 %v85
  %v301 = vunpack.c.l.b16 %v86
  %v302 = vunpack.c.l.b16 %v87
  %v303 = vunpack.c.l.b16 %v88
  %v304 = vunpack.c.l.b16 %v89
  %v305 = vunpack.c.l.b16 %v90
  %v306 = vunpack.c.l.b16 %v91
  %v307 = vunpack.c.l.b16 %v92
  %v308 = vunpack.c.l.b16 %v93
  %v309 = vunpack.c.l.b16 %v94
  %v310 = vunpack.c.l.b16 %v95
  %v311 = vunpack.c.l.b16 %v96
  %v312 = vunpack.c.l.b16 %v97
  %v313 = vpack.c.b16 %v250, %v249
  %v314 = vpack.c.b16 %v252, %v251
  %v315 = vpack.c.b16 %v254, %v253
  %v316 = vpack.c.b16 %v256, %v255
  %v317 = vpack.c.b16 %v258, %v257
  %v318 = vpack.c.b16 %v260, %v259
  %v319 = vpack.c.b16 %v262, %v261
  %v320 = vpack.c.b16 %v264, %v263
  %v321 = vpack.c.b16 %v266, %v265
  %v322 = vpack.c.b16 %v268, %v267
  %v323 = vpack.c.b16 %v270, %v269
  %v324 = vpack.c.b16 %v272, %v271
  %v325 = vpack.c.b16 %v274, %v273
  %v326 = vpack.c.b16 %v276, %v275
  %v327 = vpack.c.b16 %v278, %v277
  %v328 = vpack.c.b16 %v280, %v279
  %v329 = vpack.c.b16 %v282, %v281
  %v330 = vpack.c.b16 %v284, %v283
  %v331 = vpack.c.b16 %v286, %v285
  %v332 = vpack.c.b16 %v288, %v287
  %v333 = vpack.c.b16 %v290, %v289
  %v334 = vpack.c.b16 %v292, %v291
  %v335 = vpack.c.b16 %v294, %v293
  %v336 = vpack.c.b16 %v296, %v295
  %v337 = vpack.c.b16 %v298, %v297
  %v338 = vpack.c.b16 %v300, %v299
  %v339 = vpack.c.b16 %v302, %v301
  %v340 = vpack.c.b16 %v304, %v303
  %v341 = vpack.c.b16 %v306, %v305
  %v342 = vpack.c.b16 %v308, %v307
  %v343 = vpack.c.b16 %v310, %v309
  %v344 = vpack.c.b16 %v312, %v311
  %377 = vmatprep.subr.bf16.mxu0 0
  %378 = vmatpush1.bf16.msra.mxu0 %v313
  %379 = vmatprep.subr.bf16.mxu0 0
  %380 = vmatpush1.bf16.msra.mxu0 %v314
  %381 = vmatprep.subr.bf16.mxu0 0
  %382 = vmatpush1.bf16.msra.mxu0 %v315
  %383 = vmatprep.subr.bf16.mxu0 0
  %384 = vmatpush1.bf16.msra.mxu0 %v316
  %385 = vmatprep.subr.bf16.mxu0 0
  %386 = vmatpush1.bf16.msra.mxu0 %v317
  %387 = vmatprep.subr.bf16.mxu0 0
  %388 = vmatpush1.bf16.msra.mxu0 %v318
  %389 = vmatprep.subr.bf16.mxu0 0
  %390 = vmatpush1.bf16.msra.mxu0 %v319
  %391 = vmatprep.subr.bf16.mxu0 0
  %392 = vmatpush1.bf16.msra.mxu0 %v320
  %393 = vmatprep.subr.bf16.mxu0 0
  %394 = vmatpush1.bf16.msra.mxu0 %v321
  %395 = vmatprep.subr.bf16.mxu0 0
  %396 = vmatpush1.bf16.msra.mxu0 %v322
  %397 = vmatprep.subr.bf16.mxu0 0
  %398 = vmatpush1.bf16.msra.mxu0 %v323
  %399 = vmatprep.subr.bf16.mxu0 0
  %400 = vmatpush1.bf16.msra.mxu0 %v324
  %401 = vmatprep.subr.bf16.mxu0 0
  %402 = vmatpush1.bf16.msra.mxu0 %v325
  %403 = vmatprep.subr.bf16.mxu0 0
  %404 = vmatpush1.bf16.msra.mxu0 %v326
  %405 = vmatprep.subr.bf16.mxu0 0
  %406 = vmatpush1.bf16.msra.mxu0 %v327
  %407 = vmatprep.subr.bf16.mxu0 0
  %408 = vmatpush1.bf16.msra.mxu0 %v328
  %409 = vmatprep.mubr.bf16.mxu0 %v154
  %410 = vmatmul.mubr.bf16.gmra.mrb[0].mxu0 %v153
  %v411 = vpop.f32.mrb[0].mxu0
  %v412 = vadd.f32 %v103, %v411
  %v413 = vpop.f32.mrb[0].mxu0
  %v414 = vpop.f32.mrb[0].mxu0
  %v415 = vadd.f32 %v103, %v414
  %v416 = vpop.f32.mrb[0].mxu0
  %417 = vmatprep.mubr.bf16.mxu0 %v158
  %418 = vmatmul.mubr.bf16.gmra.mrb[0].mxu0 %v157
  %v419 = vpop.f32.mrb[0].mxu0
  %v420 = vadd.f32 %v103, %v419
  %v421 = vpop.f32.mrb[0].mxu0
  %v422 = vpop.f32.mrb[0].mxu0
  %v423 = vadd.f32 %v103, %v422
  %v424 = vpop.f32.mrb[0].mxu0
  %425 = vmatprep.mubr.bf16.mxu0 %v162
  %426 = vmatmul.mubr.bf16.gmra.mrb[0].mxu0 %v161
  %v427 = vpop.f32.mrb[0].mxu0
  %v428 = vadd.f32 %v103, %v427
  %v429 = vpop.f32.mrb[0].mxu0
  %v430 = vpop.f32.mrb[0].mxu0
  %v431 = vadd.f32 %v103, %v430
  %v432 = vpop.f32.mrb[0].mxu0
  %433 = vmatprep.mubr.bf16.mxu0 %v166
  %434 = vmatmul.mubr.bf16.gmra.mrb[0].mxu0 %v165
  %v435 = vpop.f32.mrb[0].mxu0
  %v436 = vadd.f32 %v103, %v435
  %v437 = vpop.f32.mrb[0].mxu0
  %v438 = vpop.f32.mrb[0].mxu0
  %v439 = vadd.f32 %v103, %v438
  %v440 = vpop.f32.mrb[0].mxu0
  %441 = vdwg.mxu0
  %442 = vmatprep.subr.bf16.mxu0 0
  %443 = vmatpush1.bf16.msra.mxu0 %v329
  %444 = vmatprep.subr.bf16.mxu0 0
  %445 = vmatpush1.bf16.msra.mxu0 %v330
  %446 = vmatprep.subr.bf16.mxu0 0
  %447 = vmatpush1.bf16.msra.mxu0 %v331
  %448 = vmatprep.subr.bf16.mxu0 0
  %449 = vmatpush1.bf16.msra.mxu0 %v332
  %450 = vmatprep.subr.bf16.mxu0 0
  %451 = vmatpush1.bf16.msra.mxu0 %v333
  %452 = vmatprep.subr.bf16.mxu0 0
  %453 = vmatpush1.bf16.msra.mxu0 %v334
  %454 = vmatprep.subr.bf16.mxu0 0
  %455 = vmatpush1.bf16.msra.mxu0 %v335
  %456 = vmatprep.subr.bf16.mxu0 0
  %457 = vmatpush1.bf16.msra.mxu0 %v336
  %458 = vmatprep.subr.bf16.mxu0 0
  %459 = vmatpush1.bf16.msra.mxu0 %v337
  %460 = vmatprep.subr.bf16.mxu0 0
  %461 = vmatpush1.bf16.msra.mxu0 %v338
  %462 = vmatprep.subr.bf16.mxu0 0
  %463 = vmatpush1.bf16.msra.mxu0 %v339
  %464 = vmatprep.subr.bf16.mxu0 0
  %465 = vmatpush1.bf16.msra.mxu0 %v340
  %466 = vmatprep.subr.bf16.mxu0 0
  %467 = vmatpush1.bf16.msra.mxu0 %v341
  %468 = vmatprep.subr.bf16.mxu0 0
  %469 = vmatpush1.bf16.msra.mxu0 %v342
  %470 = vmatprep.subr.bf16.mxu0 0
  %471 = vmatpush1.bf16.msra.mxu0 %v343
  %472 = vmatprep.subr.bf16.mxu0 0
  %473 = vmatpush1.bf16.msra.mxu0 %v344
  %474 = vmatprep.mubr.bf16.mxu0 %v156
  %475 = vmatmul.mubr.bf16.gmra.mrb[0].mxu0 %v155
  %v476 = vpop.f32.mrb[0].mxu0
  %v477 = vadd.f32 %v412, %v476
  %v478 = vpop.f32.mrb[0].mxu0
  %v479 = vpop.f32.mrb[0].mxu0
  %v480 = vadd.f32 %v415, %v479
  %v481 = vpop.f32.mrb[0].mxu0
  %482 = vmatprep.mubr.bf16.mxu0 %v160
  %483 = vmatmul.mubr.bf16.gmra.mrb[0].mxu0 %v159
  %v484 = vpop.f32.mrb[0].mxu0
  %v485 = vadd.f32 %v420, %v484
  %v486 = vpop.f32.mrb[0].mxu0
  %v487 = vpop.f32.mrb[0].mxu0
  %v488 = vadd.f32 %v423, %v487
  %v489 = vpop.f32.mrb[0].mxu0
  %490 = vmatprep.mubr.bf16.mxu0 %v164
  %491 = vmatmul.mubr.bf16.gmra.mrb[0].mxu0 %v163
  %v492 = vpop.f32.mrb[0].mxu0
  %v493 = vadd.f32 %v428, %v492
  %v494 = vpop.f32.mrb[0].mxu0
  %v495 = vpop.f32.mrb[0].mxu0
  %v496 = vadd.f32 %v431, %v495
  %v497 = vpop.f32.mrb[0].mxu0
  %498 = vmatprep.mubr.bf16.mxu0 %v168
  %499 = vmatmul.mubr.bf16.gmra.mrb[0].mxu0 %v167
  %v500 = vpop.f32.mrb[0].mxu0
  %v501 = vadd.f32 %v436, %v500
  %v502 = vpop.f32.mrb[0].mxu0
  %v503 = vpop.f32.mrb[0].mxu0
  %v504 = vadd.f32 %v439, %v503
  %v505 = vpop.f32.mrb[0].mxu0
  %506 = vdwg.mxu0
  %v507 = vld [vmem:[%s3] sm:$0xf]
  %v508 = vld [vmem:[%s3 + $0x4] sm:$0xf]
  %v509 = vld [vmem:[%s3 + $0x8] sm:$0xf]
  %v510 = vld [vmem:[%s3 + $0xc] sm:$0xf]
  %v511 = vld [vmem:[%s3 + $0x10] sm:$0xf]
  %v512 = vld [vmem:[%s3 + $0x14] sm:$0xf]
  %v513 = vld [vmem:[%s3 + $0x18] sm:$0xf]
  %v514 = vld [vmem:[%s3 + $0x1c] sm:$0xf]
  %v515 = vunpack.c.l.bf16 %v507
  %v516 = vunpack.c.l.bf16 %v508
  %v517 = vunpack.c.l.bf16 %v509
  %v518 = vunpack.c.l.bf16 %v510
  %v519 = vunpack.c.l.bf16 %v511
  %v520 = vunpack.c.l.bf16 %v512
  %v521 = vunpack.c.l.bf16 %v513
  %v522 = vunpack.c.l.bf16 %v514
  %v523 = vadd.f32 %v477, %v515
  %v524 = vadd.f32 %v480, %v516
  %v525 = vadd.f32 %v485, %v517
  %v526 = vadd.f32 %v488, %v518
  %v527 = vadd.f32 %v493, %v519
  %v528 = vadd.f32 %v496, %v520
  %v529 = vadd.f32 %v501, %v521
  %v530 = vadd.f32 %v504, %v522
  %v531 = vpack.c.bf16 %v524, %v523
  %v532 = vpack.c.bf16 %v526, %v525
  %v533 = vpack.c.bf16 %v528, %v527
  %v534 = vpack.c.bf16 %v530, %v529
  %v539 = vunpack.c.l.b16 %v531
  %v540 = vunpack.c.h.b16 %v531
  %v541 = vunpack.c.l.b16 %v532
  %v542 = vunpack.c.h.b16 %v532
  %v543 = vunpack.c.l.b16 %v533
  %v544 = vunpack.c.h.b16 %v533
  %v545 = vunpack.c.l.b16 %v534
  %v546 = vunpack.c.h.b16 %v534
  %v547 = vpack.c.b16 %v539, %v539
  %v548 = vpack.c.b16 %v540, %v540
  %v549 = vpack.c.b16 %v541, %v541
  %v550 = vpack.c.b16 %v542, %v542
  %v551 = vpack.c.b16 %v543, %v543
  %v552 = vpack.c.b16 %v544, %v544
  %v553 = vpack.c.b16 %v545, %v545
  %v554 = vpack.c.b16 %v546, %v546
  %563 = vst [vmem:[%s4] sm:$0xf] %v547
  %564 = vst [vmem:[%s4 + $0x4] sm:$0xf] %v548
  %565 = vst [vmem:[%s4 + $0x8] sm:$0xf] %v549
  %566 = vst [vmem:[%s4 + $0xc] sm:$0xf] %v550
  %567 = vst [vmem:[%s4 + $0x10] sm:$0xf] %v551
  %568 = vst [vmem:[%s4 + $0x14] sm:$0xf] %v552
  %569 = vst [vmem:[%s4 + $0x18] sm:$0xf] %v553
  %570 = vst [vmem:[%s4 + $0x1c] sm:$0xf] %v554
  // Predicated region
  $region18: #{vit_forward.13} parent=0 // pred_check
    _
  $region19: #{vit_forward.13} parent=0 // pred_check_branch
    %572 = sbr.rel (0) target = $region21
  $region20: #{vit_forward.13} parent=0 // pred_region
    _
  $region21: #{vit_forward.13} parent=0 // pred_fallthru
    _
  // Predicated region
  $region22: #{vit_forward.13} parent=0 // pred_check
    _
  $region23: #{vit_forward.13} parent=0 // pred_check_branch
    %574 = sbr.rel (0) target = $region25
  $region24: #{vit_forward.13} parent=0 // pred_region
    _
  $region25: #{vit_forward.13} parent=0 // pred_fallthru
    _

</llo_original>
